<compile_context>
chip_gen: v6e
topology: v6e:2x2x1
jax: 0.10.0
libtpu: 0.0.40
codegen_flags: <defaults>
</compile_context>

<pallas_src>
import functools
import math

import jax
import jax.numpy as jnp
from jax.experimental import pallas as pl
from jax.experimental.pallas import tpu as pltpu


# ------------------------------ kernel helpers ------------------------------

def _mm(a, b, dtype):
    """bf16 (or dtype) matmul with f32 accumulation on the MXU."""
    return jnp.dot(a.astype(dtype), b.astype(dtype),
                   preferred_element_type=jnp.float32)


def _mm_t(a, b, dtype):
    """a @ b.T without materializing the transpose separately (contract last
    dims of both operands), f32 accumulation."""
    return jax.lax.dot_general(
        a.astype(dtype), b.astype(dtype),
        dimension_numbers=(((1,), (1,)), ((), ())),
        preferred_element_type=jnp.float32)


def _layernorm(z, g, b, eps):
    mu = jnp.mean(z, axis=-1, keepdims=True)
    var = jnp.mean((z - mu) ** 2, axis=-1, keepdims=True)
    return (z - mu) * jax.lax.rsqrt(var + eps) * g + b


# ------------------------------- fused kernel -------------------------------

def _gc_transformer_kernel(
    x_ref,          # (R, 1+2*F)   rows = (batch, city, time); [pm25|feat_hist|feat_future]
    s_ref,          # (R, R)       I_B (x) S_hat (x) I_T
    bias_ref,       # (R, R)       attention mask bias: 0 intra-sequence, -1e30 otherwise
    cheb_w_ref,     # (2*in_dim, gcn_out)  [W0; W1]
    cheb_b_ref,     # (1, gcn_out)
    proj_w_ref,     # (in_dim + gcn_out, D)
    proj_b_ref,     # (1, D)
    pe_ref,         # (R, D)       sinusoidal PE pre-tiled over sequences
    wqkv_ref,       # (L, D, 3D)
    bqkv_ref,       # (L, 1, 3D)
    wo_ref,         # (L, D, D)
    bo_ref,         # (L, 1, D)
    ln1_g_ref,      # (L, 1, D)
    ln1_b_ref,      # (L, 1, D)
    ff_w1_ref,      # (L, D, Fff)
    ff_b1_ref,      # (L, 1, Fff)
    ff_w2_ref,      # (L, Fff, D)
    ff_b2_ref,      # (L, 1, D)
    ln2_g_ref,      # (L, 1, D)
    ln2_b_ref,      # (L, 1, D)
    fc_w_ref,       # (D, 1)
    fc_b_ref,       # (1, 1)
    o_ref,          # (R, 1)
    *, in_dim, num_heads, eps, mm_dtype):
    x = x_ref[...]                                   # (R, C) float32
    feat = in_dim - 1
    D = proj_w_ref.shape[1]
    L = wqkv_ref.shape[0]
    H = num_heads
    dh = D // H
    scale = 1.0 / math.sqrt(dh)

    # ---- ChebConv(K=2, sym, lambda_max=2) + sigmoid: one block-diag GEMM ---
    x_cheb = x[:, :in_dim]                                     # [pm25 | feat_hist]
    sx = _mm(s_ref[...], x_cheb, mm_dtype)                     # (R, in_dim)
    gcn = jax.nn.sigmoid(
        _mm(jnp.concatenate([x_cheb, sx], axis=-1), cheb_w_ref[...], mm_dtype)
        + cheb_b_ref[...])                                     # (R, gcn_out)

    # ---- Transformer input: [pm25 | feat_future | gcn] ---------------------
    trans_in = jnp.concatenate(
        [x[:, 0:1], x[:, in_dim:in_dim + feat], gcn], axis=-1)  # (R, in_dim+gcn_out)

    # ---- input projection + sinusoidal positional encoding -----------------
    h = _mm(trans_in, proj_w_ref[...], mm_dtype) + proj_b_ref[...] + pe_ref[...]

    bias = bias_ref[...]                                       # (R, R) f32, hoisted

    # ---- post-norm encoder layers (all sequences at once, fully 2-D) -------
    for l in range(L):
        qkv = _mm(h, wqkv_ref[l], mm_dtype) + bqkv_ref[l]      # fused QKV (R, 3D)
        ctx = []
        for hh in range(H):                                    # static, tiny H
            lo, hi = hh * dh, (hh + 1) * dh
            q_h = qkv[:, lo:hi]
            k_h = qkv[:, D + lo:D + hi]
            v_h = qkv[:, 2 * D + lo:2 * D + hi]
            sc = _mm_t(q_h, k_h, mm_dtype) * scale + bias      # (R, R), block-diag valid
            sc = sc - jnp.max(sc, axis=-1, keepdims=True)
            e = jnp.exp(sc)
            p = e * pl.reciprocal(jnp.sum(e, axis=-1, keepdims=True), approx=True)
            ctx.append(_mm(p, v_h, mm_dtype))                  # (R, dh)
        attn = jnp.concatenate(ctx, axis=-1)                   # (R, D)
        attn = _mm(attn, wo_ref[l], mm_dtype) + bo_ref[l]

        h = _layernorm(h + attn, ln1_g_ref[l], ln1_b_ref[l], eps)
        ff = jnp.maximum(_mm(h, ff_w1_ref[l], mm_dtype) + ff_b1_ref[l], 0.0)
        ff = _mm(ff, ff_w2_ref[l], mm_dtype) + ff_b2_ref[l]
        h = _layernorm(h + ff, ln2_g_ref[l], ln2_b_ref[l], eps)

    # ---- fc_out -------------------------------------------------------------
    o_ref[...] = _mm(h, fc_w_ref[...], mm_dtype) + fc_b_ref[...]


# ------------------------------- parameters ---------------------------------

def build_cheb_s_hat(edge_index, n):
    """S_hat = -D^{-1/2} A D^{-1/2} (PyG ChebConv K=2 second-order term,
    sym normalization, lambda_max = 2)."""
    src, dst = edge_index
    a = jnp.zeros((n, n), jnp.float32).at[dst, src].add(1.0)
    deg = a.sum(axis=1)
    dinv = jnp.where(deg > 0, 1.0 / jnp.sqrt(deg), 0.0)
    return -(dinv[:, None] * a * dinv[None, :])


def sinusoidal_pe(T, D):
    pos = jnp.arange(T, dtype=jnp.float32)[:, None]
    i = jnp.arange(0, D, 2, dtype=jnp.float32)
    div = jnp.exp(-math.log(10000.0) * i / D)
    pe = jnp.zeros((T, D), jnp.float32)
    pe = pe.at[:, 0::2].set(jnp.sin(pos * div))
    pe = pe.at[:, 1::2].set(jnp.cos(pos * div))
    return pe


def init_params(key, *, in_dim, gcn_out, hid_dim, ff_dim, num_layers, hist_len,
                edge_index, city_num, batch_size):
    ks = iter(jax.random.split(key, 64))
    w = lambda shape: 0.1 * jax.random.normal(next(ks), shape, jnp.float32)

    s_hat = build_cheb_s_hat(edge_index, city_num)
    # Per-(batch, time-step) graph propagation on (batch*city*time, feat) rows.
    # Matches the torch module, which bakes batch_size into edge_index.
    s_full = jnp.kron(jnp.eye(batch_size, dtype=jnp.float32),
                      jnp.kron(s_hat, jnp.eye(hist_len, dtype=jnp.float32)))
    params = {
        "s_hat": s_hat,
        "s_full": s_full,
        "cheb_w": jnp.concatenate([w((in_dim, gcn_out)), w((in_dim, gcn_out))],
                                  axis=0),                       # [W0; W1]
        "cheb_b": jnp.zeros((1, gcn_out), jnp.float32),
        "in_proj_w": w((in_dim + gcn_out, hid_dim)),
        "in_proj_b": jnp.zeros((1, hid_dim), jnp.float32),
        "pe": sinusoidal_pe(hist_len, hid_dim),
        "fc_w": w((hid_dim, 1)),
        "fc_b": jnp.zeros((1, 1), jnp.float32),
        # stacked per-layer weights (leading axis = layer)
        "wqkv": jnp.stack([jnp.concatenate([w((hid_dim, hid_dim))
                                            for _ in range(3)], axis=-1)
                           for _ in range(num_layers)], axis=0),
        "bqkv": jnp.zeros((num_layers, 1, 3 * hid_dim), jnp.float32),
        "wo": jnp.stack([w((hid_dim, hid_dim)) for _ in range(num_layers)], 0),
        "bo": jnp.zeros((num_layers, 1, hid_dim), jnp.float32),
        "ln1_g": jnp.ones((num_layers, 1, hid_dim), jnp.float32),
        "ln1_b": jnp.zeros((num_layers, 1, hid_dim), jnp.float32),
        "ff_w1": jnp.stack([w((hid_dim, ff_dim)) for _ in range(num_layers)], 0),
        "ff_b1": jnp.zeros((num_layers, 1, ff_dim), jnp.float32),
        "ff_w2": jnp.stack([w((ff_dim, hid_dim)) for _ in range(num_layers)], 0),
        "ff_b2": jnp.zeros((num_layers, 1, hid_dim), jnp.float32),
        "ln2_g": jnp.ones((num_layers, 1, hid_dim), jnp.float32),
        "ln2_b": jnp.zeros((num_layers, 1, hid_dim), jnp.float32),
    }
    return params


# ------------------------------- forward pass -------------------------------

def _whole_spec(a):
    """Whole-array block, constant index map (single grid step)."""
    nd = a.ndim
    return pl.BlockSpec(a.shape, lambda i, _nd=nd: (0,) * _nd)


def gc_transformer_forward(params, pm25_hist, feature, *, hist_len, pred_len,
                           num_heads=2, mm_dtype=jnp.bfloat16):
    B, T, N, _ = pm25_hist.shape                # T == hist_len == pred_len
    feat = feature.shape[-1]
    in_dim = 1 + feat
    C = 1 + 2 * feat
    R = B * N * T

    # channels = [pm25 | feat_hist | feat_future]; rows ordered (batch, city, time)
    # so the attention sequence axis (time) is contiguous per (batch, city).
    x = jnp.concatenate(
        [pm25_hist,
         feature[:, :hist_len],
         feature[:, hist_len:hist_len + pred_len]], axis=-1)     # (B, T, N, C)
    x = x.transpose(0, 2, 1, 3).reshape(R, C)                    # (R, C)

    pe_flat = jnp.tile(params["pe"], (B * N, 1))                 # (R, D)

    # block-diagonal attention mask: row i may attend to row j iff they belong
    # to the same (batch, city) sequence.
    seq_id = jnp.arange(R, dtype=jnp.int32) // T
    attn_bias = jnp.where(seq_id[:, None] == seq_id[None, :],
                          0.0, -1e30).astype(jnp.float32)        # (R, R)

    kernel = functools.partial(_gc_transformer_kernel, in_dim=in_dim,
                               num_heads=num_heads, eps=1e-5, mm_dtype=mm_dtype)

    operands = (x, params["s_full"], attn_bias,
                params["cheb_w"], params["cheb_b"],
                params["in_proj_w"], params["in_proj_b"], pe_flat,
                params["wqkv"], params["bqkv"], params["wo"], params["bo"],
                params["ln1_g"], params["ln1_b"],
                params["ff_w1"], params["ff_b1"],
                params["ff_w2"], params["ff_b2"],
                params["ln2_g"], params["ln2_b"],
                params["fc_w"], params["fc_b"])

    out = pl.pallas_call(
        kernel,
        out_shape=jax.ShapeDtypeStruct((R, 1), jnp.float32),
        grid=(1,),                                   # whole batch in one step
        in_specs=[_whole_spec(a) for a in operands],
        out_specs=pl.BlockSpec((R, 1), lambda i: (0, 0)),
        compiler_params=pltpu.CompilerParams(
            dimension_semantics=("arbitrary",)),
    )(*operands)

    # (R, 1) -> (B, N, T) -> (B, T, N, 1)
    return out.reshape(B, N, T).transpose(0, 2, 1)[..., None]


# ----------------------------------- main -----------------------------------

if __name__ == "__main__":
    # small shapes consistent with the module
    batch_size, city_num = 2, 8
    hist_len = pred_len = 6
    in_dim = 4                   # pm25 (1) + features (3)
    gcn_out, hid_dim, ff_dim = 14, 36, 64
    num_heads, num_layers = 2, 2

    # ring graph over the cities (bidirectional)
    src = list(range(city_num)) + [(i + 1) % city_num for i in range(city_num)]
    dst = [(i + 1) % city_num for i in range(city_num)] + list(range(city_num))
    edge_index = jnp.array([src, dst], dtype=jnp.int32)

    key = jax.random.PRNGKey(0)
    k_p, k_x, k_f = jax.random.split(key, 3)
    params = init_params(k_p, in_dim=in_dim, gcn_out=gcn_out, hid_dim=hid_dim,
                         ff_dim=ff_dim, num_layers=num_layers, hist_len=hist_len,
                         edge_index=edge_index, city_num=city_num,
                         batch_size=batch_size)

    pm25_hist = jax.random.normal(k_x, (batch_size, hist_len, city_num, 1),
                                  jnp.float32)
    feature = jax.random.normal(k_f, (batch_size, hist_len + pred_len, city_num,
                                      in_dim - 1), jnp.float32)

    fwd = jax.jit(functools.partial(gc_transformer_forward,
                                    hist_len=hist_len, pred_len=pred_len,
                                    num_heads=num_heads))
    pm25_pred = fwd(params, pm25_hist, feature)
    jax.block_until_ready(pm25_pred)
    assert pm25_pred.shape == (batch_size, pred_len, city_num, 1)
    print("KERNEL_OK")
</pallas_src>

<mosaic_0001>
module attributes {stable_mosaic.version = 11 : i64} {
  func.func @_gc_transformer_kernel(%arg0: i32, %arg1: memref<96x7xf32, #tpu.memory_space<vmem>>, %arg2: memref<96x96xf32, #tpu.memory_space<vmem>>, %arg3: memref<96x96xf32, #tpu.memory_space<vmem>>, %arg4: memref<8x14xf32, #tpu.memory_space<vmem>>, %arg5: memref<1x14xf32, #tpu.memory_space<vmem>>, %arg6: memref<18x36xf32, #tpu.memory_space<vmem>>, %arg7: memref<1x36xf32, #tpu.memory_space<vmem>>, %arg8: memref<96x36xf32, #tpu.memory_space<vmem>>, %arg9: memref<2x36x108xf32, #tpu.memory_space<vmem>>, %arg10: memref<2x1x108xf32, #tpu.memory_space<vmem>>, %arg11: memref<2x36x36xf32, #tpu.memory_space<vmem>>, %arg12: memref<2x1x36xf32, #tpu.memory_space<vmem>>, %arg13: memref<2x1x36xf32, #tpu.memory_space<vmem>>, %arg14: memref<2x1x36xf32, #tpu.memory_space<vmem>>, %arg15: memref<2x36x64xf32, #tpu.memory_space<vmem>>, %arg16: memref<2x1x64xf32, #tpu.memory_space<vmem>>, %arg17: memref<2x64x36xf32, #tpu.memory_space<vmem>>, %arg18: memref<2x1x36xf32, #tpu.memory_space<vmem>>, %arg19: memref<2x1x36xf32, #tpu.memory_space<vmem>>, %arg20: memref<2x1x36xf32, #tpu.memory_space<vmem>>, %arg21: memref<36x1xf32, #tpu.memory_space<vmem>>, %arg22: memref<1x1xf32, #tpu.memory_space<vmem>>, %arg23: memref<96x1xf32, #tpu.memory_space<vmem>>) attributes {dimension_semantics = [#tpu.dimension_semantics<arbitrary>], iteration_bounds = array<i64: 1>, scalar_prefetch = 0 : i64, scratch_operands = 0 : i64, tpu.core_type = #tpu.core_type<tc>, window_params = [{pipeline_mode = #tpu.pipeline_mode<synchronous>, transform_indices = @transform_0, window_bounds = array<i64: 96, 7>}, {pipeline_mode = #tpu.pipeline_mode<synchronous>, transform_indices = @transform_1, window_bounds = array<i64: 96, 96>}, {pipeline_mode = #tpu.pipeline_mode<synchronous>, transform_indices = @transform_2, window_bounds = array<i64: 96, 96>}, {pipeline_mode = #tpu.pipeline_mode<synchronous>, transform_indices = @transform_3, window_bounds = array<i64: 8, 14>}, {pipeline_mode = #tpu.pipeline_mode<synchronous>, transform_indices = @transform_4, window_bounds = array<i64: 1, 14>}, {pipeline_mode = #tpu.pipeline_mode<synchronous>, transform_indices = @transform_5, window_bounds = array<i64: 18, 36>}, {pipeline_mode = #tpu.pipeline_mode<synchronous>, transform_indices = @transform_6, window_bounds = array<i64: 1, 36>}, {pipeline_mode = #tpu.pipeline_mode<synchronous>, transform_indices = @transform_7, window_bounds = array<i64: 96, 36>}, {pipeline_mode = #tpu.pipeline_mode<synchronous>, transform_indices = @transform_8, window_bounds = array<i64: 2, 36, 108>}, {pipeline_mode = #tpu.pipeline_mode<synchronous>, transform_indices = @transform_9, window_bounds = array<i64: 2, 1, 108>}, {pipeline_mode = #tpu.pipeline_mode<synchronous>, transform_indices = @transform_10, window_bounds = array<i64: 2, 36, 36>}, {pipeline_mode = #tpu.pipeline_mode<synchronous>, transform_indices = @transform_11, window_bounds = array<i64: 2, 1, 36>}, {pipeline_mode = #tpu.pipeline_mode<synchronous>, transform_indices = @transform_12, window_bounds = array<i64: 2, 1, 36>}, {pipeline_mode = #tpu.pipeline_mode<synchronous>, transform_indices = @transform_13, window_bounds = array<i64: 2, 1, 36>}, {pipeline_mode = #tpu.pipeline_mode<synchronous>, transform_indices = @transform_14, window_bounds = array<i64: 2, 36, 64>}, {pipeline_mode = #tpu.pipeline_mode<synchronous>, transform_indices = @transform_15, window_bounds = array<i64: 2, 1, 64>}, {pipeline_mode = #tpu.pipeline_mode<synchronous>, transform_indices = @transform_16, window_bounds = array<i64: 2, 64, 36>}, {pipeline_mode = #tpu.pipeline_mode<synchronous>, transform_indices = @transform_17, window_bounds = array<i64: 2, 1, 36>}, {pipeline_mode = #tpu.pipeline_mode<synchronous>, transform_indices = @transform_18, window_bounds = array<i64: 2, 1, 36>}, {pipeline_mode = #tpu.pipeline_mode<synchronous>, transform_indices = @transform_19, window_bounds = array<i64: 2, 1, 36>}, {pipeline_mode = #tpu.pipeline_mode<synchronous>, transform_indices = @transform_20, window_bounds = array<i64: 36, 1>}, {pipeline_mode = #tpu.pipeline_mode<synchronous>, transform_indices = @transform_21, window_bounds = array<i64: 1, 1>}, {pipeline_mode = #tpu.pipeline_mode<synchronous>, transform_indices = @transform_22, window_bounds = array<i64: 96, 1>}]} {
    %c0 = arith.constant 0 : index
    %c0_0 = arith.constant 0 : index
    %0 = vector.load %arg1[%c0, %c0_0] : memref<96x7xf32, #tpu.memory_space<vmem>>, vector<96x7xf32>
    %1 = vector.extract_strided_slice %0 {offsets = [0, 0], sizes = [96, 4], strides = [1, 1]} : vector<96x7xf32> to vector<96x4xf32>
    %c0_1 = arith.constant 0 : index
    %c0_2 = arith.constant 0 : index
    %2 = vector.load %arg2[%c0_1, %c0_2] : memref<96x96xf32, #tpu.memory_space<vmem>>, vector<96x96xf32>
    %3 = arith.truncf %2 : vector<96x96xf32> to vector<96x96xbf16>
    %4 = arith.truncf %1 : vector<96x4xf32> to vector<96x4xbf16>
    %cst = arith.constant dense<0.000000e+00> : vector<96x4xf32>
    %5 = tpu.matmul %3, %4, %cst {dimension_numbers = #tpu.dot_dimension_numbers<[1], [0], [0], [1], [0, 0, 1, 1], [], []>} : vector<96x96xbf16>, vector<96x4xbf16>, vector<96x4xf32> -> vector<96x4xf32>
    %6 = tpu.concatenate %1, %5 in 1 : vector<96x4xf32>, vector<96x4xf32> -> vector<96x8xf32>
    %c0_3 = arith.constant 0 : index
    %c0_4 = arith.constant 0 : index
    %7 = vector.load %arg4[%c0_3, %c0_4] : memref<8x14xf32, #tpu.memory_space<vmem>>, vector<8x14xf32>
    %8 = arith.truncf %6 : vector<96x8xf32> to vector<96x8xbf16>
    %9 = arith.truncf %7 : vector<8x14xf32> to vector<8x14xbf16>
    %cst_5 = arith.constant dense<0.000000e+00> : vector<96x14xf32>
    %10 = tpu.matmul %8, %9, %cst_5 {dimension_numbers = #tpu.dot_dimension_numbers<[1], [0], [0], [1], [0, 0, 1, 1], [], []>} : vector<96x8xbf16>, vector<8x14xbf16>, vector<96x14xf32> -> vector<96x14xf32>
    %c0_6 = arith.constant 0 : index
    %c0_7 = arith.constant 0 : index
    %11 = vector.load %arg5[%c0_6, %c0_7] : memref<1x14xf32, #tpu.memory_space<vmem>>, vector<1x14xf32>
    %12 = vector.broadcast %11 : vector<1x14xf32> to vector<96x14xf32>
    %13 = arith.addf %10, %12 : vector<96x14xf32>
    %14 = arith.negf %13 : vector<96x14xf32>
    %15 = math.exp %14 : vector<96x14xf32>
    %cst_8 = arith.constant 1.000000e+00 : f32
    %16 = vector.broadcast %cst_8 : f32 to vector<96x14xf32>
    %17 = arith.addf %16, %15 : vector<96x14xf32>
    %18 = arith.divf %16, %17 : vector<96x14xf32>
    %19 = vector.extract_strided_slice %0 {offsets = [0, 0], sizes = [96, 1], strides = [1, 1]} : vector<96x7xf32> to vector<96x1xf32>
    %20 = vector.extract_strided_slice %0 {offsets = [0, 4], sizes = [96, 3], strides = [1, 1]} : vector<96x7xf32> to vector<96x3xf32>
    %21 = tpu.concatenate %19, %20, %18 in 1 : vector<96x1xf32>, vector<96x3xf32>, vector<96x14xf32> -> vector<96x18xf32>
    %c0_9 = arith.constant 0 : index
    %c0_10 = arith.constant 0 : index
    %22 = vector.load %arg6[%c0_9, %c0_10] : memref<18x36xf32, #tpu.memory_space<vmem>>, vector<18x36xf32>
    %23 = arith.truncf %21 : vector<96x18xf32> to vector<96x18xbf16>
    %24 = arith.truncf %22 : vector<18x36xf32> to vector<18x36xbf16>
    %cst_11 = arith.constant dense<0.000000e+00> : vector<96x36xf32>
    %25 = tpu.matmul %23, %24, %cst_11 {dimension_numbers = #tpu.dot_dimension_numbers<[1], [0], [0], [1], [0, 0, 1, 1], [], []>} : vector<96x18xbf16>, vector<18x36xbf16>, vector<96x36xf32> -> vector<96x36xf32>
    %c0_12 = arith.constant 0 : index
    %c0_13 = arith.constant 0 : index
    %26 = vector.load %arg7[%c0_12, %c0_13] : memref<1x36xf32, #tpu.memory_space<vmem>>, vector<1x36xf32>
    %27 = vector.broadcast %26 : vector<1x36xf32> to vector<96x36xf32>
    %28 = arith.addf %25, %27 : vector<96x36xf32>
    %c0_14 = arith.constant 0 : index
    %c0_15 = arith.constant 0 : index
    %29 = vector.load %arg8[%c0_14, %c0_15] : memref<96x36xf32, #tpu.memory_space<vmem>>, vector<96x36xf32>
    %30 = arith.addf %28, %29 : vector<96x36xf32>
    %c0_16 = arith.constant 0 : index
    %c0_17 = arith.constant 0 : index
    %31 = vector.load %arg3[%c0_16, %c0_17] : memref<96x96xf32, #tpu.memory_space<vmem>>, vector<96x96xf32>
    %c0_18 = arith.constant 0 : index
    %c0_19 = arith.constant 0 : index
    %c0_20 = arith.constant 0 : index
    %32 = vector.load %arg9[%c0_18, %c0_19, %c0_20] : memref<2x36x108xf32, #tpu.memory_space<vmem>>, vector<1x36x108xf32>
    %33 = vector.shape_cast %32 : vector<1x36x108xf32> to vector<36x108xf32>
    %34 = arith.truncf %30 : vector<96x36xf32> to vector<96x36xbf16>
    %35 = arith.truncf %33 : vector<36x108xf32> to vector<36x108xbf16>
    %cst_21 = arith.constant dense<0.000000e+00> : vector<96x108xf32>
    %36 = tpu.matmul %34, %35, %cst_21 {dimension_numbers = #tpu.dot_dimension_numbers<[1], [0], [0], [1], [0, 0, 1, 1], [], []>} : vector<96x36xbf16>, vector<36x108xbf16>, vector<96x108xf32> -> vector<96x108xf32>
    %c0_22 = arith.constant 0 : index
    %c0_23 = arith.constant 0 : index
    %c0_24 = arith.constant 0 : index
    %37 = vector.load %arg10[%c0_22, %c0_23, %c0_24] : memref<2x1x108xf32, #tpu.memory_space<vmem>>, vector<1x1x108xf32>
    %38 = vector.shape_cast %37 : vector<1x1x108xf32> to vector<1x108xf32>
    %39 = vector.broadcast %38 : vector<1x108xf32> to vector<96x108xf32>
    %40 = arith.addf %36, %39 : vector<96x108xf32>
    %41 = vector.extract_strided_slice %40 {offsets = [0, 0], sizes = [96, 18], strides = [1, 1]} : vector<96x108xf32> to vector<96x18xf32>
    %42 = vector.extract_strided_slice %40 {offsets = [0, 36], sizes = [96, 18], strides = [1, 1]} : vector<96x108xf32> to vector<96x18xf32>
    %43 = vector.extract_strided_slice %40 {offsets = [0, 72], sizes = [96, 18], strides = [1, 1]} : vector<96x108xf32> to vector<96x18xf32>
    %44 = arith.truncf %41 : vector<96x18xf32> to vector<96x18xbf16>
    %45 = arith.truncf %42 : vector<96x18xf32> to vector<96x18xbf16>
    %cst_25 = arith.constant dense<0.000000e+00> : vector<96x96xf32>
    %46 = tpu.matmul %44, %45, %cst_25 {dimension_numbers = #tpu.dot_dimension_numbers<[1], [1], [0], [0], [0, 0, 1, 0], [], []>} : vector<96x18xbf16>, vector<96x18xbf16>, vector<96x96xf32> -> vector<96x96xf32>
    %cst_26 = arith.constant 0.235702261 : f32
    %47 = vector.broadcast %cst_26 : f32 to vector<96x96xf32>
    %48 = arith.mulf %46, %47 : vector<96x96xf32>
    %49 = arith.addf %48, %31 : vector<96x96xf32>
    %cst_27 = arith.constant dense<0xFF800000> : vector<96xf32>
    %50 = vector.multi_reduction <maximumf>, %49, %cst_27 [1] : vector<96x96xf32> to vector<96xf32>
    %51 = vector.shape_cast %50 : vector<96xf32> to vector<96x1xf32>
    %52 = vector.broadcast %51 : vector<96x1xf32> to vector<96x96xf32>
    %53 = arith.subf %49, %52 : vector<96x96xf32>
    %54 = math.exp %53 : vector<96x96xf32>
    %cst_28 = arith.constant dense<0.000000e+00> : vector<96xf32>
    %55 = vector.multi_reduction <add>, %54, %cst_28 [1] : vector<96x96xf32> to vector<96xf32>
    %56 = vector.shape_cast %55 : vector<96xf32> to vector<96x1xf32>
    %57 = tpu.reciprocal %56 {approx = true} : vector<96x1xf32> -> vector<96x1xf32>
    %58 = vector.broadcast %57 : vector<96x1xf32> to vector<96x96xf32>
    %59 = arith.mulf %54, %58 : vector<96x96xf32>
    %60 = arith.truncf %59 : vector<96x96xf32> to vector<96x96xbf16>
    %61 = arith.truncf %43 : vector<96x18xf32> to vector<96x18xbf16>
    %cst_29 = arith.constant dense<0.000000e+00> : vector<96x18xf32>
    %62 = tpu.matmul %60, %61, %cst_29 {dimension_numbers = #tpu.dot_dimension_numbers<[1], [0], [0], [1], [0, 0, 1, 1], [], []>} : vector<96x96xbf16>, vector<96x18xbf16>, vector<96x18xf32> -> vector<96x18xf32>
    %63 = vector.extract_strided_slice %40 {offsets = [0, 18], sizes = [96, 18], strides = [1, 1]} : vector<96x108xf32> to vector<96x18xf32>
    %64 = vector.extract_strided_slice %40 {offsets = [0, 54], sizes = [96, 18], strides = [1, 1]} : vector<96x108xf32> to vector<96x18xf32>
    %65 = vector.extract_strided_slice %40 {offsets = [0, 90], sizes = [96, 18], strides = [1, 1]} : vector<96x108xf32> to vector<96x18xf32>
    %66 = arith.truncf %63 : vector<96x18xf32> to vector<96x18xbf16>
    %67 = arith.truncf %64 : vector<96x18xf32> to vector<96x18xbf16>
    %cst_30 = arith.constant dense<0.000000e+00> : vector<96x96xf32>
    %68 = tpu.matmul %66, %67, %cst_30 {dimension_numbers = #tpu.dot_dimension_numbers<[1], [1], [0], [0], [0, 0, 1, 0], [], []>} : vector<96x18xbf16>, vector<96x18xbf16>, vector<96x96xf32> -> vector<96x96xf32>
    %cst_31 = arith.constant 0.235702261 : f32
    %69 = vector.broadcast %cst_31 : f32 to vector<96x96xf32>
    %70 = arith.mulf %68, %69 : vector<96x96xf32>
    %71 = arith.addf %70, %31 : vector<96x96xf32>
    %cst_32 = arith.constant dense<0xFF800000> : vector<96xf32>
    %72 = vector.multi_reduction <maximumf>, %71, %cst_32 [1] : vector<96x96xf32> to vector<96xf32>
    %73 = vector.shape_cast %72 : vector<96xf32> to vector<96x1xf32>
    %74 = vector.broadcast %73 : vector<96x1xf32> to vector<96x96xf32>
    %75 = arith.subf %71, %74 : vector<96x96xf32>
    %76 = math.exp %75 : vector<96x96xf32>
    %cst_33 = arith.constant dense<0.000000e+00> : vector<96xf32>
    %77 = vector.multi_reduction <add>, %76, %cst_33 [1] : vector<96x96xf32> to vector<96xf32>
    %78 = vector.shape_cast %77 : vector<96xf32> to vector<96x1xf32>
    %79 = tpu.reciprocal %78 {approx = true} : vector<96x1xf32> -> vector<96x1xf32>
    %80 = vector.broadcast %79 : vector<96x1xf32> to vector<96x96xf32>
    %81 = arith.mulf %76, %80 : vector<96x96xf32>
    %82 = arith.truncf %81 : vector<96x96xf32> to vector<96x96xbf16>
    %83 = arith.truncf %65 : vector<96x18xf32> to vector<96x18xbf16>
    %cst_34 = arith.constant dense<0.000000e+00> : vector<96x18xf32>
    %84 = tpu.matmul %82, %83, %cst_34 {dimension_numbers = #tpu.dot_dimension_numbers<[1], [0], [0], [1], [0, 0, 1, 1], [], []>} : vector<96x96xbf16>, vector<96x18xbf16>, vector<96x18xf32> -> vector<96x18xf32>
    %85 = tpu.concatenate %62, %84 in 1 : vector<96x18xf32>, vector<96x18xf32> -> vector<96x36xf32>
    %c0_35 = arith.constant 0 : index
    %c0_36 = arith.constant 0 : index
    %c0_37 = arith.constant 0 : index
    %86 = vector.load %arg11[%c0_35, %c0_36, %c0_37] : memref<2x36x36xf32, #tpu.memory_space<vmem>>, vector<1x36x36xf32>
    %87 = vector.shape_cast %86 : vector<1x36x36xf32> to vector<36x36xf32>
    %88 = arith.truncf %85 : vector<96x36xf32> to vector<96x36xbf16>
    %89 = arith.truncf %87 : vector<36x36xf32> to vector<36x36xbf16>
    %cst_38 = arith.constant dense<0.000000e+00> : vector<96x36xf32>
    %90 = tpu.matmul %88, %89, %cst_38 {dimension_numbers = #tpu.dot_dimension_numbers<[1], [0], [0], [1], [0, 0, 1, 1], [], []>} : vector<96x36xbf16>, vector<36x36xbf16>, vector<96x36xf32> -> vector<96x36xf32>
    %c0_39 = arith.constant 0 : index
    %c0_40 = arith.constant 0 : index
    %c0_41 = arith.constant 0 : index
    %91 = vector.load %arg12[%c0_39, %c0_40, %c0_41] : memref<2x1x36xf32, #tpu.memory_space<vmem>>, vector<1x1x36xf32>
    %92 = vector.shape_cast %91 : vector<1x1x36xf32> to vector<1x36xf32>
    %93 = vector.broadcast %92 : vector<1x36xf32> to vector<96x36xf32>
    %94 = arith.addf %90, %93 : vector<96x36xf32>
    %95 = arith.addf %30, %94 : vector<96x36xf32>
    %c0_42 = arith.constant 0 : index
    %c0_43 = arith.constant 0 : index
    %c0_44 = arith.constant 0 : index
    %96 = vector.load %arg13[%c0_42, %c0_43, %c0_44] : memref<2x1x36xf32, #tpu.memory_space<vmem>>, vector<1x1x36xf32>
    %97 = vector.shape_cast %96 : vector<1x1x36xf32> to vector<1x36xf32>
    %c0_45 = arith.constant 0 : index
    %c0_46 = arith.constant 0 : index
    %c0_47 = arith.constant 0 : index
    %98 = vector.load %arg14[%c0_45, %c0_46, %c0_47] : memref<2x1x36xf32, #tpu.memory_space<vmem>>, vector<1x1x36xf32>
    %99 = vector.shape_cast %98 : vector<1x1x36xf32> to vector<1x36xf32>
    %cst_48 = arith.constant dense<0.000000e+00> : vector<96xf32>
    %100 = vector.multi_reduction <add>, %95, %cst_48 [1] : vector<96x36xf32> to vector<96xf32>
    %101 = vector.shape_cast %100 : vector<96xf32> to vector<96x1xf32>
    %cst_49 = arith.constant 3.600000e+01 : f32
    %102 = vector.broadcast %cst_49 : f32 to vector<96x1xf32>
    %103 = arith.divf %101, %102 : vector<96x1xf32>
    %104 = vector.broadcast %103 : vector<96x1xf32> to vector<96x36xf32>
    %105 = arith.subf %95, %104 : vector<96x36xf32>
    %106 = arith.mulf %105, %105 : vector<96x36xf32>
    %cst_50 = arith.constant dense<0.000000e+00> : vector<96xf32>
    %107 = vector.multi_reduction <add>, %106, %cst_50 [1] : vector<96x36xf32> to vector<96xf32>
    %108 = vector.shape_cast %107 : vector<96xf32> to vector<96x1xf32>
    %cst_51 = arith.constant 3.600000e+01 : f32
    %109 = vector.broadcast %cst_51 : f32 to vector<96x1xf32>
    %110 = arith.divf %108, %109 : vector<96x1xf32>
    %111 = vector.broadcast %103 : vector<96x1xf32> to vector<96x36xf32>
    %112 = arith.subf %95, %111 : vector<96x36xf32>
    %cst_52 = arith.constant 9.99999974E-6 : f32
    %113 = vector.broadcast %cst_52 : f32 to vector<96x1xf32>
    %114 = arith.addf %110, %113 : vector<96x1xf32>
    %115 = math.rsqrt %114 : vector<96x1xf32>
    %116 = vector.broadcast %115 : vector<96x1xf32> to vector<96x36xf32>
    %117 = arith.mulf %112, %116 : vector<96x36xf32>
    %118 = vector.broadcast %97 : vector<1x36xf32> to vector<96x36xf32>
    %119 = arith.mulf %117, %118 : vector<96x36xf32>
    %120 = vector.broadcast %99 : vector<1x36xf32> to vector<96x36xf32>
    %121 = arith.addf %119, %120 : vector<96x36xf32>
    %c0_53 = arith.constant 0 : index
    %c0_54 = arith.constant 0 : index
    %c0_55 = arith.constant 0 : index
    %122 = vector.load %arg15[%c0_53, %c0_54, %c0_55] : memref<2x36x64xf32, #tpu.memory_space<vmem>>, vector<1x36x64xf32>
    %123 = vector.shape_cast %122 : vector<1x36x64xf32> to vector<36x64xf32>
    %124 = arith.truncf %121 : vector<96x36xf32> to vector<96x36xbf16>
    %125 = arith.truncf %123 : vector<36x64xf32> to vector<36x64xbf16>
    %cst_56 = arith.constant dense<0.000000e+00> : vector<96x64xf32>
    %126 = tpu.matmul %124, %125, %cst_56 {dimension_numbers = #tpu.dot_dimension_numbers<[1], [0], [0], [1], [0, 0, 1, 1], [], []>} : vector<96x36xbf16>, vector<36x64xbf16>, vector<96x64xf32> -> vector<96x64xf32>
    %c0_57 = arith.constant 0 : index
    %c0_58 = arith.constant 0 : index
    %c0_59 = arith.constant 0 : index
    %127 = vector.load %arg16[%c0_57, %c0_58, %c0_59] : memref<2x1x64xf32, #tpu.memory_space<vmem>>, vector<1x1x64xf32>
    %128 = vector.shape_cast %127 : vector<1x1x64xf32> to vector<1x64xf32>
    %129 = vector.broadcast %128 : vector<1x64xf32> to vector<96x64xf32>
    %130 = arith.addf %126, %129 : vector<96x64xf32>
    %cst_60 = arith.constant 0.000000e+00 : f32
    %131 = vector.broadcast %cst_60 : f32 to vector<96x64xf32>
    %132 = arith.maximumf %130, %131 : vector<96x64xf32>
    %c0_61 = arith.constant 0 : index
    %c0_62 = arith.constant 0 : index
    %c0_63 = arith.constant 0 : index
    %133 = vector.load %arg17[%c0_61, %c0_62, %c0_63] : memref<2x64x36xf32, #tpu.memory_space<vmem>>, vector<1x64x36xf32>
    %134 = vector.shape_cast %133 : vector<1x64x36xf32> to vector<64x36xf32>
    %135 = arith.truncf %132 : vector<96x64xf32> to vector<96x64xbf16>
    %136 = arith.truncf %134 : vector<64x36xf32> to vector<64x36xbf16>
    %cst_64 = arith.constant dense<0.000000e+00> : vector<96x36xf32>
    %137 = tpu.matmul %135, %136, %cst_64 {dimension_numbers = #tpu.dot_dimension_numbers<[1], [0], [0], [1], [0, 0, 1, 1], [], []>} : vector<96x64xbf16>, vector<64x36xbf16>, vector<96x36xf32> -> vector<96x36xf32>
    %c0_65 = arith.constant 0 : index
    %c0_66 = arith.constant 0 : index
    %c0_67 = arith.constant 0 : index
    %138 = vector.load %arg18[%c0_65, %c0_66, %c0_67] : memref<2x1x36xf32, #tpu.memory_space<vmem>>, vector<1x1x36xf32>
    %139 = vector.shape_cast %138 : vector<1x1x36xf32> to vector<1x36xf32>
    %140 = vector.broadcast %139 : vector<1x36xf32> to vector<96x36xf32>
    %141 = arith.addf %137, %140 : vector<96x36xf32>
    %142 = arith.addf %121, %141 : vector<96x36xf32>
    %c0_68 = arith.constant 0 : index
    %c0_69 = arith.constant 0 : index
    %c0_70 = arith.constant 0 : index
    %143 = vector.load %arg19[%c0_68, %c0_69, %c0_70] : memref<2x1x36xf32, #tpu.memory_space<vmem>>, vector<1x1x36xf32>
    %144 = vector.shape_cast %143 : vector<1x1x36xf32> to vector<1x36xf32>
    %c0_71 = arith.constant 0 : index
    %c0_72 = arith.constant 0 : index
    %c0_73 = arith.constant 0 : index
    %145 = vector.load %arg20[%c0_71, %c0_72, %c0_73] : memref<2x1x36xf32, #tpu.memory_space<vmem>>, vector<1x1x36xf32>
    %146 = vector.shape_cast %145 : vector<1x1x36xf32> to vector<1x36xf32>
    %cst_74 = arith.constant dense<0.000000e+00> : vector<96xf32>
    %147 = vector.multi_reduction <add>, %142, %cst_74 [1] : vector<96x36xf32> to vector<96xf32>
    %148 = vector.shape_cast %147 : vector<96xf32> to vector<96x1xf32>
    %cst_75 = arith.constant 3.600000e+01 : f32
    %149 = vector.broadcast %cst_75 : f32 to vector<96x1xf32>
    %150 = arith.divf %148, %149 : vector<96x1xf32>
    %151 = vector.broadcast %150 : vector<96x1xf32> to vector<96x36xf32>
    %152 = arith.subf %142, %151 : vector<96x36xf32>
    %153 = arith.mulf %152, %152 : vector<96x36xf32>
    %cst_76 = arith.constant dense<0.000000e+00> : vector<96xf32>
    %154 = vector.multi_reduction <add>, %153, %cst_76 [1] : vector<96x36xf32> to vector<96xf32>
    %155 = vector.shape_cast %154 : vector<96xf32> to vector<96x1xf32>
    %cst_77 = arith.constant 3.600000e+01 : f32
    %156 = vector.broadcast %cst_77 : f32 to vector<96x1xf32>
    %157 = arith.divf %155, %156 : vector<96x1xf32>
    %158 = vector.broadcast %150 : vector<96x1xf32> to vector<96x36xf32>
    %159 = arith.subf %142, %158 : vector<96x36xf32>
    %cst_78 = arith.constant 9.99999974E-6 : f32
    %160 = vector.broadcast %cst_78 : f32 to vector<96x1xf32>
    %161 = arith.addf %157, %160 : vector<96x1xf32>
    %162 = math.rsqrt %161 : vector<96x1xf32>
    %163 = vector.broadcast %162 : vector<96x1xf32> to vector<96x36xf32>
    %164 = arith.mulf %159, %163 : vector<96x36xf32>
    %165 = vector.broadcast %144 : vector<1x36xf32> to vector<96x36xf32>
    %166 = arith.mulf %164, %165 : vector<96x36xf32>
    %167 = vector.broadcast %146 : vector<1x36xf32> to vector<96x36xf32>
    %168 = arith.addf %166, %167 : vector<96x36xf32>
    %c1 = arith.constant 1 : index
    %c0_79 = arith.constant 0 : index
    %c0_80 = arith.constant 0 : index
    %169 = vector.load %arg9[%c1, %c0_79, %c0_80] : memref<2x36x108xf32, #tpu.memory_space<vmem>>, vector<1x36x108xf32>
    %170 = vector.shape_cast %169 : vector<1x36x108xf32> to vector<36x108xf32>
    %171 = arith.truncf %168 : vector<96x36xf32> to vector<96x36xbf16>
    %172 = arith.truncf %170 : vector<36x108xf32> to vector<36x108xbf16>
    %cst_81 = arith.constant dense<0.000000e+00> : vector<96x108xf32>
    %173 = tpu.matmul %171, %172, %cst_81 {dimension_numbers = #tpu.dot_dimension_numbers<[1], [0], [0], [1], [0, 0, 1, 1], [], []>} : vector<96x36xbf16>, vector<36x108xbf16>, vector<96x108xf32> -> vector<96x108xf32>
    %c1_82 = arith.constant 1 : index
    %c0_83 = arith.constant 0 : index
    %c0_84 = arith.constant 0 : index
    %174 = vector.load %arg10[%c1_82, %c0_83, %c0_84] : memref<2x1x108xf32, #tpu.memory_space<vmem>>, vector<1x1x108xf32>
    %175 = vector.shape_cast %174 : vector<1x1x108xf32> to vector<1x108xf32>
    %176 = vector.broadcast %175 : vector<1x108xf32> to vector<96x108xf32>
    %177 = arith.addf %173, %176 : vector<96x108xf32>
    %178 = vector.extract_strided_slice %177 {offsets = [0, 0], sizes = [96, 18], strides = [1, 1]} : vector<96x108xf32> to vector<96x18xf32>
    %179 = vector.extract_strided_slice %177 {offsets = [0, 36], sizes = [96, 18], strides = [1, 1]} : vector<96x108xf32> to vector<96x18xf32>
    %180 = vector.extract_strided_slice %177 {offsets = [0, 72], sizes = [96, 18], strides = [1, 1]} : vector<96x108xf32> to vector<96x18xf32>
    %181 = arith.truncf %178 : vector<96x18xf32> to vector<96x18xbf16>
    %182 = arith.truncf %179 : vector<96x18xf32> to vector<96x18xbf16>
    %cst_85 = arith.constant dense<0.000000e+00> : vector<96x96xf32>
    %183 = tpu.matmul %181, %182, %cst_85 {dimension_numbers = #tpu.dot_dimension_numbers<[1], [1], [0], [0], [0, 0, 1, 0], [], []>} : vector<96x18xbf16>, vector<96x18xbf16>, vector<96x96xf32> -> vector<96x96xf32>
    %cst_86 = arith.constant 0.235702261 : f32
    %184 = vector.broadcast %cst_86 : f32 to vector<96x96xf32>
    %185 = arith.mulf %183, %184 : vector<96x96xf32>
    %186 = arith.addf %185, %31 : vector<96x96xf32>
    %cst_87 = arith.constant dense<0xFF800000> : vector<96xf32>
    %187 = vector.multi_reduction <maximumf>, %186, %cst_87 [1] : vector<96x96xf32> to vector<96xf32>
    %188 = vector.shape_cast %187 : vector<96xf32> to vector<96x1xf32>
    %189 = vector.broadcast %188 : vector<96x1xf32> to vector<96x96xf32>
    %190 = arith.subf %186, %189 : vector<96x96xf32>
    %191 = math.exp %190 : vector<96x96xf32>
    %cst_88 = arith.constant dense<0.000000e+00> : vector<96xf32>
    %192 = vector.multi_reduction <add>, %191, %cst_88 [1] : vector<96x96xf32> to vector<96xf32>
    %193 = vector.shape_cast %192 : vector<96xf32> to vector<96x1xf32>
    %194 = tpu.reciprocal %193 {approx = true} : vector<96x1xf32> -> vector<96x1xf32>
    %195 = vector.broadcast %194 : vector<96x1xf32> to vector<96x96xf32>
    %196 = arith.mulf %191, %195 : vector<96x96xf32>
    %197 = arith.truncf %196 : vector<96x96xf32> to vector<96x96xbf16>
    %198 = arith.truncf %180 : vector<96x18xf32> to vector<96x18xbf16>
    %cst_89 = arith.constant dense<0.000000e+00> : vector<96x18xf32>
    %199 = tpu.matmul %197, %198, %cst_89 {dimension_numbers = #tpu.dot_dimension_numbers<[1], [0], [0], [1], [0, 0, 1, 1], [], []>} : vector<96x96xbf16>, vector<96x18xbf16>, vector<96x18xf32> -> vector<96x18xf32>
    %200 = vector.extract_strided_slice %177 {offsets = [0, 18], sizes = [96, 18], strides = [1, 1]} : vector<96x108xf32> to vector<96x18xf32>
    %201 = vector.extract_strided_slice %177 {offsets = [0, 54], sizes = [96, 18], strides = [1, 1]} : vector<96x108xf32> to vector<96x18xf32>
    %202 = vector.extract_strided_slice %177 {offsets = [0, 90], sizes = [96, 18], strides = [1, 1]} : vector<96x108xf32> to vector<96x18xf32>
    %203 = arith.truncf %200 : vector<96x18xf32> to vector<96x18xbf16>
    %204 = arith.truncf %201 : vector<96x18xf32> to vector<96x18xbf16>
    %cst_90 = arith.constant dense<0.000000e+00> : vector<96x96xf32>
    %205 = tpu.matmul %203, %204, %cst_90 {dimension_numbers = #tpu.dot_dimension_numbers<[1], [1], [0], [0], [0, 0, 1, 0], [], []>} : vector<96x18xbf16>, vector<96x18xbf16>, vector<96x96xf32> -> vector<96x96xf32>
    %cst_91 = arith.constant 0.235702261 : f32
    %206 = vector.broadcast %cst_91 : f32 to vector<96x96xf32>
    %207 = arith.mulf %205, %206 : vector<96x96xf32>
    %208 = arith.addf %207, %31 : vector<96x96xf32>
    %cst_92 = arith.constant dense<0xFF800000> : vector<96xf32>
    %209 = vector.multi_reduction <maximumf>, %208, %cst_92 [1] : vector<96x96xf32> to vector<96xf32>
    %210 = vector.shape_cast %209 : vector<96xf32> to vector<96x1xf32>
    %211 = vector.broadcast %210 : vector<96x1xf32> to vector<96x96xf32>
    %212 = arith.subf %208, %211 : vector<96x96xf32>
    %213 = math.exp %212 : vector<96x96xf32>
    %cst_93 = arith.constant dense<0.000000e+00> : vector<96xf32>
    %214 = vector.multi_reduction <add>, %213, %cst_93 [1] : vector<96x96xf32> to vector<96xf32>
    %215 = vector.shape_cast %214 : vector<96xf32> to vector<96x1xf32>
    %216 = tpu.reciprocal %215 {approx = true} : vector<96x1xf32> -> vector<96x1xf32>
    %217 = vector.broadcast %216 : vector<96x1xf32> to vector<96x96xf32>
    %218 = arith.mulf %213, %217 : vector<96x96xf32>
    %219 = arith.truncf %218 : vector<96x96xf32> to vector<96x96xbf16>
    %220 = arith.truncf %202 : vector<96x18xf32> to vector<96x18xbf16>
    %cst_94 = arith.constant dense<0.000000e+00> : vector<96x18xf32>
    %221 = tpu.matmul %219, %220, %cst_94 {dimension_numbers = #tpu.dot_dimension_numbers<[1], [0], [0], [1], [0, 0, 1, 1], [], []>} : vector<96x96xbf16>, vector<96x18xbf16>, vector<96x18xf32> -> vector<96x18xf32>
    %222 = tpu.concatenate %199, %221 in 1 : vector<96x18xf32>, vector<96x18xf32> -> vector<96x36xf32>
    %c1_95 = arith.constant 1 : index
    %c0_96 = arith.constant 0 : index
    %c0_97 = arith.constant 0 : index
    %223 = vector.load %arg11[%c1_95, %c0_96, %c0_97] : memref<2x36x36xf32, #tpu.memory_space<vmem>>, vector<1x36x36xf32>
    %224 = vector.shape_cast %223 : vector<1x36x36xf32> to vector<36x36xf32>
    %225 = arith.truncf %222 : vector<96x36xf32> to vector<96x36xbf16>
    %226 = arith.truncf %224 : vector<36x36xf32> to vector<36x36xbf16>
    %cst_98 = arith.constant dense<0.000000e+00> : vector<96x36xf32>
    %227 = tpu.matmul %225, %226, %cst_98 {dimension_numbers = #tpu.dot_dimension_numbers<[1], [0], [0], [1], [0, 0, 1, 1], [], []>} : vector<96x36xbf16>, vector<36x36xbf16>, vector<96x36xf32> -> vector<96x36xf32>
    %c1_99 = arith.constant 1 : index
    %c0_100 = arith.constant 0 : index
    %c0_101 = arith.constant 0 : index
    %228 = vector.load %arg12[%c1_99, %c0_100, %c0_101] : memref<2x1x36xf32, #tpu.memory_space<vmem>>, vector<1x1x36xf32>
    %229 = vector.shape_cast %228 : vector<1x1x36xf32> to vector<1x36xf32>
    %230 = vector.broadcast %229 : vector<1x36xf32> to vector<96x36xf32>
    %231 = arith.addf %227, %230 : vector<96x36xf32>
    %232 = arith.addf %168, %231 : vector<96x36xf32>
    %c1_102 = arith.constant 1 : index
    %c0_103 = arith.constant 0 : index
    %c0_104 = arith.constant 0 : index
    %233 = vector.load %arg13[%c1_102, %c0_103, %c0_104] : memref<2x1x36xf32, #tpu.memory_space<vmem>>, vector<1x1x36xf32>
    %234 = vector.shape_cast %233 : vector<1x1x36xf32> to vector<1x36xf32>
    %c1_105 = arith.constant 1 : index
    %c0_106 = arith.constant 0 : index
    %c0_107 = arith.constant 0 : index
    %235 = vector.load %arg14[%c1_105, %c0_106, %c0_107] : memref<2x1x36xf32, #tpu.memory_space<vmem>>, vector<1x1x36xf32>
    %236 = vector.shape_cast %235 : vector<1x1x36xf32> to vector<1x36xf32>
    %cst_108 = arith.constant dense<0.000000e+00> : vector<96xf32>
    %237 = vector.multi_reduction <add>, %232, %cst_108 [1] : vector<96x36xf32> to vector<96xf32>
    %238 = vector.shape_cast %237 : vector<96xf32> to vector<96x1xf32>
    %cst_109 = arith.constant 3.600000e+01 : f32
    %239 = vector.broadcast %cst_109 : f32 to vector<96x1xf32>
    %240 = arith.divf %238, %239 : vector<96x1xf32>
    %241 = vector.broadcast %240 : vector<96x1xf32> to vector<96x36xf32>
    %242 = arith.subf %232, %241 : vector<96x36xf32>
    %243 = arith.mulf %242, %242 : vector<96x36xf32>
    %cst_110 = arith.constant dense<0.000000e+00> : vector<96xf32>
    %244 = vector.multi_reduction <add>, %243, %cst_110 [1] : vector<96x36xf32> to vector<96xf32>
    %245 = vector.shape_cast %244 : vector<96xf32> to vector<96x1xf32>
    %cst_111 = arith.constant 3.600000e+01 : f32
    %246 = vector.broadcast %cst_111 : f32 to vector<96x1xf32>
    %247 = arith.divf %245, %246 : vector<96x1xf32>
    %248 = vector.broadcast %240 : vector<96x1xf32> to vector<96x36xf32>
    %249 = arith.subf %232, %248 : vector<96x36xf32>
    %cst_112 = arith.constant 9.99999974E-6 : f32
    %250 = vector.broadcast %cst_112 : f32 to vector<96x1xf32>
    %251 = arith.addf %247, %250 : vector<96x1xf32>
    %252 = math.rsqrt %251 : vector<96x1xf32>
    %253 = vector.broadcast %252 : vector<96x1xf32> to vector<96x36xf32>
    %254 = arith.mulf %249, %253 : vector<96x36xf32>
    %255 = vector.broadcast %234 : vector<1x36xf32> to vector<96x36xf32>
    %256 = arith.mulf %254, %255 : vector<96x36xf32>
    %257 = vector.broadcast %236 : vector<1x36xf32> to vector<96x36xf32>
    %258 = arith.addf %256, %257 : vector<96x36xf32>
    %c1_113 = arith.constant 1 : index
    %c0_114 = arith.constant 0 : index
    %c0_115 = arith.constant 0 : index
    %259 = vector.load %arg15[%c1_113, %c0_114, %c0_115] : memref<2x36x64xf32, #tpu.memory_space<vmem>>, vector<1x36x64xf32>
    %260 = vector.shape_cast %259 : vector<1x36x64xf32> to vector<36x64xf32>
    %261 = arith.truncf %258 : vector<96x36xf32> to vector<96x36xbf16>
    %262 = arith.truncf %260 : vector<36x64xf32> to vector<36x64xbf16>
    %cst_116 = arith.constant dense<0.000000e+00> : vector<96x64xf32>
    %263 = tpu.matmul %261, %262, %cst_116 {dimension_numbers = #tpu.dot_dimension_numbers<[1], [0], [0], [1], [0, 0, 1, 1], [], []>} : vector<96x36xbf16>, vector<36x64xbf16>, vector<96x64xf32> -> vector<96x64xf32>
    %c1_117 = arith.constant 1 : index
    %c0_118 = arith.constant 0 : index
    %c0_119 = arith.constant 0 : index
    %264 = vector.load %arg16[%c1_117, %c0_118, %c0_119] : memref<2x1x64xf32, #tpu.memory_space<vmem>>, vector<1x1x64xf32>
    %265 = vector.shape_cast %264 : vector<1x1x64xf32> to vector<1x64xf32>
    %266 = vector.broadcast %265 : vector<1x64xf32> to vector<96x64xf32>
    %267 = arith.addf %263, %266 : vector<96x64xf32>
    %cst_120 = arith.constant 0.000000e+00 : f32
    %268 = vector.broadcast %cst_120 : f32 to vector<96x64xf32>
    %269 = arith.maximumf %267, %268 : vector<96x64xf32>
    %c1_121 = arith.constant 1 : index
    %c0_122 = arith.constant 0 : index
    %c0_123 = arith.constant 0 : index
    %270 = vector.load %arg17[%c1_121, %c0_122, %c0_123] : memref<2x64x36xf32, #tpu.memory_space<vmem>>, vector<1x64x36xf32>
    %271 = vector.shape_cast %270 : vector<1x64x36xf32> to vector<64x36xf32>
    %272 = arith.truncf %269 : vector<96x64xf32> to vector<96x64xbf16>
    %273 = arith.truncf %271 : vector<64x36xf32> to vector<64x36xbf16>
    %cst_124 = arith.constant dense<0.000000e+00> : vector<96x36xf32>
    %274 = tpu.matmul %272, %273, %cst_124 {dimension_numbers = #tpu.dot_dimension_numbers<[1], [0], [0], [1], [0, 0, 1, 1], [], []>} : vector<96x64xbf16>, vector<64x36xbf16>, vector<96x36xf32> -> vector<96x36xf32>
    %c1_125 = arith.constant 1 : index
    %c0_126 = arith.constant 0 : index
    %c0_127 = arith.constant 0 : index
    %275 = vector.load %arg18[%c1_125, %c0_126, %c0_127] : memref<2x1x36xf32, #tpu.memory_space<vmem>>, vector<1x1x36xf32>
    %276 = vector.shape_cast %275 : vector<1x1x36xf32> to vector<1x36xf32>
    %277 = vector.broadcast %276 : vector<1x36xf32> to vector<96x36xf32>
    %278 = arith.addf %274, %277 : vector<96x36xf32>
    %279 = arith.addf %258, %278 : vector<96x36xf32>
    %c1_128 = arith.constant 1 : index
    %c0_129 = arith.constant 0 : index
    %c0_130 = arith.constant 0 : index
    %280 = vector.load %arg19[%c1_128, %c0_129, %c0_130] : memref<2x1x36xf32, #tpu.memory_space<vmem>>, vector<1x1x36xf32>
    %281 = vector.shape_cast %280 : vector<1x1x36xf32> to vector<1x36xf32>
    %c1_131 = arith.constant 1 : index
    %c0_132 = arith.constant 0 : index
    %c0_133 = arith.constant 0 : index
    %282 = vector.load %arg20[%c1_131, %c0_132, %c0_133] : memref<2x1x36xf32, #tpu.memory_space<vmem>>, vector<1x1x36xf32>
    %283 = vector.shape_cast %282 : vector<1x1x36xf32> to vector<1x36xf32>
    %cst_134 = arith.constant dense<0.000000e+00> : vector<96xf32>
    %284 = vector.multi_reduction <add>, %279, %cst_134 [1] : vector<96x36xf32> to vector<96xf32>
    %285 = vector.shape_cast %284 : vector<96xf32> to vector<96x1xf32>
    %cst_135 = arith.constant 3.600000e+01 : f32
    %286 = vector.broadcast %cst_135 : f32 to vector<96x1xf32>
    %287 = arith.divf %285, %286 : vector<96x1xf32>
    %288 = vector.broadcast %287 : vector<96x1xf32> to vector<96x36xf32>
    %289 = arith.subf %279, %288 : vector<96x36xf32>
    %290 = arith.mulf %289, %289 : vector<96x36xf32>
    %cst_136 = arith.constant dense<0.000000e+00> : vector<96xf32>
    %291 = vector.multi_reduction <add>, %290, %cst_136 [1] : vector<96x36xf32> to vector<96xf32>
    %292 = vector.shape_cast %291 : vector<96xf32> to vector<96x1xf32>
    %cst_137 = arith.constant 3.600000e+01 : f32
    %293 = vector.broadcast %cst_137 : f32 to vector<96x1xf32>
    %294 = arith.divf %292, %293 : vector<96x1xf32>
    %295 = vector.broadcast %287 : vector<96x1xf32> to vector<96x36xf32>
    %296 = arith.subf %279, %295 : vector<96x36xf32>
    %cst_138 = arith.constant 9.99999974E-6 : f32
    %297 = vector.broadcast %cst_138 : f32 to vector<96x1xf32>
    %298 = arith.addf %294, %297 : vector<96x1xf32>
    %299 = math.rsqrt %298 : vector<96x1xf32>
    %300 = vector.broadcast %299 : vector<96x1xf32> to vector<96x36xf32>
    %301 = arith.mulf %296, %300 : vector<96x36xf32>
    %302 = vector.broadcast %281 : vector<1x36xf32> to vector<96x36xf32>
    %303 = arith.mulf %301, %302 : vector<96x36xf32>
    %304 = vector.broadcast %283 : vector<1x36xf32> to vector<96x36xf32>
    %305 = arith.addf %303, %304 : vector<96x36xf32>
    %c0_139 = arith.constant 0 : index
    %c0_140 = arith.constant 0 : index
    %306 = vector.load %arg21[%c0_139, %c0_140] : memref<36x1xf32, #tpu.memory_space<vmem>>, vector<36x1xf32>
    %307 = arith.truncf %305 : vector<96x36xf32> to vector<96x36xbf16>
    %308 = arith.truncf %306 : vector<36x1xf32> to vector<36x1xbf16>
    %cst_141 = arith.constant dense<0.000000e+00> : vector<96x1xf32>
    %309 = tpu.matmul %307, %308, %cst_141 {dimension_numbers = #tpu.dot_dimension_numbers<[1], [0], [0], [1], [0, 0, 1, 1], [], []>} : vector<96x36xbf16>, vector<36x1xbf16>, vector<96x1xf32> -> vector<96x1xf32>
    %c0_142 = arith.constant 0 : index
    %c0_143 = arith.constant 0 : index
    %310 = vector.load %arg22[%c0_142, %c0_143] : memref<1x1xf32, #tpu.memory_space<vmem>>, vector<1x1xf32>
    %311 = vector.broadcast %310 : vector<1x1xf32> to vector<96x1xf32>
    %312 = arith.addf %309, %311 : vector<96x1xf32>
    %c0_144 = arith.constant 0 : index
    %c0_145 = arith.constant 0 : index
    %313 = vector.load %arg23[%c0_144, %c0_145] : memref<96x1xf32, #tpu.memory_space<vmem>>, vector<96x1xf32>
    tpu.vector_store %arg23[%c0_144, %c0_145], %312 {strides = array<i32>} : memref<96x1xf32, #tpu.memory_space<vmem>>, vector<96x1xf32>,
    return
  }
  func.func @transform_0(%arg0: i32) -> (i32, i32) {
    %c0_i32 = arith.constant 0 : i32
    %c0_i32_0 = arith.constant 0 : i32
    %c0_i32_1 = arith.constant 0 : i32
    return %c0_i32, %c0_i32_0 : i32, i32
  }
  func.func @transform_1(%arg0: i32) -> (i32, i32) {
    %c0_i32 = arith.constant 0 : i32
    %c0_i32_0 = arith.constant 0 : i32
    %c0_i32_1 = arith.constant 0 : i32
    return %c0_i32, %c0_i32_0 : i32, i32
  }
  func.func @transform_2(%arg0: i32) -> (i32, i32) {
    %c0_i32 = arith.constant 0 : i32
    %c0_i32_0 = arith.constant 0 : i32
    %c0_i32_1 = arith.constant 0 : i32
    return %c0_i32, %c0_i32_0 : i32, i32
  }
  func.func @transform_3(%arg0: i32) -> (i32, i32) {
    %c0_i32 = arith.constant 0 : i32
    %c0_i32_0 = arith.constant 0 : i32
    %c0_i32_1 = arith.constant 0 : i32
    return %c0_i32, %c0_i32_0 : i32, i32
  }
  func.func @transform_4(%arg0: i32) -> (i32, i32) {
    %c0_i32 = arith.constant 0 : i32
    %c0_i32_0 = arith.constant 0 : i32
    %c0_i32_1 = arith.constant 0 : i32
    return %c0_i32, %c0_i32_0 : i32, i32
  }
  func.func @transform_5(%arg0: i32) -> (i32, i32) {
    %c0_i32 = arith.constant 0 : i32
    %c0_i32_0 = arith.constant 0 : i32
    %c0_i32_1 = arith.constant 0 : i32
    return %c0_i32, %c0_i32_0 : i32, i32
  }
  func.func @transform_6(%arg0: i32) -> (i32, i32) {
    %c0_i32 = arith.constant 0 : i32
    %c0_i32_0 = arith.constant 0 : i32
    %c0_i32_1 = arith.constant 0 : i32
    return %c0_i32, %c0_i32_0 : i32, i32
  }
  func.func @transform_7(%arg0: i32) -> (i32, i32) {
    %c0_i32 = arith.constant 0 : i32
    %c0_i32_0 = arith.constant 0 : i32
    %c0_i32_1 = arith.constant 0 : i32
    return %c0_i32, %c0_i32_0 : i32, i32
  }
  func.func @transform_8(%arg0: i32) -> (i32, i32, i32) {
    %c0_i32 = arith.constant 0 : i32
    %c0_i32_0 = arith.constant 0 : i32
    %c0_i32_1 = arith.constant 0 : i32
    %c0_i32_2 = arith.constant 0 : i32
    return %c0_i32, %c0_i32_0, %c0_i32_1 : i32, i32, i32
  }
  func.func @transform_9(%arg0: i32) -> (i32, i32, i32) {
    %c0_i32 = arith.constant 0 : i32
    %c0_i32_0 = arith.constant 0 : i32
    %c0_i32_1 = arith.constant 0 : i32
    %c0_i32_2 = arith.constant 0 : i32
    return %c0_i32, %c0_i32_0, %c0_i32_1 : i32, i32, i32
  }
  func.func @transform_10(%arg0: i32) -> (i32, i32, i32) {
    %c0_i32 = arith.constant 0 : i32
    %c0_i32_0 = arith.constant 0 : i32
    %c0_i32_1 = arith.constant 0 : i32
    %c0_i32_2 = arith.constant 0 : i32
    return %c0_i32, %c0_i32_0, %c0_i32_1 : i32, i32, i32
  }
  func.func @transform_11(%arg0: i32) -> (i32, i32, i32) {
    %c0_i32 = arith.constant 0 : i32
    %c0_i32_0 = arith.constant 0 : i32
    %c0_i32_1 = arith.constant 0 : i32
    %c0_i32_2 = arith.constant 0 : i32
    return %c0_i32, %c0_i32_0, %c0_i32_1 : i32, i32, i32
  }
  func.func @transform_12(%arg0: i32) -> (i32, i32, i32) {
    %c0_i32 = arith.constant 0 : i32
    %c0_i32_0 = arith.constant 0 : i32
    %c0_i32_1 = arith.constant 0 : i32
    %c0_i32_2 = arith.constant 0 : i32
    return %c0_i32, %c0_i32_0, %c0_i32_1 : i32, i32, i32
  }
  func.func @transform_13(%arg0: i32) -> (i32, i32, i32) {
    %c0_i32 = arith.constant 0 : i32
    %c0_i32_0 = arith.constant 0 : i32
    %c0_i32_1 = arith.constant 0 : i32
    %c0_i32_2 = arith.constant 0 : i32
    return %c0_i32, %c0_i32_0, %c0_i32_1 : i32, i32, i32
  }
  func.func @transform_14(%arg0: i32) -> (i32, i32, i32) {
    %c0_i32 = arith.constant 0 : i32
    %c0_i32_0 = arith.constant 0 : i32
    %c0_i32_1 = arith.constant 0 : i32
    %c0_i32_2 = arith.constant 0 : i32
    return %c0_i32, %c0_i32_0, %c0_i32_1 : i32, i32, i32
  }
  func.func @transform_15(%arg0: i32) -> (i32, i32, i32) {
    %c0_i32 = arith.constant 0 : i32
    %c0_i32_0 = arith.constant 0 : i32
    %c0_i32_1 = arith.constant 0 : i32
    %c0_i32_2 = arith.constant 0 : i32
    return %c0_i32, %c0_i32_0, %c0_i32_1 : i32, i32, i32
  }
  func.func @transform_16(%arg0: i32) -> (i32, i32, i32) {
    %c0_i32 = arith.constant 0 : i32
    %c0_i32_0 = arith.constant 0 : i32
    %c0_i32_1 = arith.constant 0 : i32
    %c0_i32_2 = arith.constant 0 : i32
    return %c0_i32, %c0_i32_0, %c0_i32_1 : i32, i32, i32
  }
  func.func @transform_17(%arg0: i32) -> (i32, i32, i32) {
    %c0_i32 = arith.constant 0 : i32
    %c0_i32_0 = arith.constant 0 : i32
    %c0_i32_1 = arith.constant 0 : i32
    %c0_i32_2 = arith.constant 0 : i32
    return %c0_i32, %c0_i32_0, %c0_i32_1 : i32, i32, i32
  }
  func.func @transform_18(%arg0: i32) -> (i32, i32, i32) {
    %c0_i32 = arith.constant 0 : i32
    %c0_i32_0 = arith.constant 0 : i32
    %c0_i32_1 = arith.constant 0 : i32
    %c0_i32_2 = arith.constant 0 : i32
    return %c0_i32, %c0_i32_0, %c0_i32_1 : i32, i32, i32
  }
  func.func @transform_19(%arg0: i32) -> (i32, i32, i32) {
    %c0_i32 = arith.constant 0 : i32
    %c0_i32_0 = arith.constant 0 : i32
    %c0_i32_1 = arith.constant 0 : i32
    %c0_i32_2 = arith.constant 0 : i32
    return %c0_i32, %c0_i32_0, %c0_i32_1 : i32, i32, i32
  }
  func.func @transform_20(%arg0: i32) -> (i32, i32) {
    %c0_i32 = arith.constant 0 : i32
    %c0_i32_0 = arith.constant 0 : i32
    %c0_i32_1 = arith.constant 0 : i32
    return %c0_i32, %c0_i32_0 : i32, i32
  }
  func.func @transform_21(%arg0: i32) -> (i32, i32) {
    %c0_i32 = arith.constant 0 : i32
    %c0_i32_0 = arith.constant 0 : i32
    %c0_i32_1 = arith.constant 0 : i32
    return %c0_i32, %c0_i32_0 : i32, i32
  }
  func.func @transform_22(%arg0: i32) -> (i32, i32) {
    %c0_i32 = arith.constant 0 : i32
    %c0_i32_0 = arith.constant 0 : i32
    %c0_i32_1 = arith.constant 0 : i32
    return %c0_i32, %c0_i32_0 : i32, i32
  }
}

</mosaic_0001>

<llo_original>
// kernel: tile.9
$region0: #{tile.9}
  %s0 = inlined_call_operand.vmem [shape: f32[16,6,36], index: 0, kind: input, shape index: {}]
  %s1 = inlined_call_operand.vmem [shape: f32[96,36], index: 1, kind: output, shape index: {}]
  %v2 = vld [vmem:[%s0] sm:$0x3f]
  %vm3 = vcmask 293888
  %4 = vst.msk [vmem:[%s1] sm:$0x3f] %vm3, %v2
  %s5 = scalar_lea.vmem %s0, 8
  %v6 = vld [vmem:[%s5] sm:$0x3f]
  %vm7 = vcmask 293888
  %s8 = scalar_lea.vmem %s1, 6
  %9 = vst.msk [vmem:[%s8] sm:$0x3f] %vm7, %v6
  %s10 = scalar_lea.vmem %s0, 16
  %v11 = vld [vmem:[%s10] sm:$0x3f]
  %vm12 = vcmask 293888
  %s13 = scalar_lea.vmem %s1, 12
  %14 = vst.msk [vmem:[%s13] sm:$0x3f] %vm12, %v11
  %s15 = scalar_lea.vmem %s0, 24
  %v16 = vld [vmem:[%s15] sm:$0x3f]
  %vm17 = vcmask 293888
  %s18 = scalar_lea.vmem %s1, 18
  %19 = vst.msk [vmem:[%s18] sm:$0x3f] %vm17, %v16
  %s20 = scalar_lea.vmem %s0, 32
  %v21 = vld [vmem:[%s20] sm:$0x3f]
  %vm22 = vcmask 293888
  %s23 = scalar_lea.vmem %s1, 24
  %24 = vst.msk [vmem:[%s23] sm:$0x3f] %vm22, %v21
  %s25 = scalar_lea.vmem %s0, 40
  %v26 = vld [vmem:[%s25] sm:$0x3f]
  %vm27 = vcmask 293888
  %s28 = scalar_lea.vmem %s1, 30
  %29 = vst.msk [vmem:[%s28] sm:$0x3f] %vm27, %v26
  %s30 = scalar_lea.vmem %s0, 48
  %v31 = vld [vmem:[%s30] sm:$0x3f]
  %vm32 = vcmask 293888
  %s33 = scalar_lea.vmem %s1, 36
  %34 = vst.msk [vmem:[%s33] sm:$0x3f] %vm32, %v31
  %s35 = scalar_lea.vmem %s0, 56
  %v36 = vld [vmem:[%s35] sm:$0x3f]
  %vm37 = vcmask 293888
  %s38 = scalar_lea.vmem %s1, 42
  %39 = vst.msk [vmem:[%s38] sm:$0x3f] %vm37, %v36
  %s40 = scalar_lea.vmem %s0, 64
  %v41 = vld [vmem:[%s40] sm:$0x3f]
  %vm42 = vcmask 293888
  %s43 = scalar_lea.vmem %s1, 48
  %44 = vst.msk [vmem:[%s43] sm:$0x3f] %vm42, %v41
  %s45 = scalar_lea.vmem %s0, 72
  %v46 = vld [vmem:[%s45] sm:$0x3f]
  %vm47 = vcmask 293888
  %s48 = scalar_lea.vmem %s1, 54
  %49 = vst.msk [vmem:[%s48] sm:$0x3f] %vm47, %v46
  %s50 = scalar_lea.vmem %s0, 80
  %v51 = vld [vmem:[%s50] sm:$0x3f]
  %vm52 = vcmask 293888
  %s53 = scalar_lea.vmem %s1, 60
  %54 = vst.msk [vmem:[%s53] sm:$0x3f] %vm52, %v51
  %s55 = scalar_lea.vmem %s0, 88
  %v56 = vld [vmem:[%s55] sm:$0x3f]
  %vm57 = vcmask 293888
  %s58 = scalar_lea.vmem %s1, 66
  %59 = vst.msk [vmem:[%s58] sm:$0x3f] %vm57, %v56
  %s60 = scalar_lea.vmem %s0, 96
  %v61 = vld [vmem:[%s60] sm:$0x3f]
  %vm62 = vcmask 293888
  %s63 = scalar_lea.vmem %s1, 72
  %64 = vst.msk [vmem:[%s63] sm:$0x3f] %vm62, %v61
  %s65 = scalar_lea.vmem %s0, 104
  %v66 = vld [vmem:[%s65] sm:$0x3f]
  %vm67 = vcmask 293888
  %s68 = scalar_lea.vmem %s1, 78
  %69 = vst.msk [vmem:[%s68] sm:$0x3f] %vm67, %v66
  %s70 = scalar_lea.vmem %s0, 112
  %v71 = vld [vmem:[%s70] sm:$0x3f]
  %vm72 = vcmask 293888
  %s73 = scalar_lea.vmem %s1, 84
  %74 = vst.msk [vmem:[%s73] sm:$0x3f] %vm72, %v71
  %s75 = scalar_lea.vmem %s0, 120
  %v76 = vld [vmem:[%s75] sm:$0x3f]
  %vm77 = vcmask 293888
  %s78 = scalar_lea.vmem %s1, 90
  %79 = vst.msk [vmem:[%s78] sm:$0x3f] %vm77, %v76

// kernel: gc_transformer_forward.1
$region0: #{gc_transformer_forward.1}
  #allocation0 [shape = 'u32[]', space=smem, size = 0x4, offset = 0x4, fixed_abs, tag = 'smem constant byte address 0x4 - core index']
  #allocation1 [shape = 'u32[144,128]{1,0:T(1,128)}', space=vmem, size = 0x12000, scoped, tag = 'internal scratch']
  #allocation2 [shape = 'f32[1,1]{1,0:T(1,128)S(1)}', space=vmem, size = 0x200, scoped, tag = 'scoped memory for gc_transformer_forward.1']
  %s0 = inlined_call_operand.vmem [shape: f32[96,7], index: 0, kind: input, shape index: {}]
  %s1 = inlined_call_operand.vmem [shape: f32[96,96], index: 1, kind: input, shape index: {}]
  %s2 = inlined_call_operand.vmem [shape: f32[96,96], index: 2, kind: input, shape index: {}]
  %s3 = inlined_call_operand.vmem [shape: f32[8,14], index: 3, kind: input, shape index: {}]
  %s4 = inlined_call_operand.vmem [shape: f32[1,14], index: 4, kind: input, shape index: {}]
  %s5 = inlined_call_operand.vmem [shape: f32[18,36], index: 5, kind: input, shape index: {}]
  %s6 = inlined_call_operand.vmem [shape: f32[1,36], index: 6, kind: input, shape index: {}]
  %s7 = inlined_call_operand.vmem [shape: f32[96,36], index: 7, kind: input, shape index: {}]
  %s8 = inlined_call_operand.vmem [shape: f32[2,36,108], index: 8, kind: input, shape index: {}]
  %s9 = inlined_call_operand.vmem [shape: f32[2,1,108], index: 9, kind: input, shape index: {}]
  %s10 = inlined_call_operand.vmem [shape: f32[2,36,36], index: 10, kind: input, shape index: {}]
  %s11 = inlined_call_operand.vmem [shape: f32[2,1,36], index: 11, kind: input, shape index: {}]
  %s12 = inlined_call_operand.vmem [shape: f32[2,1,36], index: 12, kind: input, shape index: {}]
  %s13 = inlined_call_operand.vmem [shape: f32[2,1,36], index: 13, kind: input, shape index: {}]
  %s14 = inlined_call_operand.vmem [shape: f32[2,36,64], index: 14, kind: input, shape index: {}]
  %s15 = inlined_call_operand.vmem [shape: f32[2,1,64], index: 15, kind: input, shape index: {}]
  %s16 = inlined_call_operand.vmem [shape: f32[2,64,36], index: 16, kind: input, shape index: {}]
  %s17 = inlined_call_operand.vmem [shape: f32[2,1,36], index: 17, kind: input, shape index: {}]
  %s18 = inlined_call_operand.vmem [shape: f32[2,1,36], index: 18, kind: input, shape index: {}]
  %s19 = inlined_call_operand.vmem [shape: f32[2,1,36], index: 19, kind: input, shape index: {}]
  %s20 = inlined_call_operand.vmem [shape: f32[36,1], index: 20, kind: input, shape index: {}]
  %s21 = inlined_call_operand.<no memory space> [shape: f32[1,1], index: 21, kind: input, shape index: {}]
  %s22 = inlined_call_operand.vmem [shape: f32[96,1], index: 22, kind: output, shape index: {}]
  %s23 = sld [smem:[#allocation0]]
  $region98: #{gc_transformer_forward.1} parent=0
    _
  %s25 = ssub.s32 1, %s23
  %s26 = scalar_select 0, %s25, %s23
  %v27 = vstv %s21
  %28 = vst [vmem:[#allocation2] sm:$0x1] %v27
  // Predicated region
  $region2: #{gc_transformer_forward.1} parent=0 // pred_check
    _
  $region3: #{gc_transformer_forward.1} parent=0 // pred_check_branch
    %30 = sbr.rel (0) target = $region5
  $region4: #{gc_transformer_forward.1} parent=0 // pred_region
    _
  $region5: #{gc_transformer_forward.1} parent=0 // pred_fallthru
    _
  // Predicated region
  $region6: #{gc_transformer_forward.1} parent=0 // pred_check
    _
  $region7: #{gc_transformer_forward.1} parent=0 // pred_check_branch
    %32 = sbr.rel (0) target = $region9
  $region8: #{gc_transformer_forward.1} parent=0 // pred_region
    _
  $region9: #{gc_transformer_forward.1} parent=0 // pred_fallthru
    _
  // Predicated region
  $region10: #{gc_transformer_forward.1} parent=0 // pred_check
    _
  $region11: #{gc_transformer_forward.1} parent=0 // pred_check_branch
    %34 = sbr.rel (0) target = $region13
  $region12: #{gc_transformer_forward.1} parent=0 // pred_region
    _
  $region13: #{gc_transformer_forward.1} parent=0 // pred_fallthru
    _
  // Predicated region
  $region14: #{gc_transformer_forward.1} parent=0 // pred_check
    _
  $region15: #{gc_transformer_forward.1} parent=0 // pred_check_branch
    %36 = sbr.rel (0) target = $region17
  $region16: #{gc_transformer_forward.1} parent=0 // pred_region
    _
  $region17: #{gc_transformer_forward.1} parent=0 // pred_fallthru
    _
  // Predicated region
  $region18: #{gc_transformer_forward.1} parent=0 // pred_check
    _
  $region19: #{gc_transformer_forward.1} parent=0 // pred_check_branch
    %38 = sbr.rel (0) target = $region21
  $region20: #{gc_transformer_forward.1} parent=0 // pred_region
    _
  $region21: #{gc_transformer_forward.1} parent=0 // pred_fallthru
    _
  // Predicated region
  $region22: #{gc_transformer_forward.1} parent=0 // pred_check
    _
  $region23: #{gc_transformer_forward.1} parent=0 // pred_check_branch
    %40 = sbr.rel (0) target = $region25
  $region24: #{gc_transformer_forward.1} parent=0 // pred_region
    _
  $region25: #{gc_transformer_forward.1} parent=0 // pred_fallthru
    _
  // Predicated region
  $region26: #{gc_transformer_forward.1} parent=0 // pred_check
    _
  $region27: #{gc_transformer_forward.1} parent=0 // pred_check_branch
    %42 = sbr.rel (0) target = $region29
  $region28: #{gc_transformer_forward.1} parent=0 // pred_region
    _
  $region29: #{gc_transformer_forward.1} parent=0 // pred_fallthru
    _
  // Predicated region
  $region30: #{gc_transformer_forward.1} parent=0 // pred_check
    _
  $region31: #{gc_transformer_forward.1} parent=0 // pred_check_branch
    %44 = sbr.rel (0) target = $region33
  $region32: #{gc_transformer_forward.1} parent=0 // pred_region
    _
  $region33: #{gc_transformer_forward.1} parent=0 // pred_fallthru
    _
  // Predicated region
  $region34: #{gc_transformer_forward.1} parent=0 // pred_check
    _
  $region35: #{gc_transformer_forward.1} parent=0 // pred_check_branch
    %46 = sbr.rel (0) target = $region37
  $region36: #{gc_transformer_forward.1} parent=0 // pred_region
    _
  $region37: #{gc_transformer_forward.1} parent=0 // pred_fallthru
    _
  // Predicated region
  $region38: #{gc_transformer_forward.1} parent=0 // pred_check
    _
  $region39: #{gc_transformer_forward.1} parent=0 // pred_check_branch
    %48 = sbr.rel (0) target = $region41
  $region40: #{gc_transformer_forward.1} parent=0 // pred_region
    _
  $region41: #{gc_transformer_forward.1} parent=0 // pred_fallthru
    _
  // Predicated region
  $region42: #{gc_transformer_forward.1} parent=0 // pred_check
    _
  $region43: #{gc_transformer_forward.1} parent=0 // pred_check_branch
    %50 = sbr.rel (0) target = $region45
  $region44: #{gc_transformer_forward.1} parent=0 // pred_region
    _
  $region45: #{gc_transformer_forward.1} parent=0 // pred_fallthru
    _
  // Predicated region
  $region46: #{gc_transformer_forward.1} parent=0 // pred_check
    _
  $region47: #{gc_transformer_forward.1} parent=0 // pred_check_branch
    %52 = sbr.rel (0) target = $region49
  $region48: #{gc_transformer_forward.1} parent=0 // pred_region
    _
  $region49: #{gc_transformer_forward.1} parent=0 // pred_fallthru
    _
  // Predicated region
  $region50: #{gc_transformer_forward.1} parent=0 // pred_check
    _
  $region51: #{gc_transformer_forward.1} parent=0 // pred_check_branch
    %54 = sbr.rel (0) target = $region53
  $region52: #{gc_transformer_forward.1} parent=0 // pred_region
    _
  $region53: #{gc_transformer_forward.1} parent=0 // pred_fallthru
    _
  // Predicated region
  $region54: #{gc_transformer_forward.1} parent=0 // pred_check
    _
  $region55: #{gc_transformer_forward.1} parent=0 // pred_check_branch
    %56 = sbr.rel (0) target = $region57
  $region56: #{gc_transformer_forward.1} parent=0 // pred_region
    _
  $region57: #{gc_transformer_forward.1} parent=0 // pred_fallthru
    _
  // Predicated region
  $region58: #{gc_transformer_forward.1} parent=0 // pred_check
    _
  $region59: #{gc_transformer_forward.1} parent=0 // pred_check_branch
    %58 = sbr.rel (0) target = $region61
  $region60: #{gc_transformer_forward.1} parent=0 // pred_region
    _
  $region61: #{gc_transformer_forward.1} parent=0 // pred_fallthru
    _
  // Predicated region
  $region62: #{gc_transformer_forward.1} parent=0 // pred_check
    _
  $region63: #{gc_transformer_forward.1} parent=0 // pred_check_branch
    %60 = sbr.rel (0) target = $region65
  $region64: #{gc_transformer_forward.1} parent=0 // pred_region
    _
  $region65: #{gc_transformer_forward.1} parent=0 // pred_fallthru
    _
  // Predicated region
  $region66: #{gc_transformer_forward.1} parent=0 // pred_check
    _
  $region67: #{gc_transformer_forward.1} parent=0 // pred_check_branch
    %62 = sbr.rel (0) target = $region69
  $region68: #{gc_transformer_forward.1} parent=0 // pred_region
    _
  $region69: #{gc_transformer_forward.1} parent=0 // pred_fallthru
    _
  // Predicated region
  $region70: #{gc_transformer_forward.1} parent=0 // pred_check
    _
  $region71: #{gc_transformer_forward.1} parent=0 // pred_check_branch
    %64 = sbr.rel (0) target = $region73
  $region72: #{gc_transformer_forward.1} parent=0 // pred_region
    _
  $region73: #{gc_transformer_forward.1} parent=0 // pred_fallthru
    _
  // Predicated region
  $region74: #{gc_transformer_forward.1} parent=0 // pred_check
    _
  $region75: #{gc_transformer_forward.1} parent=0 // pred_check_branch
    %66 = sbr.rel (0) target = $region77
  $region76: #{gc_transformer_forward.1} parent=0 // pred_region
    _
  $region77: #{gc_transformer_forward.1} parent=0 // pred_fallthru
    _
  // Predicated region
  $region78: #{gc_transformer_forward.1} parent=0 // pred_check
    _
  $region79: #{gc_transformer_forward.1} parent=0 // pred_check_branch
    %68 = sbr.rel (0) target = $region81
  $region80: #{gc_transformer_forward.1} parent=0 // pred_region
    _
  $region81: #{gc_transformer_forward.1} parent=0 // pred_fallthru
    _
  // Predicated region
  $region82: #{gc_transformer_forward.1} parent=0 // pred_check
    _
  $region83: #{gc_transformer_forward.1} parent=0 // pred_check_branch
    %70 = sbr.rel (0) target = $region85
  $region84: #{gc_transformer_forward.1} parent=0 // pred_region
    _
  $region85: #{gc_transformer_forward.1} parent=0 // pred_fallthru
    _
  // Predicated region
  $region86: #{gc_transformer_forward.1} parent=0 // pred_check
    _
  $region87: #{gc_transformer_forward.1} parent=0 // pred_check_branch
    %72 = sbr.rel (0) target = $region89
  $region88: #{gc_transformer_forward.1} parent=0 // pred_region
    _
  $region89: #{gc_transformer_forward.1} parent=0 // pred_fallthru
    _
  %v74 = vld [vmem:[%s0] sm:$0xff]
  %v75 = vld [vmem:[%s0 + $0x8] sm:$0xff]
  %v76 = vld [vmem:[%s0 + $0x10] sm:$0xff]
  %v77 = vld [vmem:[%s0 + $0x18] sm:$0xff]
  %v78 = vld [vmem:[%s0 + $0x20] sm:$0xff]
  %v79 = vld [vmem:[%s0 + $0x28] sm:$0xff]
  %v80 = vld [vmem:[%s0 + $0x30] sm:$0xff]
  %v81 = vld [vmem:[%s0 + $0x38] sm:$0xff]
  %v82 = vld [vmem:[%s0 + $0x40] sm:$0xff]
  %v83 = vld [vmem:[%s0 + $0x48] sm:$0xff]
  %v84 = vld [vmem:[%s0 + $0x50] sm:$0xff]
  %v85 = vld [vmem:[%s0 + $0x58] sm:$0xff]
  %v86 = vld [vmem:[%s1] sm:$0xff]
  %v87 = vld [vmem:[%s1 + $0x8] sm:$0xff]
  %v88 = vld [vmem:[%s1 + $0x10] sm:$0xff]
  %v89 = vld [vmem:[%s1 + $0x18] sm:$0xff]
  %v90 = vld [vmem:[%s1 + $0x20] sm:$0xff]
  %v91 = vld [vmem:[%s1 + $0x28] sm:$0xff]
  %v92 = vld [vmem:[%s1 + $0x30] sm:$0xff]
  %v93 = vld [vmem:[%s1 + $0x38] sm:$0xff]
  %v94 = vld [vmem:[%s1 + $0x40] sm:$0xff]
  %v95 = vld [vmem:[%s1 + $0x48] sm:$0xff]
  %v96 = vld [vmem:[%s1 + $0x50] sm:$0xff]
  %v97 = vld [vmem:[%s1 + $0x58] sm:$0xff]
  %v98 = vpack.c.bf16 %v87, %v86
  %v99 = vpack.c.bf16 %v89, %v88
  %v100 = vpack.c.bf16 %v91, %v90
  %v101 = vpack.c.bf16 %v93, %v92
  %v102 = vpack.c.bf16 %v95, %v94
  %v103 = vpack.c.bf16 %v97, %v96
  %v104 = vpack.c.bf16 %v75, %v74
  %v105 = vpack.c.bf16 %v77, %v76
  %v106 = vpack.c.bf16 %v79, %v78
  %v107 = vpack.c.bf16 %v81, %v80
  %v108 = vpack.c.bf16 %v83, %v82
  %v109 = vpack.c.bf16 %v85, %v84
  %vm110 = vcmask 785408
  %v112 = vsel %vm110, %v98, 0
  %v115 = vsel %vm110, %v99, 0
  %v118 = vsel %vm110, %v100, 0
  %v121 = vsel %vm110, %v101, 0
  %v124 = vsel %vm110, %v102, 0
  %v127 = vsel %vm110, %v103, 0
  %129 = vmatprep.subr.bf16.mxu0 0
  %130 = vmatpush1.bf16.msra.mxu0 0
  %131 = vmatprep.subr.bf16.mxu0 0
  %132 = vmatpush1.bf16.msra.mxu0 0
  %133 = vmatprep.subr.bf16.mxu0 0
  %134 = vmatpush1.bf16.msra.mxu0 %v109
  %135 = vmatprep.subr.bf16.mxu0 0
  %136 = vmatpush1.bf16.msra.mxu0 %v108
  %137 = vmatprep.subr.bf16.mxu0 0
  %138 = vmatpush1.bf16.msra.mxu0 %v107
  %139 = vmatprep.subr.bf16.mxu0 0
  %140 = vmatpush1.bf16.msra.mxu0 %v106
  %141 = vmatprep.subr.bf16.mxu0 0
  %142 = vmatpush1.bf16.msra.mxu0 %v105
  %143 = vmatprep.subr.bf16.mxu0 0
  %144 = vmatpush1.bf16.msra.mxu0 %v104
  %145 = vmatprep.subr.bf16.mxu0 0
  %146 = vmatpush2.bf16.msra.mxu0 0
  %147 = vmatprep.subr.bf16.mxu0 0
  %148 = vmatpush2.bf16.msra.mxu0 0
  %149 = vmatprep.subr.bf16.mxu0 0
  %150 = vmatpush2.bf16.msra.mxu0 0
  %151 = vmatprep.subr.bf16.mxu0 0
  %152 = vmatpush2.bf16.msra.mxu0 0
  %153 = vmatprep.subr.bf16.mxu0 0
  %154 = vmatpush2.bf16.msra.mxu0 0
  %155 = vmatprep.subr.bf16.mxu0 0
  %156 = vmatpush2.bf16.msra.mxu0 0
  %157 = vmatprep.subr.bf16.mxu0 0
  %158 = vmatpush2.bf16.msra.mxu0 0
  %159 = vmatprep.subr.bf16.mxu0 0
  %160 = vmatpush2.bf16.msra.mxu0 0
  %161 = vmatprep.mubr.bf16.mxu0 0
  %162 = vmatmul.mubr.bf16.gmra.mxu0 %v112
  %v163 = vpop.f32.mrf.mxu0
  %v164 = vadd.f32 0.0, %v163
  %v165 = vpop.f32.mrf.mxu0
  %v166 = vpop.f32.mrf.mxu0
  %v167 = vadd.f32 0.0, %v166
  %v168 = vpop.f32.mrf.mxu0
  %169 = vmatprep.mubr.bf16.mxu0 0
  %170 = vmatmul.mubr.bf16.gmra.mxu0 %v115
  %v171 = vpop.f32.mrf.mxu0
  %v172 = vadd.f32 0.0, %v171
  %v173 = vpop.f32.mrf.mxu0
  %v174 = vpop.f32.mrf.mxu0
  %v175 = vadd.f32 0.0, %v174
  %v176 = vpop.f32.mrf.mxu0
  %177 = vmatprep.mubr.bf16.mxu0 0
  %178 = vmatmul.mubr.bf16.gmra.mxu0 %v118
  %v179 = vpop.f32.mrf.mxu0
  %v180 = vadd.f32 0.0, %v179
  %v181 = vpop.f32.mrf.mxu0
  %v182 = vpop.f32.mrf.mxu0
  %v183 = vadd.f32 0.0, %v182
  %v184 = vpop.f32.mrf.mxu0
  %185 = vmatprep.mubr.bf16.mxu0 0
  %186 = vmatmul.mubr.bf16.gmra.mxu0 %v121
  %v187 = vpop.f32.mrf.mxu0
  %v188 = vadd.f32 0.0, %v187
  %v189 = vpop.f32.mrf.mxu0
  %v190 = vpop.f32.mrf.mxu0
  %v191 = vadd.f32 0.0, %v190
  %v192 = vpop.f32.mrf.mxu0
  %193 = vmatprep.mubr.bf16.mxu0 0
  %194 = vmatmul.mubr.bf16.gmra.mxu0 %v124
  %v195 = vpop.f32.mrf.mxu0
  %v196 = vadd.f32 0.0, %v195
  %v197 = vpop.f32.mrf.mxu0
  %v198 = vpop.f32.mrf.mxu0
  %v199 = vadd.f32 0.0, %v198
  %v200 = vpop.f32.mrf.mxu0
  %201 = vmatprep.mubr.bf16.mxu0 0
  %202 = vmatmul.mubr.bf16.gmra.mxu0 %v127
  %v203 = vpop.f32.mrf.mxu0
  %v204 = vadd.f32 0.0, %v203
  %v205 = vpop.f32.mrf.mxu0
  %v206 = vpop.f32.mrf.mxu0
  %v207 = vadd.f32 0.0, %v206
  %v208 = vpop.f32.mrf.mxu0
  %209 = vdwg.mxu0
  %222 = vrot.lane.b32.xlu0 %v164, 4
  %v223 = vpop.permute.xlu0 %222
  %224 = vrot.lane.b32.xlu0 %v167, 4
  %v225 = vpop.permute.xlu0 %224
  %226 = vrot.lane.b32.xlu0 %v172, 4
  %v227 = vpop.permute.xlu0 %226
  %228 = vrot.lane.b32.xlu0 %v175, 4
  %v229 = vpop.permute.xlu0 %228
  %230 = vrot.lane.b32.xlu0 %v180, 4
  %v231 = vpop.permute.xlu0 %230
  %232 = vrot.lane.b32.xlu0 %v183, 4
  %v233 = vpop.permute.xlu0 %232
  %234 = vrot.lane.b32.xlu0 %v188, 4
  %v235 = vpop.permute.xlu0 %234
  %236 = vrot.lane.b32.xlu0 %v191, 4
  %v237 = vpop.permute.xlu0 %236
  %238 = vrot.lane.b32.xlu0 %v196, 4
  %v239 = vpop.permute.xlu0 %238
  %240 = vrot.lane.b32.xlu0 %v199, 4
  %v241 = vpop.permute.xlu0 %240
  %242 = vrot.lane.b32.xlu0 %v204, 4
  %v243 = vpop.permute.xlu0 %242
  %244 = vrot.lane.b32.xlu0 %v207, 4
  %v245 = vpop.permute.xlu0 %244
  %vm258 = vcmask 31744
  %v259 = vsel %vm258, %v74, %v223
  %v260 = vsel %vm258, %v75, %v225
  %v261 = vsel %vm258, %v76, %v227
  %v262 = vsel %vm258, %v77, %v229
  %v263 = vsel %vm258, %v78, %v231
  %v264 = vsel %vm258, %v79, %v233
  %v265 = vsel %vm258, %v80, %v235
  %v266 = vsel %vm258, %v81, %v237
  %v267 = vsel %vm258, %v82, %v239
  %v268 = vsel %vm258, %v83, %v241
  %v269 = vsel %vm258, %v84, %v243
  %v270 = vsel %vm258, %v85, %v245
  %v271 = vld [vmem:[%s3] sm:$0xff]
  %v272 = vpack.c.bf16 %v260, %v259
  %v273 = vpack.c.bf16 %v262, %v261
  %v274 = vpack.c.bf16 %v264, %v263
  %v275 = vpack.c.bf16 %v266, %v265
  %v276 = vpack.c.bf16 %v268, %v267
  %v277 = vpack.c.bf16 %v270, %v269
  %v278 = vpack.c.bf16 %v271, %v271
  %v279 = vld [vmem:[%s4] sm:$0x1]
  %v281 = vlaneseq
  %v282 = vshrl.u32 %v281, 7
  %v283 = vsub.s32 0, %v282
  %v284 = vrot.slane %v279, %v283
  %vm286 = vcmask 64512
  %v288 = vsel %vm286, %v272, 0
  %v291 = vsel %vm286, %v273, 0
  %v294 = vsel %vm286, %v274, 0
  %v297 = vsel %vm286, %v275, 0
  %v300 = vsel %vm286, %v276, 0
  %v303 = vsel %vm286, %v277, 0
  %vm305 = vcmask 1043456
  %v307 = vsel %vm305, %v278, 0
  %309 = vmatprep.subr.bf16.mxu0 0
  %310 = vmatpush1.bf16.msra.mxu0 0
  %311 = vmatprep.subr.bf16.mxu0 0
  %312 = vmatpush1.bf16.msra.mxu0 0
  %313 = vmatprep.subr.bf16.mxu0 0
  %314 = vmatpush1.bf16.msra.mxu0 0
  %315 = vmatprep.subr.bf16.mxu0 0
  %316 = vmatpush1.bf16.msra.mxu0 0
  %317 = vmatprep.subr.bf16.mxu0 0
  %318 = vmatpush1.bf16.msra.mxu0 0
  %319 = vmatprep.subr.bf16.mxu0 0
  %320 = vmatpush1.bf16.msra.mxu0 0
  %321 = vmatprep.subr.bf16.mxu0 0
  %322 = vmatpush1.bf16.msra.mxu0 0
  %323 = vmatprep.subr.bf16.mxu0 0
  %324 = vmatpush1.bf16.msra.mxu0 %v307
  %325 = vmatprep.subr.bf16.mxu0 0
  %326 = vmatpush2.bf16.msra.mxu0 0
  %327 = vmatprep.subr.bf16.mxu0 0
  %328 = vmatpush2.bf16.msra.mxu0 0
  %329 = vmatprep.subr.bf16.mxu0 0
  %330 = vmatpush2.bf16.msra.mxu0 0
  %331 = vmatprep.subr.bf16.mxu0 0
  %332 = vmatpush2.bf16.msra.mxu0 0
  %333 = vmatprep.subr.bf16.mxu0 0
  %334 = vmatpush2.bf16.msra.mxu0 0
  %335 = vmatprep.subr.bf16.mxu0 0
  %336 = vmatpush2.bf16.msra.mxu0 0
  %337 = vmatprep.subr.bf16.mxu0 0
  %338 = vmatpush2.bf16.msra.mxu0 0
  %339 = vmatprep.subr.bf16.mxu0 0
  %340 = vmatpush2.bf16.msra.mxu0 0
  %341 = vmatprep.mubr.bf16.mxu0 0
  %342 = vmatmul.mubr.bf16.gmra.mxu0 %v288
  %v343 = vpop.f32.mrf.mxu0
  %v344 = vadd.f32 %v284, %v343
  %v345 = vpop.f32.mrf.mxu0
  %v346 = vpop.f32.mrf.mxu0
  %v347 = vadd.f32 %v284, %v346
  %v348 = vpop.f32.mrf.mxu0
  %349 = vmatprep.mubr.bf16.mxu0 0
  %350 = vmatmul.mubr.bf16.gmra.mxu0 %v291
  %v351 = vpop.f32.mrf.mxu0
  %v352 = vadd.f32 %v284, %v351
  %v353 = vpop.f32.mrf.mxu0
  %v354 = vpop.f32.mrf.mxu0
  %v355 = vadd.f32 %v284, %v354
  %v356 = vpop.f32.mrf.mxu0
  %357 = vmatprep.mubr.bf16.mxu0 0
  %358 = vmatmul.mubr.bf16.gmra.mxu0 %v294
  %v359 = vpop.f32.mrf.mxu0
  %v360 = vadd.f32 %v284, %v359
  %v361 = vpop.f32.mrf.mxu0
  %v362 = vpop.f32.mrf.mxu0
  %v363 = vadd.f32 %v284, %v362
  %v364 = vpop.f32.mrf.mxu0
  %365 = vmatprep.mubr.bf16.mxu0 0
  %366 = vmatmul.mubr.bf16.gmra.mxu0 %v297
  %v367 = vpop.f32.mrf.mxu0
  %v368 = vadd.f32 %v284, %v367
  %v369 = vpop.f32.mrf.mxu0
  %v370 = vpop.f32.mrf.mxu0
  %v371 = vadd.f32 %v284, %v370
  %v372 = vpop.f32.mrf.mxu0
  %373 = vmatprep.mubr.bf16.mxu0 0
  %374 = vmatmul.mubr.bf16.gmra.mxu0 %v300
  %v375 = vpop.f32.mrf.mxu0
  %v376 = vadd.f32 %v284, %v375
  %v377 = vpop.f32.mrf.mxu0
  %v378 = vpop.f32.mrf.mxu0
  %v379 = vadd.f32 %v284, %v378
  %v380 = vpop.f32.mrf.mxu0
  %381 = vmatprep.mubr.bf16.mxu0 0
  %382 = vmatmul.mubr.bf16.gmra.mxu0 %v303
  %v383 = vpop.f32.mrf.mxu0
  %v384 = vadd.f32 %v284, %v383
  %v385 = vpop.f32.mrf.mxu0
  %v386 = vpop.f32.mrf.mxu0
  %v387 = vadd.f32 %v284, %v386
  %v388 = vpop.f32.mrf.mxu0
  %389 = vdwg.mxu0
  %v390 = vxor.u32 %v344, 2147483648
  %v391 = vxor.u32 %v347, 2147483648
  %v392 = vxor.u32 %v352, 2147483648
  %v393 = vxor.u32 %v355, 2147483648
  %v394 = vxor.u32 %v360, 2147483648
  %v395 = vxor.u32 %v363, 2147483648
  %v396 = vxor.u32 %v368, 2147483648
  %v397 = vxor.u32 %v371, 2147483648
  %v398 = vxor.u32 %v376, 2147483648
  %v399 = vxor.u32 %v379, 2147483648
  %v400 = vxor.u32 %v384, 2147483648
  %v401 = vxor.u32 %v387, 2147483648
  %v402 = vmul.f32 %v390, 1.442695
  %v403 = vpow.pop %v402
  %v404 = vmul.f32 %v391, 1.442695
  %v405 = vpow.pop %v404
  %v406 = vmul.f32 %v392, 1.442695
  %v407 = vpow.pop %v406
  %v408 = vmul.f32 %v393, 1.442695
  %v409 = vpow.pop %v408
  %v410 = vmul.f32 %v394, 1.442695
  %v411 = vpow.pop %v410
  %v412 = vmul.f32 %v395, 1.442695
  %v413 = vpow.pop %v412
  %v414 = vmul.f32 %v396, 1.442695
  %v415 = vpow.pop %v414
  %v416 = vmul.f32 %v397, 1.442695
  %v417 = vpow.pop %v416
  %v418 = vmul.f32 %v398, 1.442695
  %v419 = vpow.pop %v418
  %v420 = vmul.f32 %v399, 1.442695
  %v421 = vpow.pop %v420
  %v422 = vmul.f32 %v400, 1.442695
  %v423 = vpow.pop %v422
  %v424 = vmul.f32 %v401, 1.442695
  %v425 = vpow.pop %v424
  %v426 = vadd.f32 %v403, 1.0
  %v427 = vadd.f32 %v405, 1.0
  %v428 = vadd.f32 %v407, 1.0
  %v429 = vadd.f32 %v409, 1.0
  %v430 = vadd.f32 %v411, 1.0
  %v431 = vadd.f32 %v413, 1.0
  %v432 = vadd.f32 %v415, 1.0
  %v433 = vadd.f32 %v417, 1.0
  %v434 = vadd.f32 %v419, 1.0
  %v435 = vadd.f32 %v421, 1.0
  %v436 = vadd.f32 %v423, 1.0
  %v437 = vadd.f32 %v425, 1.0
  %v438 = vrcp.pop %v426
  %v439 = vmul.f32 1.0, %v438
  %v440 = vrcp.pop %v427
  %v441 = vmul.f32 1.0, %v440
  %v442 = vrcp.pop %v428
  %v443 = vmul.f32 1.0, %v442
  %v444 = vrcp.pop %v429
  %v445 = vmul.f32 1.0, %v444
  %v446 = vrcp.pop %v430
  %v447 = vmul.f32 1.0, %v446
  %v448 = vrcp.pop %v431
  %v449 = vmul.f32 1.0, %v448
  %v450 = vrcp.pop %v432
  %v451 = vmul.f32 1.0, %v450
  %v452 = vrcp.pop %v433
  %v453 = vmul.f32 1.0, %v452
  %v454 = vrcp.pop %v434
  %v455 = vmul.f32 1.0, %v454
  %v456 = vrcp.pop %v435
  %v457 = vmul.f32 1.0, %v456
  %v458 = vrcp.pop %v436
  %v459 = vmul.f32 1.0, %v458
  %v460 = vrcp.pop %v437
  %v461 = vmul.f32 1.0, %v460
  %474 = vrot.lane.b32.xlu0 %v74, 125
  %v475 = vpop.permute.xlu0 %474
  %476 = vrot.lane.b32.xlu0 %v75, 125
  %v477 = vpop.permute.xlu0 %476
  %478 = vrot.lane.b32.xlu0 %v76, 125
  %v479 = vpop.permute.xlu0 %478
  %480 = vrot.lane.b32.xlu0 %v77, 125
  %v481 = vpop.permute.xlu0 %480
  %482 = vrot.lane.b32.xlu0 %v78, 125
  %v483 = vpop.permute.xlu0 %482
  %484 = vrot.lane.b32.xlu0 %v79, 125
  %v485 = vpop.permute.xlu0 %484
  %486 = vrot.lane.b32.xlu0 %v80, 125
  %v487 = vpop.permute.xlu0 %486
  %488 = vrot.lane.b32.xlu0 %v81, 125
  %v489 = vpop.permute.xlu0 %488
  %490 = vrot.lane.b32.xlu0 %v82, 125
  %v491 = vpop.permute.xlu0 %490
  %492 = vrot.lane.b32.xlu0 %v83, 125
  %v493 = vpop.permute.xlu0 %492
  %494 = vrot.lane.b32.xlu0 %v84, 125
  %v495 = vpop.permute.xlu0 %494
  %496 = vrot.lane.b32.xlu0 %v85, 125
  %v497 = vpop.permute.xlu0 %496
  %522 = vrot.lane.b32.xlu0 %v439, 4
  %v523 = vpop.permute.xlu0 %522
  %524 = vrot.lane.b32.xlu0 %v441, 4
  %v525 = vpop.permute.xlu0 %524
  %526 = vrot.lane.b32.xlu0 %v443, 4
  %v527 = vpop.permute.xlu0 %526
  %528 = vrot.lane.b32.xlu0 %v445, 4
  %v529 = vpop.permute.xlu0 %528
  %530 = vrot.lane.b32.xlu0 %v447, 4
  %v531 = vpop.permute.xlu0 %530
  %532 = vrot.lane.b32.xlu0 %v449, 4
  %v533 = vpop.permute.xlu0 %532
  %534 = vrot.lane.b32.xlu0 %v451, 4
  %v535 = vpop.permute.xlu0 %534
  %536 = vrot.lane.b32.xlu0 %v453, 4
  %v537 = vpop.permute.xlu0 %536
  %538 = vrot.lane.b32.xlu0 %v455, 4
  %v539 = vpop.permute.xlu0 %538
  %540 = vrot.lane.b32.xlu0 %v457, 4
  %v541 = vpop.permute.xlu0 %540
  %542 = vrot.lane.b32.xlu0 %v459, 4
  %v543 = vpop.permute.xlu0 %542
  %544 = vrot.lane.b32.xlu0 %v461, 4
  %v545 = vpop.permute.xlu0 %544
  %vm558 = vcmask 7168
  %v559 = vsel %vm558, %v74, %v475
  %v560 = vsel %vm558, %v75, %v477
  %v561 = vsel %vm558, %v76, %v479
  %v562 = vsel %vm558, %v77, %v481
  %v563 = vsel %vm558, %v78, %v483
  %v564 = vsel %vm558, %v79, %v485
  %v565 = vsel %vm558, %v80, %v487
  %v566 = vsel %vm558, %v81, %v489
  %v567 = vsel %vm558, %v82, %v491
  %v568 = vsel %vm558, %v83, %v493
  %v569 = vsel %vm558, %v84, %v495
  %v570 = vsel %vm558, %v85, %v497
  %v571 = vsel %vm258, %v559, %v523
  %v572 = vsel %vm258, %v560, %v525
  %v573 = vsel %vm258, %v561, %v527
  %v574 = vsel %vm258, %v562, %v529
  %v575 = vsel %vm258, %v563, %v531
  %v576 = vsel %vm258, %v564, %v533
  %v577 = vsel %vm258, %v565, %v535
  %v578 = vsel %vm258, %v566, %v537
  %v579 = vsel %vm258, %v567, %v539
  %v580 = vsel %vm258, %v568, %v541
  %v581 = vsel %vm258, %v569, %v543
  %v582 = vsel %vm258, %v570, %v545
  %v583 = vld [vmem:[%s5] sm:$0xff]
  %v584 = vld [vmem:[%s5 + $0x8] sm:$0xff]
  %v585 = vld [vmem:[%s5 + $0x10] sm:$0x3]
  %v586 = vpack.c.bf16 %v572, %v571
  %v587 = vpack.c.bf16 %v574, %v573
  %v588 = vpack.c.bf16 %v576, %v575
  %v589 = vpack.c.bf16 %v578, %v577
  %v590 = vpack.c.bf16 %v580, %v579
  %v591 = vpack.c.bf16 %v582, %v581
  %v592 = vpack.c.bf16 %v584, %v583
  %v593 = vpack.c.bf16 %v585, %v585
  %v594 = vld [vmem:[%s6] sm:$0x1]
  %v596 = vlaneseq
  %v597 = vshrl.u32 %v596, 7
  %v598 = vsub.s32 0, %v597
  %v599 = vrot.slane %v594, %v598
  %vm601 = vcmask 146432
  %v603 = vsel %vm601, %v586, 0
  %v606 = vsel %vm601, %v587, 0
  %v609 = vsel %vm601, %v588, 0
  %v612 = vsel %vm601, %v589, 0
  %v615 = vsel %vm601, %v590, 0
  %v618 = vsel %vm601, %v591, 0
  %vm620 = vcmask 1040384
  %v622 = vsel %vm620, %v593, 0
  %624 = vmatprep.subr.bf16.mxu0 0
  %625 = vmatpush1.bf16.msra.mxu0 0
  %626 = vmatprep.subr.bf16.mxu0 0
  %627 = vmatpush1.bf16.msra.mxu0 0
  %628 = vmatprep.subr.bf16.mxu0 0
  %629 = vmatpush1.bf16.msra.mxu0 0
  %630 = vmatprep.subr.bf16.mxu0 0
  %631 = vmatpush1.bf16.msra.mxu0 0
  %632 = vmatprep.subr.bf16.mxu0 0
  %633 = vmatpush1.bf16.msra.mxu0 0
  %634 = vmatprep.subr.bf16.mxu0 0
  %635 = vmatpush1.bf16.msra.mxu0 0
  %636 = vmatprep.subr.bf16.mxu0 0
  %637 = vmatpush1.bf16.msra.mxu0 %v622
  %638 = vmatprep.subr.bf16.mxu0 0
  %639 = vmatpush1.bf16.msra.mxu0 %v592
  %640 = vmatprep.subr.bf16.mxu0 0
  %641 = vmatpush2.bf16.msra.mxu0 0
  %642 = vmatprep.subr.bf16.mxu0 0
  %643 = vmatpush2.bf16.msra.mxu0 0
  %644 = vmatprep.subr.bf16.mxu0 0
  %645 = vmatpush2.bf16.msra.mxu0 0
  %646 = vmatprep.subr.bf16.mxu0 0
  %647 = vmatpush2.bf16.msra.mxu0 0
  %648 = vmatprep.subr.bf16.mxu0 0
  %649 = vmatpush2.bf16.msra.mxu0 0
  %650 = vmatprep.subr.bf16.mxu0 0
  %651 = vmatpush2.bf16.msra.mxu0 0
  %652 = vmatprep.subr.bf16.mxu0 0
  %653 = vmatpush2.bf16.msra.mxu0 0
  %654 = vmatprep.subr.bf16.mxu0 0
  %655 = vmatpush2.bf16.msra.mxu0 0
  %656 = vmatprep.mubr.bf16.mxu0 0
  %657 = vmatmul.mubr.bf16.gmra.mxu0 %v603
  %v658 = vpop.f32.mrf.mxu0
  %v659 = vadd.f32 %v599, %v658
  %v660 = vpop.f32.mrf.mxu0
  %v661 = vpop.f32.mrf.mxu0
  %v662 = vadd.f32 %v599, %v661
  %v663 = vpop.f32.mrf.mxu0
  %664 = vmatprep.mubr.bf16.mxu0 0
  %665 = vmatmul.mubr.bf16.gmra.mxu0 %v606
  %v666 = vpop.f32.mrf.mxu0
  %v667 = vadd.f32 %v599, %v666
  %v668 = vpop.f32.mrf.mxu0
  %v669 = vpop.f32.mrf.mxu0
  %v670 = vadd.f32 %v599, %v669
  %v671 = vpop.f32.mrf.mxu0
  %672 = vmatprep.mubr.bf16.mxu0 0
  %673 = vmatmul.mubr.bf16.gmra.mxu0 %v609
  %v674 = vpop.f32.mrf.mxu0
  %v675 = vadd.f32 %v599, %v674
  %v676 = vpop.f32.mrf.mxu0
  %v677 = vpop.f32.mrf.mxu0
  %v678 = vadd.f32 %v599, %v677
  %v679 = vpop.f32.mrf.mxu0
  %680 = vmatprep.mubr.bf16.mxu0 0
  %681 = vmatmul.mubr.bf16.gmra.mxu0 %v612
  %v682 = vpop.f32.mrf.mxu0
  %v683 = vadd.f32 %v599, %v682
  %v684 = vpop.f32.mrf.mxu0
  %v685 = vpop.f32.mrf.mxu0
  %v686 = vadd.f32 %v599, %v685
  %v687 = vpop.f32.mrf.mxu0
  %688 = vmatprep.mubr.bf16.mxu0 0
  %689 = vmatmul.mubr.bf16.gmra.mxu0 %v615
  %v690 = vpop.f32.mrf.mxu0
  %v691 = vadd.f32 %v599, %v690
  %v692 = vpop.f32.mrf.mxu0
  %v693 = vpop.f32.mrf.mxu0
  %v694 = vadd.f32 %v599, %v693
  %v695 = vpop.f32.mrf.mxu0
  %696 = vmatprep.mubr.bf16.mxu0 0
  %697 = vmatmul.mubr.bf16.gmra.mxu0 %v618
  %v698 = vpop.f32.mrf.mxu0
  %v699 = vadd.f32 %v599, %v698
  %v700 = vpop.f32.mrf.mxu0
  %v701 = vpop.f32.mrf.mxu0
  %v702 = vadd.f32 %v599, %v701
  %v703 = vpop.f32.mrf.mxu0
  %704 = vdwg.mxu0
  %v705 = vld [vmem:[%s7] sm:$0xff]
  %v706 = vld [vmem:[%s7 + $0x8] sm:$0xff]
  %v707 = vld [vmem:[%s7 + $0x10] sm:$0xff]
  %v708 = vld [vmem:[%s7 + $0x18] sm:$0xff]
  %v709 = vld [vmem:[%s7 + $0x20] sm:$0xff]
  %v710 = vld [vmem:[%s7 + $0x28] sm:$0xff]
  %v711 = vld [vmem:[%s7 + $0x30] sm:$0xff]
  %v712 = vld [vmem:[%s7 + $0x38] sm:$0xff]
  %v713 = vld [vmem:[%s7 + $0x40] sm:$0xff]
  %v714 = vld [vmem:[%s7 + $0x48] sm:$0xff]
  %v715 = vld [vmem:[%s7 + $0x50] sm:$0xff]
  %v716 = vld [vmem:[%s7 + $0x58] sm:$0xff]
  %v717 = vadd.f32 %v659, %v705
  %v718 = vadd.f32 %v662, %v706
  %v719 = vadd.f32 %v667, %v707
  %v720 = vadd.f32 %v670, %v708
  %v721 = vadd.f32 %v675, %v709
  %v722 = vadd.f32 %v678, %v710
  %v723 = vadd.f32 %v683, %v711
  %v724 = vadd.f32 %v686, %v712
  %v725 = vadd.f32 %v691, %v713
  %v726 = vadd.f32 %v694, %v714
  %v727 = vadd.f32 %v699, %v715
  %v728 = vadd.f32 %v702, %v716
  %v729 = vld [vmem:[%s2] sm:$0xff]
  %v730 = vld [vmem:[%s2 + $0x8] sm:$0xff]
  %v731 = vld [vmem:[%s2 + $0x10] sm:$0xff]
  %v732 = vld [vmem:[%s2 + $0x18] sm:$0xff]
  %v733 = vld [vmem:[%s2 + $0x20] sm:$0xff]
  %v734 = vld [vmem:[%s2 + $0x28] sm:$0xff]
  %v735 = vld [vmem:[%s2 + $0x30] sm:$0xff]
  %v736 = vld [vmem:[%s2 + $0x38] sm:$0xff]
  %v737 = vld [vmem:[%s2 + $0x40] sm:$0xff]
  %v738 = vld [vmem:[%s2 + $0x48] sm:$0xff]
  %v739 = vld [vmem:[%s2 + $0x50] sm:$0xff]
  %v740 = vld [vmem:[%s2 + $0x58] sm:$0xff]
  %v741 = vld [vmem:[%s8] sm:$0xff]
  %v742 = vld [vmem:[%s8 + $0x8] sm:$0xff]
  %v743 = vld [vmem:[%s8 + $0x10] sm:$0xff]
  %v744 = vld [vmem:[%s8 + $0x18] sm:$0xff]
  %v745 = vld [vmem:[%s8 + $0x20] sm:$0xf]
  %v746 = vpack.c.bf16 %v718, %v717
  %v747 = vpack.c.bf16 %v720, %v719
  %v748 = vpack.c.bf16 %v722, %v721
  %v749 = vpack.c.bf16 %v724, %v723
  %v750 = vpack.c.bf16 %v726, %v725
  %v751 = vpack.c.bf16 %v728, %v727
  %v752 = vpack.c.bf16 %v742, %v741
  %v753 = vpack.c.bf16 %v744, %v743
  %v754 = vpack.c.bf16 %v745, %v745
  %v755 = vld [vmem:[%s9] sm:$0x1]
  %v757 = vlaneseq
  %v758 = vshrl.u32 %v757, 7
  %v759 = vsub.s32 0, %v758
  %v760 = vrot.slane %v755, %v759
  %vm762 = vcmask 293888
  %v764 = vsel %vm762, %v746, 0
  %v767 = vsel %vm762, %v747, 0
  %v770 = vsel %vm762, %v748, 0
  %v773 = vsel %vm762, %v749, 0
  %v776 = vsel %vm762, %v750, 0
  %v779 = vsel %vm762, %v751, 0
  %vm781 = vcmask 1041408
  %v783 = vsel %vm781, %v754, 0
  %785 = vmatprep.subr.bf16.mxu0 0
  %786 = vmatpush1.bf16.msra.mxu0 0
  %787 = vmatprep.subr.bf16.mxu0 0
  %788 = vmatpush1.bf16.msra.mxu0 0
  %789 = vmatprep.subr.bf16.mxu0 0
  %790 = vmatpush1.bf16.msra.mxu0 0
  %791 = vmatprep.subr.bf16.mxu0 0
  %792 = vmatpush1.bf16.msra.mxu0 0
  %793 = vmatprep.subr.bf16.mxu0 0
  %794 = vmatpush1.bf16.msra.mxu0 0
  %795 = vmatprep.subr.bf16.mxu0 0
  %796 = vmatpush1.bf16.msra.mxu0 %v783
  %797 = vmatprep.subr.bf16.mxu0 0
  %798 = vmatpush1.bf16.msra.mxu0 %v753
  %799 = vmatprep.subr.bf16.mxu0 0
  %800 = vmatpush1.bf16.msra.mxu0 %v752
  %801 = vmatprep.subr.bf16.mxu0 0
  %802 = vmatpush2.bf16.msra.mxu0 0
  %803 = vmatprep.subr.bf16.mxu0 0
  %804 = vmatpush2.bf16.msra.mxu0 0
  %805 = vmatprep.subr.bf16.mxu0 0
  %806 = vmatpush2.bf16.msra.mxu0 0
  %807 = vmatprep.subr.bf16.mxu0 0
  %808 = vmatpush2.bf16.msra.mxu0 0
  %809 = vmatprep.subr.bf16.mxu0 0
  %810 = vmatpush2.bf16.msra.mxu0 0
  %811 = vmatprep.subr.bf16.mxu0 0
  %812 = vmatpush2.bf16.msra.mxu0 0
  %813 = vmatprep.subr.bf16.mxu0 0
  %814 = vmatpush2.bf16.msra.mxu0 0
  %815 = vmatprep.subr.bf16.mxu0 0
  %816 = vmatpush2.bf16.msra.mxu0 0
  %817 = vmatprep.mubr.bf16.mxu0 0
  %818 = vmatmul.mubr.bf16.gmra.mxu0 %v764
  %v819 = vpop.f32.mrf.mxu0
  %v820 = vadd.f32 %v760, %v819
  %v821 = vpop.f32.mrf.mxu0
  %v822 = vpop.f32.mrf.mxu0
  %v823 = vadd.f32 %v760, %v822
  %v824 = vpop.f32.mrf.mxu0
  %825 = vmatprep.mubr.bf16.mxu0 0
  %826 = vmatmul.mubr.bf16.gmra.mxu0 %v767
  %v827 = vpop.f32.mrf.mxu0
  %v828 = vadd.f32 %v760, %v827
  %v829 = vpop.f32.mrf.mxu0
  %v830 = vpop.f32.mrf.mxu0
  %v831 = vadd.f32 %v760, %v830
  %v832 = vpop.f32.mrf.mxu0
  %833 = vmatprep.mubr.bf16.mxu0 0
  %834 = vmatmul.mubr.bf16.gmra.mxu0 %v770
  %v835 = vpop.f32.mrf.mxu0
  %v836 = vadd.f32 %v760, %v835
  %v837 = vpop.f32.mrf.mxu0
  %v838 = vpop.f32.mrf.mxu0
  %v839 = vadd.f32 %v760, %v838
  %v840 = vpop.f32.mrf.mxu0
  %841 = vmatprep.mubr.bf16.mxu0 0
  %842 = vmatmul.mubr.bf16.gmra.mxu0 %v773
  %v843 = vpop.f32.mrf.mxu0
  %v844 = vadd.f32 %v760, %v843
  %v845 = vpop.f32.mrf.mxu0
  %v846 = vpop.f32.mrf.mxu0
  %v847 = vadd.f32 %v760, %v846
  %v848 = vpop.f32.mrf.mxu0
  %849 = vmatprep.mubr.bf16.mxu0 0
  %850 = vmatmul.mubr.bf16.gmra.mxu0 %v776
  %v851 = vpop.f32.mrf.mxu0
  %v852 = vadd.f32 %v760, %v851
  %v853 = vpop.f32.mrf.mxu0
  %v854 = vpop.f32.mrf.mxu0
  %v855 = vadd.f32 %v760, %v854
  %v856 = vpop.f32.mrf.mxu0
  %857 = vmatprep.mubr.bf16.mxu0 0
  %858 = vmatmul.mubr.bf16.gmra.mxu0 %v779
  %v859 = vpop.f32.mrf.mxu0
  %v860 = vadd.f32 %v760, %v859
  %v861 = vpop.f32.mrf.mxu0
  %v862 = vpop.f32.mrf.mxu0
  %v863 = vadd.f32 %v760, %v862
  %v864 = vpop.f32.mrf.mxu0
  %865 = vdwg.mxu0
  %v866 = vpack.c.bf16 %v823, %v820
  %v867 = vpack.c.bf16 %v831, %v828
  %v868 = vpack.c.bf16 %v839, %v836
  %v869 = vpack.c.bf16 %v847, %v844
  %v870 = vpack.c.bf16 %v855, %v852
  %v871 = vpack.c.bf16 %v863, %v860
  %878 = vrot.lane.b32.xlu0 %v866, 92
  %v879 = vpop.permute.xlu0 %878
  %880 = vrot.lane.b32.xlu0 %v867, 92
  %v881 = vpop.permute.xlu0 %880
  %882 = vrot.lane.b32.xlu0 %v868, 92
  %v883 = vpop.permute.xlu0 %882
  %884 = vrot.lane.b32.xlu0 %v869, 92
  %v885 = vpop.permute.xlu0 %884
  %886 = vrot.lane.b32.xlu0 %v870, 92
  %v887 = vpop.permute.xlu0 %886
  %888 = vrot.lane.b32.xlu0 %v871, 92
  %v889 = vpop.permute.xlu0 %888
  %v891 = vsel %vm601, %v866, 0
  %v894 = vsel %vm601, %v867, 0
  %v897 = vsel %vm601, %v868, 0
  %v900 = vsel %vm601, %v869, 0
  %v903 = vsel %vm601, %v870, 0
  %v906 = vsel %vm601, %v871, 0
  %v909 = vsel %vm601, %v879, 0
  %v912 = vsel %vm601, %v881, 0
  %v915 = vsel %vm601, %v883, 0
  %v918 = vsel %vm601, %v885, 0
  %v921 = vsel %vm601, %v887, 0
  %v924 = vsel %vm601, %v889, 0
  %926 = vmatprep.subr.bf16.mxu0 0
  %927 = vmatpush1.bf16.xpose.msra.mxu0 0
  %928 = vmatprep.subr.bf16.mxu0 0
  %929 = vmatpush1.bf16.xpose.msra.mxu0 0
  %930 = vmatprep.subr.bf16.mxu0 0
  %931 = vmatpush1.bf16.xpose.msra.mxu0 %v924
  %932 = vmatprep.subr.bf16.mxu0 0
  %933 = vmatpush1.bf16.xpose.msra.mxu0 %v921
  %934 = vmatprep.subr.bf16.mxu0 0
  %935 = vmatpush1.bf16.xpose.msra.mxu0 %v918
  %936 = vmatprep.subr.bf16.mxu0 0
  %937 = vmatpush1.bf16.xpose.msra.mxu0 %v915
  %938 = vmatprep.subr.bf16.mxu0 0
  %939 = vmatpush1.bf16.xpose.msra.mxu0 %v912
  %940 = vmatprep.subr.bf16.mxu0 0
  %941 = vmatpush1.bf16.xpose.msra.mxu0 %v909
  %942 = vmatprep.subr.bf16.mxu0 0
  %943 = vmatpush2.bf16.xpose.msra.mxu0 0
  %944 = vmatprep.subr.bf16.mxu0 0
  %945 = vmatpush2.bf16.xpose.msra.mxu0 0
  %946 = vmatprep.subr.bf16.mxu0 0
  %947 = vmatpush2.bf16.xpose.msra.mxu0 0
  %948 = vmatprep.subr.bf16.mxu0 0
  %949 = vmatpush2.bf16.xpose.msra.mxu0 0
  %950 = vmatprep.subr.bf16.mxu0 0
  %951 = vmatpush2.bf16.xpose.msra.mxu0 0
  %952 = vmatprep.subr.bf16.mxu0 0
  %953 = vmatpush2.bf16.xpose.msra.mxu0 0
  %954 = vmatprep.subr.bf16.mxu0 0
  %955 = vmatpush2.bf16.xpose.msra.mxu0 0
  %956 = vmatprep.subr.bf16.mxu0 0
  %957 = vmatpush2.bf16.xpose.msra.mxu0 0
  %958 = vmatprep.mubr.bf16.mxu0 0
  %959 = vmatmul.mubr.bf16.gmra.mxu0 %v891
  %v960 = vpop.f32.mrf.mxu0
  %v961 = vadd.f32 0.0, %v960
  %v962 = vpop.f32.mrf.mxu0
  %v963 = vpop.f32.mrf.mxu0
  %v964 = vadd.f32 0.0, %v963
  %v965 = vpop.f32.mrf.mxu0
  %966 = vmatprep.mubr.bf16.mxu0 0
  %967 = vmatmul.mubr.bf16.gmra.mxu0 %v894
  %v968 = vpop.f32.mrf.mxu0
  %v969 = vadd.f32 0.0, %v968
  %v970 = vpop.f32.mrf.mxu0
  %v971 = vpop.f32.mrf.mxu0
  %v972 = vadd.f32 0.0, %v971
  %v973 = vpop.f32.mrf.mxu0
  %974 = vmatprep.mubr.bf16.mxu0 0
  %975 = vmatmul.mubr.bf16.gmra.mxu0 %v897
  %v976 = vpop.f32.mrf.mxu0
  %v977 = vadd.f32 0.0, %v976
  %v978 = vpop.f32.mrf.mxu0
  %v979 = vpop.f32.mrf.mxu0
  %v980 = vadd.f32 0.0, %v979
  %v981 = vpop.f32.mrf.mxu0
  %982 = vmatprep.mubr.bf16.mxu0 0
  %983 = vmatmul.mubr.bf16.gmra.mxu0 %v900
  %v984 = vpop.f32.mrf.mxu0
  %v985 = vadd.f32 0.0, %v984
  %v986 = vpop.f32.mrf.mxu0
  %v987 = vpop.f32.mrf.mxu0
  %v988 = vadd.f32 0.0, %v987
  %v989 = vpop.f32.mrf.mxu0
  %990 = vmatprep.mubr.bf16.mxu0 0
  %991 = vmatmul.mubr.bf16.gmra.mxu0 %v903
  %v992 = vpop.f32.mrf.mxu0
  %v993 = vadd.f32 0.0, %v992
  %v994 = vpop.f32.mrf.mxu0
  %v995 = vpop.f32.mrf.mxu0
  %v996 = vadd.f32 0.0, %v995
  %v997 = vpop.f32.mrf.mxu0
  %998 = vmatprep.mubr.bf16.mxu0 0
  %999 = vmatmul.mubr.bf16.gmra.mxu0 %v906
  %v1000 = vpop.f32.mrf.mxu0
  %v1001 = vadd.f32 0.0, %v1000
  %v1002 = vpop.f32.mrf.mxu0
  %v1003 = vpop.f32.mrf.mxu0
  %v1004 = vadd.f32 0.0, %v1003
  %v1005 = vpop.f32.mrf.mxu0
  %1006 = vdwg.mxu0
  %v1007 = vmul.f32 %v961, 0.23570226
  %v1008 = vmul.f32 %v964, 0.23570226
  %v1009 = vmul.f32 %v969, 0.23570226
  %v1010 = vmul.f32 %v972, 0.23570226
  %v1011 = vmul.f32 %v977, 0.23570226
  %v1012 = vmul.f32 %v980, 0.23570226
  %v1013 = vmul.f32 %v985, 0.23570226
  %v1014 = vmul.f32 %v988, 0.23570226
  %v1015 = vmul.f32 %v993, 0.23570226
  %v1016 = vmul.f32 %v996, 0.23570226
  %v1017 = vmul.f32 %v1001, 0.23570226
  %v1018 = vmul.f32 %v1004, 0.23570226
  %v1019 = vadd.f32 %v1007, %v729
  %v1020 = vadd.f32 %v1008, %v730
  %v1021 = vadd.f32 %v1009, %v731
  %v1022 = vadd.f32 %v1010, %v732
  %v1023 = vadd.f32 %v1011, %v733
  %v1024 = vadd.f32 %v1012, %v734
  %v1025 = vadd.f32 %v1013, %v735
  %v1026 = vadd.f32 %v1014, %v736
  %v1027 = vadd.f32 %v1015, %v737
  %v1028 = vadd.f32 %v1016, %v738
  %v1029 = vadd.f32 %v1017, %v739
  %v1030 = vadd.f32 %v1018, %v740
  %v1031 = vsel %vm110, %v1019, -inf
  %1032 = vmax.xlane.f32.xlu0 %v1031
  %v1033 = vpop.xlane.xlu0 %1032
  %v1034 = vsel %vm110, %v1020, -inf
  %1035 = vmax.xlane.f32.xlu0 %v1034
  %v1036 = vpop.xlane.xlu0 %1035
  %v1037 = vsel %vm110, %v1021, -inf
  %1038 = vmax.xlane.f32.xlu0 %v1037
  %v1039 = vpop.xlane.xlu0 %1038
  %v1040 = vsel %vm110, %v1022, -inf
  %1041 = vmax.xlane.f32.xlu0 %v1040
  %v1042 = vpop.xlane.xlu0 %1041
  %v1043 = vsel %vm110, %v1023, -inf
  %1044 = vmax.xlane.f32.xlu0 %v1043
  %v1045 = vpop.xlane.xlu0 %1044
  %v1046 = vsel %vm110, %v1024, -inf
  %1047 = vmax.xlane.f32.xlu0 %v1046
  %v1048 = vpop.xlane.xlu0 %1047
  %v1049 = vsel %vm110, %v1025, -inf
  %1050 = vmax.xlane.f32.xlu0 %v1049
  %v1051 = vpop.xlane.xlu0 %1050
  %v1052 = vsel %vm110, %v1026, -inf
  %1053 = vmax.xlane.f32.xlu0 %v1052
  %v1054 = vpop.xlane.xlu0 %1053
  %v1055 = vsel %vm110, %v1027, -inf
  %1056 = vmax.xlane.f32.xlu0 %v1055
  %v1057 = vpop.xlane.xlu0 %1056
  %v1058 = vsel %vm110, %v1028, -inf
  %1059 = vmax.xlane.f32.xlu0 %v1058
  %v1060 = vpop.xlane.xlu0 %1059
  %v1061 = vsel %vm110, %v1029, -inf
  %1062 = vmax.xlane.f32.xlu0 %v1061
  %v1063 = vpop.xlane.xlu0 %1062
  %v1064 = vsel %vm110, %v1030, -inf
  %1065 = vmax.xlane.f32.xlu0 %v1064
  %v1066 = vpop.xlane.xlu0 %1065
  %v1067 = vsub.f32 %v1019, %v1033
  %v1068 = vsub.f32 %v1020, %v1036
  %v1069 = vsub.f32 %v1021, %v1039
  %v1070 = vsub.f32 %v1022, %v1042
  %v1071 = vsub.f32 %v1023, %v1045
  %v1072 = vsub.f32 %v1024, %v1048
  %v1073 = vsub.f32 %v1025, %v1051
  %v1074 = vsub.f32 %v1026, %v1054
  %v1075 = vsub.f32 %v1027, %v1057
  %v1076 = vsub.f32 %v1028, %v1060
  %v1077 = vsub.f32 %v1029, %v1063
  %v1078 = vsub.f32 %v1030, %v1066
  %v1079 = vmul.f32 %v1067, 1.442695
  %v1080 = vpow.pop %v1079
  %v1081 = vmul.f32 %v1068, 1.442695
  %v1082 = vpow.pop %v1081
  %v1083 = vmul.f32 %v1069, 1.442695
  %v1084 = vpow.pop %v1083
  %v1085 = vmul.f32 %v1070, 1.442695
  %v1086 = vpow.pop %v1085
  %v1087 = vmul.f32 %v1071, 1.442695
  %v1088 = vpow.pop %v1087
  %v1089 = vmul.f32 %v1072, 1.442695
  %v1090 = vpow.pop %v1089
  %v1091 = vmul.f32 %v1073, 1.442695
  %v1092 = vpow.pop %v1091
  %v1093 = vmul.f32 %v1074, 1.442695
  %v1094 = vpow.pop %v1093
  %v1095 = vmul.f32 %v1075, 1.442695
  %v1096 = vpow.pop %v1095
  %v1097 = vmul.f32 %v1076, 1.442695
  %v1098 = vpow.pop %v1097
  %v1099 = vmul.f32 %v1077, 1.442695
  %v1100 = vpow.pop %v1099
  %v1101 = vmul.f32 %v1078, 1.442695
  %v1102 = vpow.pop %v1101
  %v1103 = vsel %vm110, %v1080, 0.0
  %1104 = vadd.xlane.f32.xlu0 %v1103
  %v1105 = vpop.xlane.xlu0 %1104
  %v1106 = vsel %vm110, %v1082, 0.0
  %1107 = vadd.xlane.f32.xlu0 %v1106
  %v1108 = vpop.xlane.xlu0 %1107
  %v1109 = vsel %vm110, %v1084, 0.0
  %1110 = vadd.xlane.f32.xlu0 %v1109
  %v1111 = vpop.xlane.xlu0 %1110
  %v1112 = vsel %vm110, %v1086, 0.0
  %1113 = vadd.xlane.f32.xlu0 %v1112
  %v1114 = vpop.xlane.xlu0 %1113
  %v1115 = vsel %vm110, %v1088, 0.0
  %1116 = vadd.xlane.f32.xlu0 %v1115
  %v1117 = vpop.xlane.xlu0 %1116
  %v1118 = vsel %vm110, %v1090, 0.0
  %1119 = vadd.xlane.f32.xlu0 %v1118
  %v1120 = vpop.xlane.xlu0 %1119
  %v1121 = vsel %vm110, %v1092, 0.0
  %1122 = vadd.xlane.f32.xlu0 %v1121
  %v1123 = vpop.xlane.xlu0 %1122
  %v1124 = vsel %vm110, %v1094, 0.0
  %1125 = vadd.xlane.f32.xlu0 %v1124
  %v1126 = vpop.xlane.xlu0 %1125
  %v1127 = vsel %vm110, %v1096, 0.0
  %1128 = vadd.xlane.f32.xlu0 %v1127
  %v1129 = vpop.xlane.xlu0 %1128
  %v1130 = vsel %vm110, %v1098, 0.0
  %1131 = vadd.xlane.f32.xlu0 %v1130
  %v1132 = vpop.xlane.xlu0 %1131
  %v1133 = vsel %vm110, %v1100, 0.0
  %1134 = vadd.xlane.f32.xlu0 %v1133
  %v1135 = vpop.xlane.xlu0 %1134
  %v1136 = vsel %vm110, %v1102, 0.0
  %1137 = vadd.xlane.f32.xlu0 %v1136
  %v1138 = vpop.xlane.xlu0 %1137
  %v1139 = vrcp.pop %v1105
  %v1140 = vrcp.pop %v1108
  %v1141 = vrcp.pop %v1111
  %v1142 = vrcp.pop %v1114
  %v1143 = vrcp.pop %v1117
  %v1144 = vrcp.pop %v1120
  %v1145 = vrcp.pop %v1123
  %v1146 = vrcp.pop %v1126
  %v1147 = vrcp.pop %v1129
  %v1148 = vrcp.pop %v1132
  %v1149 = vrcp.pop %v1135
  %v1150 = vrcp.pop %v1138
  %v1151 = vmul.f32 %v1080, %v1139
  %v1152 = vmul.f32 %v1082, %v1140
  %v1153 = vmul.f32 %v1084, %v1141
  %v1154 = vmul.f32 %v1086, %v1142
  %v1155 = vmul.f32 %v1088, %v1143
  %v1156 = vmul.f32 %v1090, %v1144
  %v1157 = vmul.f32 %v1092, %v1145
  %v1158 = vmul.f32 %v1094, %v1146
  %v1159 = vmul.f32 %v1096, %v1147
  %v1160 = vmul.f32 %v1098, %v1148
  %v1161 = vmul.f32 %v1100, %v1149
  %v1162 = vmul.f32 %v1102, %v1150
  %v1163 = vpack.c.bf16 %v1152, %v1151
  %v1164 = vpack.c.bf16 %v1154, %v1153
  %v1165 = vpack.c.bf16 %v1156, %v1155
  %v1166 = vpack.c.bf16 %v1158, %v1157
  %v1167 = vpack.c.bf16 %v1160, %v1159
  %v1168 = vpack.c.bf16 %v1162, %v1161
  %1169 = vrot.lane.b32.xlu0 %v866, 56
  %v1170 = vpop.permute.xlu0 %1169
  %1171 = vrot.lane.b32.xlu0 %v867, 56
  %v1172 = vpop.permute.xlu0 %1171
  %1173 = vrot.lane.b32.xlu0 %v868, 56
  %v1174 = vpop.permute.xlu0 %1173
  %1175 = vrot.lane.b32.xlu0 %v869, 56
  %v1176 = vpop.permute.xlu0 %1175
  %1177 = vrot.lane.b32.xlu0 %v870, 56
  %v1178 = vpop.permute.xlu0 %1177
  %1179 = vrot.lane.b32.xlu0 %v871, 56
  %v1180 = vpop.permute.xlu0 %1179
  %v1188 = vsel %vm110, %v1163, 0
  %v1191 = vsel %vm110, %v1164, 0
  %v1194 = vsel %vm110, %v1165, 0
  %v1197 = vsel %vm110, %v1166, 0
  %v1200 = vsel %vm110, %v1167, 0
  %v1203 = vsel %vm110, %v1168, 0
  %1205 = vmatprep.subr.bf16.mxu0 0
  %1206 = vmatpush1.bf16.msra.mxu0 0
  %1207 = vmatprep.subr.bf16.mxu0 0
  %1208 = vmatpush1.bf16.msra.mxu0 0
  %1209 = vmatprep.subr.bf16.mxu0 0
  %1210 = vmatpush1.bf16.msra.mxu0 %v1180
  %1211 = vmatprep.subr.bf16.mxu0 0
  %1212 = vmatpush1.bf16.msra.mxu0 %v1178
  %1213 = vmatprep.subr.bf16.mxu0 0
  %1214 = vmatpush1.bf16.msra.mxu0 %v1176
  %1215 = vmatprep.subr.bf16.mxu0 0
  %1216 = vmatpush1.bf16.msra.mxu0 %v1174
  %1217 = vmatprep.subr.bf16.mxu0 0
  %1218 = vmatpush1.bf16.msra.mxu0 %v1172
  %1219 = vmatprep.subr.bf16.mxu0 0
  %1220 = vmatpush1.bf16.msra.mxu0 %v1170
  %1221 = vmatprep.subr.bf16.mxu0 0
  %1222 = vmatpush2.bf16.msra.mxu0 0
  %1223 = vmatprep.subr.bf16.mxu0 0
  %1224 = vmatpush2.bf16.msra.mxu0 0
  %1225 = vmatprep.subr.bf16.mxu0 0
  %1226 = vmatpush2.bf16.msra.mxu0 0
  %1227 = vmatprep.subr.bf16.mxu0 0
  %1228 = vmatpush2.bf16.msra.mxu0 0
  %1229 = vmatprep.subr.bf16.mxu0 0
  %1230 = vmatpush2.bf16.msra.mxu0 0
  %1231 = vmatprep.subr.bf16.mxu0 0
  %1232 = vmatpush2.bf16.msra.mxu0 0
  %1233 = vmatprep.subr.bf16.mxu0 0
  %1234 = vmatpush2.bf16.msra.mxu0 0
  %1235 = vmatprep.subr.bf16.mxu0 0
  %1236 = vmatpush2.bf16.msra.mxu0 0
  %1237 = vmatprep.mubr.bf16.mxu0 0
  %1238 = vmatmul.mubr.bf16.gmra.mxu0 %v1188
  %v1239 = vpop.f32.mrf.mxu0
  %v1240 = vadd.f32 0.0, %v1239
  %v1241 = vpop.f32.mrf.mxu0
  %v1242 = vpop.f32.mrf.mxu0
  %v1243 = vadd.f32 0.0, %v1242
  %v1244 = vpop.f32.mrf.mxu0
  %1245 = vmatprep.mubr.bf16.mxu0 0
  %1246 = vmatmul.mubr.bf16.gmra.mxu0 %v1191
  %v1247 = vpop.f32.mrf.mxu0
  %v1248 = vadd.f32 0.0, %v1247
  %v1249 = vpop.f32.mrf.mxu0
  %v1250 = vpop.f32.mrf.mxu0
  %v1251 = vadd.f32 0.0, %v1250
  %v1252 = vpop.f32.mrf.mxu0
  %1253 = vmatprep.mubr.bf16.mxu0 0
  %1254 = vmatmul.mubr.bf16.gmra.mxu0 %v1194
  %v1255 = vpop.f32.mrf.mxu0
  %v1256 = vadd.f32 0.0, %v1255
  %v1257 = vpop.f32.mrf.mxu0
  %v1258 = vpop.f32.mrf.mxu0
  %v1259 = vadd.f32 0.0, %v1258
  %v1260 = vpop.f32.mrf.mxu0
  %1261 = vmatprep.mubr.bf16.mxu0 0
  %1262 = vmatmul.mubr.bf16.gmra.mxu0 %v1197
  %v1263 = vpop.f32.mrf.mxu0
  %v1264 = vadd.f32 0.0, %v1263
  %v1265 = vpop.f32.mrf.mxu0
  %v1266 = vpop.f32.mrf.mxu0
  %v1267 = vadd.f32 0.0, %v1266
  %v1268 = vpop.f32.mrf.mxu0
  %1269 = vmatprep.mubr.bf16.mxu0 0
  %1270 = vmatmul.mubr.bf16.gmra.mxu0 %v1200
  %v1271 = vpop.f32.mrf.mxu0
  %v1272 = vadd.f32 0.0, %v1271
  %v1273 = vpop.f32.mrf.mxu0
  %v1274 = vpop.f32.mrf.mxu0
  %v1275 = vadd.f32 0.0, %v1274
  %v1276 = vpop.f32.mrf.mxu0
  %1277 = vmatprep.mubr.bf16.mxu0 0
  %1278 = vmatmul.mubr.bf16.gmra.mxu0 %v1203
  %v1279 = vpop.f32.mrf.mxu0
  %v1280 = vadd.f32 0.0, %v1279
  %v1281 = vpop.f32.mrf.mxu0
  %v1282 = vpop.f32.mrf.mxu0
  %v1283 = vadd.f32 0.0, %v1282
  %v1284 = vpop.f32.mrf.mxu0
  %1285 = vdwg.mxu0
  %1286 = vrot.lane.b32.xlu0 %v866, 110
  %v1287 = vpop.permute.xlu0 %1286
  %1288 = vrot.lane.b32.xlu0 %v867, 110
  %v1289 = vpop.permute.xlu0 %1288
  %1290 = vrot.lane.b32.xlu0 %v868, 110
  %v1291 = vpop.permute.xlu0 %1290
  %1292 = vrot.lane.b32.xlu0 %v869, 110
  %v1293 = vpop.permute.xlu0 %1292
  %1294 = vrot.lane.b32.xlu0 %v870, 110
  %v1295 = vpop.permute.xlu0 %1294
  %1296 = vrot.lane.b32.xlu0 %v871, 110
  %v1297 = vpop.permute.xlu0 %1296
  %1298 = vrot.lane.b32.xlu0 %v866, 74
  %v1299 = vpop.permute.xlu0 %1298
  %1300 = vrot.lane.b32.xlu0 %v867, 74
  %v1301 = vpop.permute.xlu0 %1300
  %1302 = vrot.lane.b32.xlu0 %v868, 74
  %v1303 = vpop.permute.xlu0 %1302
  %1304 = vrot.lane.b32.xlu0 %v869, 74
  %v1305 = vpop.permute.xlu0 %1304
  %1306 = vrot.lane.b32.xlu0 %v870, 74
  %v1307 = vpop.permute.xlu0 %1306
  %1308 = vrot.lane.b32.xlu0 %v871, 74
  %v1309 = vpop.permute.xlu0 %1308
  %v1311 = vsel %vm601, %v1287, 0
  %v1314 = vsel %vm601, %v1289, 0
  %v1317 = vsel %vm601, %v1291, 0
  %v1320 = vsel %vm601, %v1293, 0
  %v1323 = vsel %vm601, %v1295, 0
  %v1326 = vsel %vm601, %v1297, 0
  %v1329 = vsel %vm601, %v1299, 0
  %v1332 = vsel %vm601, %v1301, 0
  %v1335 = vsel %vm601, %v1303, 0
  %v1338 = vsel %vm601, %v1305, 0
  %v1341 = vsel %vm601, %v1307, 0
  %v1344 = vsel %vm601, %v1309, 0
  %1346 = vmatprep.subr.bf16.mxu0 0
  %1347 = vmatpush1.bf16.xpose.msra.mxu0 0
  %1348 = vmatprep.subr.bf16.mxu0 0
  %1349 = vmatpush1.bf16.xpose.msra.mxu0 0
  %1350 = vmatprep.subr.bf16.mxu0 0
  %1351 = vmatpush1.bf16.xpose.msra.mxu0 %v1344
  %1352 = vmatprep.subr.bf16.mxu0 0
  %1353 = vmatpush1.bf16.xpose.msra.mxu0 %v1341
  %1354 = vmatprep.subr.bf16.mxu0 0
  %1355 = vmatpush1.bf16.xpose.msra.mxu0 %v1338
  %1356 = vmatprep.subr.bf16.mxu0 0
  %1357 = vmatpush1.bf16.xpose.msra.mxu0 %v1335
  %1358 = vmatprep.subr.bf16.mxu0 0
  %1359 = vmatpush1.bf16.xpose.msra.mxu0 %v1332
  %1360 = vmatprep.subr.bf16.mxu0 0
  %1361 = vmatpush1.bf16.xpose.msra.mxu0 %v1329
  %1362 = vmatprep.subr.bf16.mxu0 0
  %1363 = vmatpush2.bf16.xpose.msra.mxu0 0
  %1364 = vmatprep.subr.bf16.mxu0 0
  %1365 = vmatpush2.bf16.xpose.msra.mxu0 0
  %1366 = vmatprep.subr.bf16.mxu0 0
  %1367 = vmatpush2.bf16.xpose.msra.mxu0 0
  %1368 = vmatprep.subr.bf16.mxu0 0
  %1369 = vmatpush2.bf16.xpose.msra.mxu0 0
  %1370 = vmatprep.subr.bf16.mxu0 0
  %1371 = vmatpush2.bf16.xpose.msra.mxu0 0
  %1372 = vmatprep.subr.bf16.mxu0 0
  %1373 = vmatpush2.bf16.xpose.msra.mxu0 0
  %1374 = vmatprep.subr.bf16.mxu0 0
  %1375 = vmatpush2.bf16.xpose.msra.mxu0 0
  %1376 = vmatprep.subr.bf16.mxu0 0
  %1377 = vmatpush2.bf16.xpose.msra.mxu0 0
  %1378 = vmatprep.mubr.bf16.mxu0 0
  %1379 = vmatmul.mubr.bf16.gmra.mxu0 %v1311
  %v1380 = vpop.f32.mrf.mxu0
  %v1381 = vadd.f32 0.0, %v1380
  %v1382 = vpop.f32.mrf.mxu0
  %v1383 = vpop.f32.mrf.mxu0
  %v1384 = vadd.f32 0.0, %v1383
  %v1385 = vpop.f32.mrf.mxu0
  %1386 = vmatprep.mubr.bf16.mxu0 0
  %1387 = vmatmul.mubr.bf16.gmra.mxu0 %v1314
  %v1388 = vpop.f32.mrf.mxu0
  %v1389 = vadd.f32 0.0, %v1388
  %v1390 = vpop.f32.mrf.mxu0
  %v1391 = vpop.f32.mrf.mxu0
  %v1392 = vadd.f32 0.0, %v1391
  %v1393 = vpop.f32.mrf.mxu0
  %1394 = vmatprep.mubr.bf16.mxu0 0
  %1395 = vmatmul.mubr.bf16.gmra.mxu0 %v1317
  %v1396 = vpop.f32.mrf.mxu0
  %v1397 = vadd.f32 0.0, %v1396
  %v1398 = vpop.f32.mrf.mxu0
  %v1399 = vpop.f32.mrf.mxu0
  %v1400 = vadd.f32 0.0, %v1399
  %v1401 = vpop.f32.mrf.mxu0
  %1402 = vmatprep.mubr.bf16.mxu0 0
  %1403 = vmatmul.mubr.bf16.gmra.mxu0 %v1320
  %v1404 = vpop.f32.mrf.mxu0
  %v1405 = vadd.f32 0.0, %v1404
  %v1406 = vpop.f32.mrf.mxu0
  %v1407 = vpop.f32.mrf.mxu0
  %v1408 = vadd.f32 0.0, %v1407
  %v1409 = vpop.f32.mrf.mxu0
  %1410 = vmatprep.mubr.bf16.mxu0 0
  %1411 = vmatmul.mubr.bf16.gmra.mxu0 %v1323
  %v1412 = vpop.f32.mrf.mxu0
  %v1413 = vadd.f32 0.0, %v1412
  %v1414 = vpop.f32.mrf.mxu0
  %v1415 = vpop.f32.mrf.mxu0
  %v1416 = vadd.f32 0.0, %v1415
  %v1417 = vpop.f32.mrf.mxu0
  %1418 = vmatprep.mubr.bf16.mxu0 0
  %1419 = vmatmul.mubr.bf16.gmra.mxu0 %v1326
  %v1420 = vpop.f32.mrf.mxu0
  %v1421 = vadd.f32 0.0, %v1420
  %v1422 = vpop.f32.mrf.mxu0
  %v1423 = vpop.f32.mrf.mxu0
  %v1424 = vadd.f32 0.0, %v1423
  %v1425 = vpop.f32.mrf.mxu0
  %1426 = vdwg.mxu0
  %v1427 = vmul.f32 %v1381, 0.23570226
  %v1428 = vmul.f32 %v1384, 0.23570226
  %v1429 = vmul.f32 %v1389, 0.23570226
  %v1430 = vmul.f32 %v1392, 0.23570226
  %v1431 = vmul.f32 %v1397, 0.23570226
  %v1432 = vmul.f32 %v1400, 0.23570226
  %v1433 = vmul.f32 %v1405, 0.23570226
  %v1434 = vmul.f32 %v1408, 0.23570226
  %v1435 = vmul.f32 %v1413, 0.23570226
  %v1436 = vmul.f32 %v1416, 0.23570226
  %v1437 = vmul.f32 %v1421, 0.23570226
  %v1438 = vmul.f32 %v1424, 0.23570226
  %v1439 = vadd.f32 %v1427, %v729
  %v1440 = vadd.f32 %v1428, %v730
  %v1441 = vadd.f32 %v1429, %v731
  %v1442 = vadd.f32 %v1430, %v732
  %v1443 = vadd.f32 %v1431, %v733
  %v1444 = vadd.f32 %v1432, %v734
  %v1445 = vadd.f32 %v1433, %v735
  %v1446 = vadd.f32 %v1434, %v736
  %v1447 = vadd.f32 %v1435, %v737
  %v1448 = vadd.f32 %v1436, %v738
  %v1449 = vadd.f32 %v1437, %v739
  %v1450 = vadd.f32 %v1438, %v740
  %v1451 = vsel %vm110, %v1439, -inf
  %1452 = vmax.xlane.f32.xlu0 %v1451
  %v1453 = vpop.xlane.xlu0 %1452
  %v1454 = vsel %vm110, %v1440, -inf
  %1455 = vmax.xlane.f32.xlu0 %v1454
  %v1456 = vpop.xlane.xlu0 %1455
  %v1457 = vsel %vm110, %v1441, -inf
  %1458 = vmax.xlane.f32.xlu0 %v1457
  %v1459 = vpop.xlane.xlu0 %1458
  %v1460 = vsel %vm110, %v1442, -inf
  %1461 = vmax.xlane.f32.xlu0 %v1460
  %v1462 = vpop.xlane.xlu0 %1461
  %v1463 = vsel %vm110, %v1443, -inf
  %1464 = vmax.xlane.f32.xlu0 %v1463
  %v1465 = vpop.xlane.xlu0 %1464
  %v1466 = vsel %vm110, %v1444, -inf
  %1467 = vmax.xlane.f32.xlu0 %v1466
  %v1468 = vpop.xlane.xlu0 %1467
  %v1469 = vsel %vm110, %v1445, -inf
  %1470 = vmax.xlane.f32.xlu0 %v1469
  %v1471 = vpop.xlane.xlu0 %1470
  %v1472 = vsel %vm110, %v1446, -inf
  %1473 = vmax.xlane.f32.xlu0 %v1472
  %v1474 = vpop.xlane.xlu0 %1473
  %v1475 = vsel %vm110, %v1447, -inf
  %1476 = vmax.xlane.f32.xlu0 %v1475
  %v1477 = vpop.xlane.xlu0 %1476
  %v1478 = vsel %vm110, %v1448, -inf
  %1479 = vmax.xlane.f32.xlu0 %v1478
  %v1480 = vpop.xlane.xlu0 %1479
  %v1481 = vsel %vm110, %v1449, -inf
  %1482 = vmax.xlane.f32.xlu0 %v1481
  %v1483 = vpop.xlane.xlu0 %1482
  %v1484 = vsel %vm110, %v1450, -inf
  %1485 = vmax.xlane.f32.xlu0 %v1484
  %v1486 = vpop.xlane.xlu0 %1485
  %v1487 = vsub.f32 %v1439, %v1453
  %v1488 = vsub.f32 %v1440, %v1456
  %v1489 = vsub.f32 %v1441, %v1459
  %v1490 = vsub.f32 %v1442, %v1462
  %v1491 = vsub.f32 %v1443, %v1465
  %v1492 = vsub.f32 %v1444, %v1468
  %v1493 = vsub.f32 %v1445, %v1471
  %v1494 = vsub.f32 %v1446, %v1474
  %v1495 = vsub.f32 %v1447, %v1477
  %v1496 = vsub.f32 %v1448, %v1480
  %v1497 = vsub.f32 %v1449, %v1483
  %v1498 = vsub.f32 %v1450, %v1486
  %v1499 = vmul.f32 %v1487, 1.442695
  %v1500 = vpow.pop %v1499
  %v1501 = vmul.f32 %v1488, 1.442695
  %v1502 = vpow.pop %v1501
  %v1503 = vmul.f32 %v1489, 1.442695
  %v1504 = vpow.pop %v1503
  %v1505 = vmul.f32 %v1490, 1.442695
  %v1506 = vpow.pop %v1505
  %v1507 = vmul.f32 %v1491, 1.442695
  %v1508 = vpow.pop %v1507
  %v1509 = vmul.f32 %v1492, 1.442695
  %v1510 = vpow.pop %v1509
  %v1511 = vmul.f32 %v1493, 1.442695
  %v1512 = vpow.pop %v1511
  %v1513 = vmul.f32 %v1494, 1.442695
  %v1514 = vpow.pop %v1513
  %v1515 = vmul.f32 %v1495, 1.442695
  %v1516 = vpow.pop %v1515
  %v1517 = vmul.f32 %v1496, 1.442695
  %v1518 = vpow.pop %v1517
  %v1519 = vmul.f32 %v1497, 1.442695
  %v1520 = vpow.pop %v1519
  %v1521 = vmul.f32 %v1498, 1.442695
  %v1522 = vpow.pop %v1521
  %v1523 = vsel %vm110, %v1500, 0.0
  %1524 = vadd.xlane.f32.xlu0 %v1523
  %v1525 = vpop.xlane.xlu0 %1524
  %v1526 = vsel %vm110, %v1502, 0.0
  %1527 = vadd.xlane.f32.xlu0 %v1526
  %v1528 = vpop.xlane.xlu0 %1527
  %v1529 = vsel %vm110, %v1504, 0.0
  %1530 = vadd.xlane.f32.xlu0 %v1529
  %v1531 = vpop.xlane.xlu0 %1530
  %v1532 = vsel %vm110, %v1506, 0.0
  %1533 = vadd.xlane.f32.xlu0 %v1532
  %v1534 = vpop.xlane.xlu0 %1533
  %v1535 = vsel %vm110, %v1508, 0.0
  %1536 = vadd.xlane.f32.xlu0 %v1535
  %v1537 = vpop.xlane.xlu0 %1536
  %v1538 = vsel %vm110, %v1510, 0.0
  %1539 = vadd.xlane.f32.xlu0 %v1538
  %v1540 = vpop.xlane.xlu0 %1539
  %v1541 = vsel %vm110, %v1512, 0.0
  %1542 = vadd.xlane.f32.xlu0 %v1541
  %v1543 = vpop.xlane.xlu0 %1542
  %v1544 = vsel %vm110, %v1514, 0.0
  %1545 = vadd.xlane.f32.xlu0 %v1544
  %v1546 = vpop.xlane.xlu0 %1545
  %v1547 = vsel %vm110, %v1516, 0.0
  %1548 = vadd.xlane.f32.xlu0 %v1547
  %v1549 = vpop.xlane.xlu0 %1548
  %v1550 = vsel %vm110, %v1518, 0.0
  %1551 = vadd.xlane.f32.xlu0 %v1550
  %v1552 = vpop.xlane.xlu0 %1551
  %v1553 = vsel %vm110, %v1520, 0.0
  %1554 = vadd.xlane.f32.xlu0 %v1553
  %v1555 = vpop.xlane.xlu0 %1554
  %v1556 = vsel %vm110, %v1522, 0.0
  %1557 = vadd.xlane.f32.xlu0 %v1556
  %v1558 = vpop.xlane.xlu0 %1557
  %v1559 = vrcp.pop %v1525
  %v1560 = vrcp.pop %v1528
  %v1561 = vrcp.pop %v1531
  %v1562 = vrcp.pop %v1534
  %v1563 = vrcp.pop %v1537
  %v1564 = vrcp.pop %v1540
  %v1565 = vrcp.pop %v1543
  %v1566 = vrcp.pop %v1546
  %v1567 = vrcp.pop %v1549
  %v1568 = vrcp.pop %v1552
  %v1569 = vrcp.pop %v1555
  %v1570 = vrcp.pop %v1558
  %v1571 = vmul.f32 %v1500, %v1559
  %v1572 = vmul.f32 %v1502, %v1560
  %v1573 = vmul.f32 %v1504, %v1561
  %v1574 = vmul.f32 %v1506, %v1562
  %v1575 = vmul.f32 %v1508, %v1563
  %v1576 = vmul.f32 %v1510, %v1564
  %v1577 = vmul.f32 %v1512, %v1565
  %v1578 = vmul.f32 %v1514, %v1566
  %v1579 = vmul.f32 %v1516, %v1567
  %v1580 = vmul.f32 %v1518, %v1568
  %v1581 = vmul.f32 %v1520, %v1569
  %v1582 = vmul.f32 %v1522, %v1570
  %v1583 = vpack.c.bf16 %v1572, %v1571
  %v1584 = vpack.c.bf16 %v1574, %v1573
  %v1585 = vpack.c.bf16 %v1576, %v1575
  %v1586 = vpack.c.bf16 %v1578, %v1577
  %v1587 = vpack.c.bf16 %v1580, %v1579
  %v1588 = vpack.c.bf16 %v1582, %v1581
  %1589 = vrot.lane.b32.xlu0 %v866, 38
  %v1590 = vpop.permute.xlu0 %1589
  %1591 = vrot.lane.b32.xlu0 %v867, 38
  %v1592 = vpop.permute.xlu0 %1591
  %1593 = vrot.lane.b32.xlu0 %v868, 38
  %v1594 = vpop.permute.xlu0 %1593
  %1595 = vrot.lane.b32.xlu0 %v869, 38
  %v1596 = vpop.permute.xlu0 %1595
  %1597 = vrot.lane.b32.xlu0 %v870, 38
  %v1598 = vpop.permute.xlu0 %1597
  %1599 = vrot.lane.b32.xlu0 %v871, 38
  %v1600 = vpop.permute.xlu0 %1599
  %v1608 = vsel %vm110, %v1583, 0
  %v1611 = vsel %vm110, %v1584, 0
  %v1614 = vsel %vm110, %v1585, 0
  %v1617 = vsel %vm110, %v1586, 0
  %v1620 = vsel %vm110, %v1587, 0
  %v1623 = vsel %vm110, %v1588, 0
  %1625 = vmatprep.subr.bf16.mxu0 0
  %1626 = vmatpush1.bf16.msra.mxu0 0
  %1627 = vmatprep.subr.bf16.mxu0 0
  %1628 = vmatpush1.bf16.msra.mxu0 0
  %1629 = vmatprep.subr.bf16.mxu0 0
  %1630 = vmatpush1.bf16.msra.mxu0 %v1600
  %1631 = vmatprep.subr.bf16.mxu0 0
  %1632 = vmatpush1.bf16.msra.mxu0 %v1598
  %1633 = vmatprep.subr.bf16.mxu0 0
  %1634 = vmatpush1.bf16.msra.mxu0 %v1596
  %1635 = vmatprep.subr.bf16.mxu0 0
  %1636 = vmatpush1.bf16.msra.mxu0 %v1594
  %1637 = vmatprep.subr.bf16.mxu0 0
  %1638 = vmatpush1.bf16.msra.mxu0 %v1592
  %1639 = vmatprep.subr.bf16.mxu0 0
  %1640 = vmatpush1.bf16.msra.mxu0 %v1590
  %1641 = vmatprep.subr.bf16.mxu0 0
  %1642 = vmatpush2.bf16.msra.mxu0 0
  %1643 = vmatprep.subr.bf16.mxu0 0
  %1644 = vmatpush2.bf16.msra.mxu0 0
  %1645 = vmatprep.subr.bf16.mxu0 0
  %1646 = vmatpush2.bf16.msra.mxu0 0
  %1647 = vmatprep.subr.bf16.mxu0 0
  %1648 = vmatpush2.bf16.msra.mxu0 0
  %1649 = vmatprep.subr.bf16.mxu0 0
  %1650 = vmatpush2.bf16.msra.mxu0 0
  %1651 = vmatprep.subr.bf16.mxu0 0
  %1652 = vmatpush2.bf16.msra.mxu0 0
  %1653 = vmatprep.subr.bf16.mxu0 0
  %1654 = vmatpush2.bf16.msra.mxu0 0
  %1655 = vmatprep.subr.bf16.mxu0 0
  %1656 = vmatpush2.bf16.msra.mxu0 0
  %1657 = vmatprep.mubr.bf16.mxu0 0
  %1658 = vmatmul.mubr.bf16.gmra.mxu0 %v1608
  %v1659 = vpop.f32.mrf.mxu0
  %v1660 = vadd.f32 0.0, %v1659
  %v1661 = vpop.f32.mrf.mxu0
  %v1662 = vpop.f32.mrf.mxu0
  %v1663 = vadd.f32 0.0, %v1662
  %v1664 = vpop.f32.mrf.mxu0
  %1665 = vmatprep.mubr.bf16.mxu0 0
  %1666 = vmatmul.mubr.bf16.gmra.mxu0 %v1611
  %v1667 = vpop.f32.mrf.mxu0
  %v1668 = vadd.f32 0.0, %v1667
  %v1669 = vpop.f32.mrf.mxu0
  %v1670 = vpop.f32.mrf.mxu0
  %v1671 = vadd.f32 0.0, %v1670
  %v1672 = vpop.f32.mrf.mxu0
  %1673 = vmatprep.mubr.bf16.mxu0 0
  %1674 = vmatmul.mubr.bf16.gmra.mxu0 %v1614
  %v1675 = vpop.f32.mrf.mxu0
  %v1676 = vadd.f32 0.0, %v1675
  %v1677 = vpop.f32.mrf.mxu0
  %v1678 = vpop.f32.mrf.mxu0
  %v1679 = vadd.f32 0.0, %v1678
  %v1680 = vpop.f32.mrf.mxu0
  %1681 = vmatprep.mubr.bf16.mxu0 0
  %1682 = vmatmul.mubr.bf16.gmra.mxu0 %v1617
  %v1683 = vpop.f32.mrf.mxu0
  %v1684 = vadd.f32 0.0, %v1683
  %v1685 = vpop.f32.mrf.mxu0
  %v1686 = vpop.f32.mrf.mxu0
  %v1687 = vadd.f32 0.0, %v1686
  %v1688 = vpop.f32.mrf.mxu0
  %1689 = vmatprep.mubr.bf16.mxu0 0
  %1690 = vmatmul.mubr.bf16.gmra.mxu0 %v1620
  %v1691 = vpop.f32.mrf.mxu0
  %v1692 = vadd.f32 0.0, %v1691
  %v1693 = vpop.f32.mrf.mxu0
  %v1694 = vpop.f32.mrf.mxu0
  %v1695 = vadd.f32 0.0, %v1694
  %v1696 = vpop.f32.mrf.mxu0
  %1697 = vmatprep.mubr.bf16.mxu0 0
  %1698 = vmatmul.mubr.bf16.gmra.mxu0 %v1623
  %v1699 = vpop.f32.mrf.mxu0
  %v1700 = vadd.f32 0.0, %v1699
  %v1701 = vpop.f32.mrf.mxu0
  %v1702 = vpop.f32.mrf.mxu0
  %v1703 = vadd.f32 0.0, %v1702
  %v1704 = vpop.f32.mrf.mxu0
  %1705 = vdwg.mxu0
  %1718 = vrot.lane.b32.xlu0 %v1660, 18
  %v1719 = vpop.permute.xlu0 %1718
  %1720 = vrot.lane.b32.xlu0 %v1663, 18
  %v1721 = vpop.permute.xlu0 %1720
  %1722 = vrot.lane.b32.xlu0 %v1668, 18
  %v1723 = vpop.permute.xlu0 %1722
  %1724 = vrot.lane.b32.xlu0 %v1671, 18
  %v1725 = vpop.permute.xlu0 %1724
  %1726 = vrot.lane.b32.xlu0 %v1676, 18
  %v1727 = vpop.permute.xlu0 %1726
  %1728 = vrot.lane.b32.xlu0 %v1679, 18
  %v1729 = vpop.permute.xlu0 %1728
  %1730 = vrot.lane.b32.xlu0 %v1684, 18
  %v1731 = vpop.permute.xlu0 %1730
  %1732 = vrot.lane.b32.xlu0 %v1687, 18
  %v1733 = vpop.permute.xlu0 %1732
  %1734 = vrot.lane.b32.xlu0 %v1692, 18
  %v1735 = vpop.permute.xlu0 %1734
  %1736 = vrot.lane.b32.xlu0 %v1695, 18
  %v1737 = vpop.permute.xlu0 %1736
  %1738 = vrot.lane.b32.xlu0 %v1700, 18
  %v1739 = vpop.permute.xlu0 %1738
  %1740 = vrot.lane.b32.xlu0 %v1703, 18
  %v1741 = vpop.permute.xlu0 %1740
  %v1754 = vsel %vm601, %v1240, %v1719
  %v1755 = vsel %vm601, %v1243, %v1721
  %v1756 = vsel %vm601, %v1248, %v1723
  %v1757 = vsel %vm601, %v1251, %v1725
  %v1758 = vsel %vm601, %v1256, %v1727
  %v1759 = vsel %vm601, %v1259, %v1729
  %v1760 = vsel %vm601, %v1264, %v1731
  %v1761 = vsel %vm601, %v1267, %v1733
  %v1762 = vsel %vm601, %v1272, %v1735
  %v1763 = vsel %vm601, %v1275, %v1737
  %v1764 = vsel %vm601, %v1280, %v1739
  %v1765 = vsel %vm601, %v1283, %v1741
  %v1766 = vld [vmem:[%s10] sm:$0xff]
  %v1767 = vld [vmem:[%s10 + $0x8] sm:$0xff]
  %v1768 = vld [vmem:[%s10 + $0x10] sm:$0xff]
  %v1769 = vld [vmem:[%s10 + $0x18] sm:$0xff]
  %v1770 = vld [vmem:[%s10 + $0x20] sm:$0xf]
  %v1771 = vpack.c.bf16 %v1755, %v1754
  %v1772 = vpack.c.bf16 %v1757, %v1756
  %v1773 = vpack.c.bf16 %v1759, %v1758
  %v1774 = vpack.c.bf16 %v1761, %v1760
  %v1775 = vpack.c.bf16 %v1763, %v1762
  %v1776 = vpack.c.bf16 %v1765, %v1764
  %v1777 = vpack.c.bf16 %v1767, %v1766
  %v1778 = vpack.c.bf16 %v1769, %v1768
  %v1779 = vpack.c.bf16 %v1770, %v1770
  %v1780 = vld [vmem:[%s11] sm:$0x1]
  %v1782 = vlaneseq
  %v1783 = vshrl.u32 %v1782, 7
  %v1784 = vsub.s32 0, %v1783
  %v1785 = vrot.slane %v1780, %v1784
  %v1788 = vsel %vm762, %v1771, 0
  %v1791 = vsel %vm762, %v1772, 0
  %v1794 = vsel %vm762, %v1773, 0
  %v1797 = vsel %vm762, %v1774, 0
  %v1800 = vsel %vm762, %v1775, 0
  %v1803 = vsel %vm762, %v1776, 0
  %v1806 = vsel %vm781, %v1779, 0
  %1808 = vmatprep.subr.bf16.mxu0 0
  %1809 = vmatpush1.bf16.msra.mxu0 0
  %1810 = vmatprep.subr.bf16.mxu0 0
  %1811 = vmatpush1.bf16.msra.mxu0 0
  %1812 = vmatprep.subr.bf16.mxu0 0
  %1813 = vmatpush1.bf16.msra.mxu0 0
  %1814 = vmatprep.subr.bf16.mxu0 0
  %1815 = vmatpush1.bf16.msra.mxu0 0
  %1816 = vmatprep.subr.bf16.mxu0 0
  %1817 = vmatpush1.bf16.msra.mxu0 0
  %1818 = vmatprep.subr.bf16.mxu0 0
  %1819 = vmatpush1.bf16.msra.mxu0 %v1806
  %1820 = vmatprep.subr.bf16.mxu0 0
  %1821 = vmatpush1.bf16.msra.mxu0 %v1778
  %1822 = vmatprep.subr.bf16.mxu0 0
  %1823 = vmatpush1.bf16.msra.mxu0 %v1777
  %1824 = vmatprep.subr.bf16.mxu0 0
  %1825 = vmatpush2.bf16.msra.mxu0 0
  %1826 = vmatprep.subr.bf16.mxu0 0
  %1827 = vmatpush2.bf16.msra.mxu0 0
  %1828 = vmatprep.subr.bf16.mxu0 0
  %1829 = vmatpush2.bf16.msra.mxu0 0
  %1830 = vmatprep.subr.bf16.mxu0 0
  %1831 = vmatpush2.bf16.msra.mxu0 0
  %1832 = vmatprep.subr.bf16.mxu0 0
  %1833 = vmatpush2.bf16.msra.mxu0 0
  %1834 = vmatprep.subr.bf16.mxu0 0
  %1835 = vmatpush2.bf16.msra.mxu0 0
  %1836 = vmatprep.subr.bf16.mxu0 0
  %1837 = vmatpush2.bf16.msra.mxu0 0
  %1838 = vmatprep.subr.bf16.mxu0 0
  %1839 = vmatpush2.bf16.msra.mxu0 0
  %1840 = vmatprep.mubr.bf16.mxu0 0
  %1841 = vmatmul.mubr.bf16.gmra.mxu0 %v1788
  %v1842 = vpop.f32.mrf.mxu0
  %v1843 = vadd.f32 %v1785, %v1842
  %v1844 = vpop.f32.mrf.mxu0
  %v1845 = vpop.f32.mrf.mxu0
  %v1846 = vadd.f32 %v1785, %v1845
  %v1847 = vpop.f32.mrf.mxu0
  %1848 = vmatprep.mubr.bf16.mxu0 0
  %1849 = vmatmul.mubr.bf16.gmra.mxu0 %v1791
  %v1850 = vpop.f32.mrf.mxu0
  %v1851 = vadd.f32 %v1785, %v1850
  %v1852 = vpop.f32.mrf.mxu0
  %v1853 = vpop.f32.mrf.mxu0
  %v1854 = vadd.f32 %v1785, %v1853
  %v1855 = vpop.f32.mrf.mxu0
  %1856 = vmatprep.mubr.bf16.mxu0 0
  %1857 = vmatmul.mubr.bf16.gmra.mxu0 %v1794
  %v1858 = vpop.f32.mrf.mxu0
  %v1859 = vadd.f32 %v1785, %v1858
  %v1860 = vpop.f32.mrf.mxu0
  %v1861 = vpop.f32.mrf.mxu0
  %v1862 = vadd.f32 %v1785, %v1861
  %v1863 = vpop.f32.mrf.mxu0
  %1864 = vmatprep.mubr.bf16.mxu0 0
  %1865 = vmatmul.mubr.bf16.gmra.mxu0 %v1797
  %v1866 = vpop.f32.mrf.mxu0
  %v1867 = vadd.f32 %v1785, %v1866
  %v1868 = vpop.f32.mrf.mxu0
  %v1869 = vpop.f32.mrf.mxu0
  %v1870 = vadd.f32 %v1785, %v1869
  %v1871 = vpop.f32.mrf.mxu0
  %1872 = vmatprep.mubr.bf16.mxu0 0
  %1873 = vmatmul.mubr.bf16.gmra.mxu0 %v1800
  %v1874 = vpop.f32.mrf.mxu0
  %v1875 = vadd.f32 %v1785, %v1874
  %v1876 = vpop.f32.mrf.mxu0
  %v1877 = vpop.f32.mrf.mxu0
  %v1878 = vadd.f32 %v1785, %v1877
  %v1879 = vpop.f32.mrf.mxu0
  %1880 = vmatprep.mubr.bf16.mxu0 0
  %1881 = vmatmul.mubr.bf16.gmra.mxu0 %v1803
  %v1882 = vpop.f32.mrf.mxu0
  %v1883 = vadd.f32 %v1785, %v1882
  %v1884 = vpop.f32.mrf.mxu0
  %v1885 = vpop.f32.mrf.mxu0
  %v1886 = vadd.f32 %v1785, %v1885
  %v1887 = vpop.f32.mrf.mxu0
  %1888 = vdwg.mxu0
  %v1889 = vadd.f32 %v717, %v1843
  %v1890 = vadd.f32 %v718, %v1846
  %v1891 = vadd.f32 %v719, %v1851
  %v1892 = vadd.f32 %v720, %v1854
  %v1893 = vadd.f32 %v721, %v1859
  %v1894 = vadd.f32 %v722, %v1862
  %v1895 = vadd.f32 %v723, %v1867
  %v1896 = vadd.f32 %v724, %v1870
  %v1897 = vadd.f32 %v725, %v1875
  %v1898 = vadd.f32 %v726, %v1878
  %v1899 = vadd.f32 %v727, %v1883
  %v1900 = vadd.f32 %v728, %v1886
  %v1901 = vld [vmem:[%s12] sm:$0x1]
  %v1902 = vld [vmem:[%s13] sm:$0x1]
  %v1903 = vsel %vm762, %v1889, 0.0
  %1904 = vadd.xlane.f32.xlu0 %v1903
  %v1905 = vpop.xlane.xlu0 %1904
  %v1906 = vsel %vm762, %v1890, 0.0
  %1907 = vadd.xlane.f32.xlu0 %v1906
  %v1908 = vpop.xlane.xlu0 %1907
  %v1909 = vsel %vm762, %v1891, 0.0
  %1910 = vadd.xlane.f32.xlu0 %v1909
  %v1911 = vpop.xlane.xlu0 %1910
  %v1912 = vsel %vm762, %v1892, 0.0
  %1913 = vadd.xlane.f32.xlu0 %v1912
  %v1914 = vpop.xlane.xlu0 %1913
  %v1915 = vsel %vm762, %v1893, 0.0
  %1916 = vadd.xlane.f32.xlu0 %v1915
  %v1917 = vpop.xlane.xlu0 %1916
  %v1918 = vsel %vm762, %v1894, 0.0
  %1919 = vadd.xlane.f32.xlu0 %v1918
  %v1920 = vpop.xlane.xlu0 %1919
  %v1921 = vsel %vm762, %v1895, 0.0
  %1922 = vadd.xlane.f32.xlu0 %v1921
  %v1923 = vpop.xlane.xlu0 %1922
  %v1924 = vsel %vm762, %v1896, 0.0
  %1925 = vadd.xlane.f32.xlu0 %v1924
  %v1926 = vpop.xlane.xlu0 %1925
  %v1927 = vsel %vm762, %v1897, 0.0
  %1928 = vadd.xlane.f32.xlu0 %v1927
  %v1929 = vpop.xlane.xlu0 %1928
  %v1930 = vsel %vm762, %v1898, 0.0
  %1931 = vadd.xlane.f32.xlu0 %v1930
  %v1932 = vpop.xlane.xlu0 %1931
  %v1933 = vsel %vm762, %v1899, 0.0
  %1934 = vadd.xlane.f32.xlu0 %v1933
  %v1935 = vpop.xlane.xlu0 %1934
  %v1936 = vsel %vm762, %v1900, 0.0
  %1937 = vadd.xlane.f32.xlu0 %v1936
  %v1938 = vpop.xlane.xlu0 %1937
  %v1939 = vrcp.pop 36.0
  %v1940 = vmul.f32 %v1905, %v1939
  %v1941 = vmul.f32 %v1908, %v1939
  %v1942 = vmul.f32 %v1911, %v1939
  %v1943 = vmul.f32 %v1914, %v1939
  %v1944 = vmul.f32 %v1917, %v1939
  %v1945 = vmul.f32 %v1920, %v1939
  %v1946 = vmul.f32 %v1923, %v1939
  %v1947 = vmul.f32 %v1926, %v1939
  %v1948 = vmul.f32 %v1929, %v1939
  %v1949 = vmul.f32 %v1932, %v1939
  %v1950 = vmul.f32 %v1935, %v1939
  %v1951 = vmul.f32 %v1938, %v1939
  %v1952 = vsub.f32 %v1889, %v1940
  %v1953 = vsub.f32 %v1890, %v1941
  %v1954 = vsub.f32 %v1891, %v1942
  %v1955 = vsub.f32 %v1892, %v1943
  %v1956 = vsub.f32 %v1893, %v1944
  %v1957 = vsub.f32 %v1894, %v1945
  %v1958 = vsub.f32 %v1895, %v1946
  %v1959 = vsub.f32 %v1896, %v1947
  %v1960 = vsub.f32 %v1897, %v1948
  %v1961 = vsub.f32 %v1898, %v1949
  %v1962 = vsub.f32 %v1899, %v1950
  %v1963 = vsub.f32 %v1900, %v1951
  %v1964 = vmul.f32 %v1952, %v1952
  %v1965 = vmul.f32 %v1953, %v1953
  %v1966 = vmul.f32 %v1954, %v1954
  %v1967 = vmul.f32 %v1955, %v1955
  %v1968 = vmul.f32 %v1956, %v1956
  %v1969 = vmul.f32 %v1957, %v1957
  %v1970 = vmul.f32 %v1958, %v1958
  %v1971 = vmul.f32 %v1959, %v1959
  %v1972 = vmul.f32 %v1960, %v1960
  %v1973 = vmul.f32 %v1961, %v1961
  %v1974 = vmul.f32 %v1962, %v1962
  %v1975 = vmul.f32 %v1963, %v1963
  %v1976 = vsel %vm762, %v1964, 0.0
  %1977 = vadd.xlane.f32.xlu0 %v1976
  %v1978 = vpop.xlane.xlu0 %1977
  %v1979 = vsel %vm762, %v1965, 0.0
  %1980 = vadd.xlane.f32.xlu0 %v1979
  %v1981 = vpop.xlane.xlu0 %1980
  %v1982 = vsel %vm762, %v1966, 0.0
  %1983 = vadd.xlane.f32.xlu0 %v1982
  %v1984 = vpop.xlane.xlu0 %1983
  %v1985 = vsel %vm762, %v1967, 0.0
  %1986 = vadd.xlane.f32.xlu0 %v1985
  %v1987 = vpop.xlane.xlu0 %1986
  %v1988 = vsel %vm762, %v1968, 0.0
  %1989 = vadd.xlane.f32.xlu0 %v1988
  %v1990 = vpop.xlane.xlu0 %1989
  %v1991 = vsel %vm762, %v1969, 0.0
  %1992 = vadd.xlane.f32.xlu0 %v1991
  %v1993 = vpop.xlane.xlu0 %1992
  %v1994 = vsel %vm762, %v1970, 0.0
  %1995 = vadd.xlane.f32.xlu0 %v1994
  %v1996 = vpop.xlane.xlu0 %1995
  %v1997 = vsel %vm762, %v1971, 0.0
  %1998 = vadd.xlane.f32.xlu0 %v1997
  %v1999 = vpop.xlane.xlu0 %1998
  %v2000 = vsel %vm762, %v1972, 0.0
  %2001 = vadd.xlane.f32.xlu0 %v2000
  %v2002 = vpop.xlane.xlu0 %2001
  %v2003 = vsel %vm762, %v1973, 0.0
  %2004 = vadd.xlane.f32.xlu0 %v2003
  %v2005 = vpop.xlane.xlu0 %2004
  %v2006 = vsel %vm762, %v1974, 0.0
  %2007 = vadd.xlane.f32.xlu0 %v2006
  %v2008 = vpop.xlane.xlu0 %2007
  %v2009 = vsel %vm762, %v1975, 0.0
  %2010 = vadd.xlane.f32.xlu0 %v2009
  %v2011 = vpop.xlane.xlu0 %2010
  %v2012 = vmul.f32 %v1978, %v1939
  %v2013 = vmul.f32 %v1981, %v1939
  %v2014 = vmul.f32 %v1984, %v1939
  %v2015 = vmul.f32 %v1987, %v1939
  %v2016 = vmul.f32 %v1990, %v1939
  %v2017 = vmul.f32 %v1993, %v1939
  %v2018 = vmul.f32 %v1996, %v1939
  %v2019 = vmul.f32 %v1999, %v1939
  %v2020 = vmul.f32 %v2002, %v1939
  %v2021 = vmul.f32 %v2005, %v1939
  %v2022 = vmul.f32 %v2008, %v1939
  %v2023 = vmul.f32 %v2011, %v1939
  %v2024 = vadd.f32 %v2012, 1e-05
  %v2025 = vadd.f32 %v2013, 1e-05
  %v2026 = vadd.f32 %v2014, 1e-05
  %v2027 = vadd.f32 %v2015, 1e-05
  %v2028 = vadd.f32 %v2016, 1e-05
  %v2029 = vadd.f32 %v2017, 1e-05
  %v2030 = vadd.f32 %v2018, 1e-05
  %v2031 = vadd.f32 %v2019, 1e-05
  %v2032 = vadd.f32 %v2020, 1e-05
  %v2033 = vadd.f32 %v2021, 1e-05
  %v2034 = vadd.f32 %v2022, 1e-05
  %v2035 = vadd.f32 %v2023, 1e-05
  %v2036 = vrsqrt.pop %v2024
  %v2037 = vrsqrt.pop %v2025
  %v2038 = vrsqrt.pop %v2026
  %v2039 = vrsqrt.pop %v2027
  %v2040 = vrsqrt.pop %v2028
  %v2041 = vrsqrt.pop %v2029
  %v2042 = vrsqrt.pop %v2030
  %v2043 = vrsqrt.pop %v2031
  %v2044 = vrsqrt.pop %v2032
  %v2045 = vrsqrt.pop %v2033
  %v2046 = vrsqrt.pop %v2034
  %v2047 = vrsqrt.pop %v2035
  %v2048 = vmul.f32 %v1952, %v2036
  %v2049 = vmul.f32 %v1953, %v2037
  %v2050 = vmul.f32 %v1954, %v2038
  %v2051 = vmul.f32 %v1955, %v2039
  %v2052 = vmul.f32 %v1956, %v2040
  %v2053 = vmul.f32 %v1957, %v2041
  %v2054 = vmul.f32 %v1958, %v2042
  %v2055 = vmul.f32 %v1959, %v2043
  %v2056 = vmul.f32 %v1960, %v2044
  %v2057 = vmul.f32 %v1961, %v2045
  %v2058 = vmul.f32 %v1962, %v2046
  %v2059 = vmul.f32 %v1963, %v2047
  %v2061 = vlaneseq
  %v2062 = vshrl.u32 %v2061, 7
  %v2063 = vsub.s32 0, %v2062
  %v2064 = vrot.slane %v1901, %v2063
  %v2066 = vmul.f32 %v2048, %v2064
  %v2067 = vmul.f32 %v2049, %v2064
  %v2068 = vmul.f32 %v2050, %v2064
  %v2069 = vmul.f32 %v2051, %v2064
  %v2070 = vmul.f32 %v2052, %v2064
  %v2071 = vmul.f32 %v2053, %v2064
  %v2072 = vmul.f32 %v2054, %v2064
  %v2073 = vmul.f32 %v2055, %v2064
  %v2074 = vmul.f32 %v2056, %v2064
  %v2075 = vmul.f32 %v2057, %v2064
  %v2076 = vmul.f32 %v2058, %v2064
  %v2077 = vmul.f32 %v2059, %v2064
  %v2079 = vlaneseq
  %v2080 = vshrl.u32 %v2079, 7
  %v2081 = vsub.s32 0, %v2080
  %v2082 = vrot.slane %v1902, %v2081
  %v2084 = vadd.f32 %v2066, %v2082
  %v2085 = vadd.f32 %v2067, %v2082
  %v2086 = vadd.f32 %v2068, %v2082
  %v2087 = vadd.f32 %v2069, %v2082
  %v2088 = vadd.f32 %v2070, %v2082
  %v2089 = vadd.f32 %v2071, %v2082
  %v2090 = vadd.f32 %v2072, %v2082
  %v2091 = vadd.f32 %v2073, %v2082
  %v2092 = vadd.f32 %v2074, %v2082
  %v2093 = vadd.f32 %v2075, %v2082
  %v2094 = vadd.f32 %v2076, %v2082
  %v2095 = vadd.f32 %v2077, %v2082
  %v2096 = vld [vmem:[%s14] sm:$0xff]
  %v2097 = vld [vmem:[%s14 + $0x8] sm:$0xff]
  %v2098 = vld [vmem:[%s14 + $0x10] sm:$0xff]
  %v2099 = vld [vmem:[%s14 + $0x18] sm:$0xff]
  %v2100 = vld [vmem:[%s14 + $0x20] sm:$0xf]
  %v2101 = vpack.c.bf16 %v2085, %v2084
  %v2102 = vpack.c.bf16 %v2087, %v2086
  %v2103 = vpack.c.bf16 %v2089, %v2088
  %v2104 = vpack.c.bf16 %v2091, %v2090
  %v2105 = vpack.c.bf16 %v2093, %v2092
  %v2106 = vpack.c.bf16 %v2095, %v2094
  %v2107 = vpack.c.bf16 %v2097, %v2096
  %v2108 = vpack.c.bf16 %v2099, %v2098
  %v2109 = vpack.c.bf16 %v2100, %v2100
  %v2110 = vld [vmem:[%s15] sm:$0x1]
  %v2112 = vlaneseq
  %v2113 = vshrl.u32 %v2112, 7
  %v2114 = vsub.s32 0, %v2113
  %v2115 = vrot.slane %v2110, %v2114
  %v2118 = vsel %vm762, %v2101, 0
  %v2121 = vsel %vm762, %v2102, 0
  %v2124 = vsel %vm762, %v2103, 0
  %v2127 = vsel %vm762, %v2104, 0
  %v2130 = vsel %vm762, %v2105, 0
  %v2133 = vsel %vm762, %v2106, 0
  %v2136 = vsel %vm781, %v2109, 0
  %2138 = vmatprep.subr.bf16.mxu0 0
  %2139 = vmatpush1.bf16.msra.mxu0 0
  %2140 = vmatprep.subr.bf16.mxu0 0
  %2141 = vmatpush1.bf16.msra.mxu0 0
  %2142 = vmatprep.subr.bf16.mxu0 0
  %2143 = vmatpush1.bf16.msra.mxu0 0
  %2144 = vmatprep.subr.bf16.mxu0 0
  %2145 = vmatpush1.bf16.msra.mxu0 0
  %2146 = vmatprep.subr.bf16.mxu0 0
  %2147 = vmatpush1.bf16.msra.mxu0 0
  %2148 = vmatprep.subr.bf16.mxu0 0
  %2149 = vmatpush1.bf16.msra.mxu0 %v2136
  %2150 = vmatprep.subr.bf16.mxu0 0
  %2151 = vmatpush1.bf16.msra.mxu0 %v2108
  %2152 = vmatprep.subr.bf16.mxu0 0
  %2153 = vmatpush1.bf16.msra.mxu0 %v2107
  %2154 = vmatprep.subr.bf16.mxu0 0
  %2155 = vmatpush2.bf16.msra.mxu0 0
  %2156 = vmatprep.subr.bf16.mxu0 0
  %2157 = vmatpush2.bf16.msra.mxu0 0
  %2158 = vmatprep.subr.bf16.mxu0 0
  %2159 = vmatpush2.bf16.msra.mxu0 0
  %2160 = vmatprep.subr.bf16.mxu0 0
  %2161 = vmatpush2.bf16.msra.mxu0 0
  %2162 = vmatprep.subr.bf16.mxu0 0
  %2163 = vmatpush2.bf16.msra.mxu0 0
  %2164 = vmatprep.subr.bf16.mxu0 0
  %2165 = vmatpush2.bf16.msra.mxu0 0
  %2166 = vmatprep.subr.bf16.mxu0 0
  %2167 = vmatpush2.bf16.msra.mxu0 0
  %2168 = vmatprep.subr.bf16.mxu0 0
  %2169 = vmatpush2.bf16.msra.mxu0 0
  %2170 = vmatprep.mubr.bf16.mxu0 0
  %2171 = vmatmul.mubr.bf16.gmra.mxu0 %v2118
  %v2172 = vpop.f32.mrf.mxu0
  %v2173 = vadd.f32 %v2115, %v2172
  %v2174 = vpop.f32.mrf.mxu0
  %v2175 = vpop.f32.mrf.mxu0
  %v2176 = vadd.f32 %v2115, %v2175
  %v2177 = vpop.f32.mrf.mxu0
  %2178 = vmatprep.mubr.bf16.mxu0 0
  %2179 = vmatmul.mubr.bf16.gmra.mxu0 %v2121
  %v2180 = vpop.f32.mrf.mxu0
  %v2181 = vadd.f32 %v2115, %v2180
  %v2182 = vpop.f32.mrf.mxu0
  %v2183 = vpop.f32.mrf.mxu0
  %v2184 = vadd.f32 %v2115, %v2183
  %v2185 = vpop.f32.mrf.mxu0
  %2186 = vmatprep.mubr.bf16.mxu0 0
  %2187 = vmatmul.mubr.bf16.gmra.mxu0 %v2124
  %v2188 = vpop.f32.mrf.mxu0
  %v2189 = vadd.f32 %v2115, %v2188
  %v2190 = vpop.f32.mrf.mxu0
  %v2191 = vpop.f32.mrf.mxu0
  %v2192 = vadd.f32 %v2115, %v2191
  %v2193 = vpop.f32.mrf.mxu0
  %2194 = vmatprep.mubr.bf16.mxu0 0
  %2195 = vmatmul.mubr.bf16.gmra.mxu0 %v2127
  %v2196 = vpop.f32.mrf.mxu0
  %v2197 = vadd.f32 %v2115, %v2196
  %v2198 = vpop.f32.mrf.mxu0
  %v2199 = vpop.f32.mrf.mxu0
  %v2200 = vadd.f32 %v2115, %v2199
  %v2201 = vpop.f32.mrf.mxu0
  %2202 = vmatprep.mubr.bf16.mxu0 0
  %2203 = vmatmul.mubr.bf16.gmra.mxu0 %v2130
  %v2204 = vpop.f32.mrf.mxu0
  %v2205 = vadd.f32 %v2115, %v2204
  %v2206 = vpop.f32.mrf.mxu0
  %v2207 = vpop.f32.mrf.mxu0
  %v2208 = vadd.f32 %v2115, %v2207
  %v2209 = vpop.f32.mrf.mxu0
  %2210 = vmatprep.mubr.bf16.mxu0 0
  %2211 = vmatmul.mubr.bf16.gmra.mxu0 %v2133
  %v2212 = vpop.f32.mrf.mxu0
  %v2213 = vadd.f32 %v2115, %v2212
  %v2214 = vpop.f32.mrf.mxu0
  %v2215 = vpop.f32.mrf.mxu0
  %v2216 = vadd.f32 %v2115, %v2215
  %v2217 = vpop.f32.mrf.mxu0
  %2218 = vdwg.mxu0
  %v2219 = vmax.f32 %v2173, 0.0
  %v2220 = vmax.f32 %v2176, 0.0
  %v2221 = vmax.f32 %v2181, 0.0
  %v2222 = vmax.f32 %v2184, 0.0
  %v2223 = vmax.f32 %v2189, 0.0
  %v2224 = vmax.f32 %v2192, 0.0
  %v2225 = vmax.f32 %v2197, 0.0
  %v2226 = vmax.f32 %v2200, 0.0
  %v2227 = vmax.f32 %v2205, 0.0
  %v2228 = vmax.f32 %v2208, 0.0
  %v2229 = vmax.f32 %v2213, 0.0
  %v2230 = vmax.f32 %v2216, 0.0
  %v2231 = vld [vmem:[%s16] sm:$0xff]
  %v2232 = vld [vmem:[%s16 + $0x8] sm:$0xff]
  %v2233 = vld [vmem:[%s16 + $0x10] sm:$0xff]
  %v2234 = vld [vmem:[%s16 + $0x18] sm:$0xff]
  %v2235 = vld [vmem:[%s16 + $0x20] sm:$0xff]
  %v2236 = vld [vmem:[%s16 + $0x28] sm:$0xff]
  %v2237 = vld [vmem:[%s16 + $0x30] sm:$0xff]
  %v2238 = vld [vmem:[%s16 + $0x38] sm:$0xff]
  %v2239 = vpack.c.bf16 %v2220, %v2219
  %v2240 = vpack.c.bf16 %v2222, %v2221
  %v2241 = vpack.c.bf16 %v2224, %v2223
  %v2242 = vpack.c.bf16 %v2226, %v2225
  %v2243 = vpack.c.bf16 %v2228, %v2227
  %v2244 = vpack.c.bf16 %v2230, %v2229
  %v2245 = vpack.c.bf16 %v2232, %v2231
  %v2246 = vpack.c.bf16 %v2234, %v2233
  %v2247 = vpack.c.bf16 %v2236, %v2235
  %v2248 = vpack.c.bf16 %v2238, %v2237
  %v2249 = vld [vmem:[%s17] sm:$0x1]
  %v2251 = vlaneseq
  %v2252 = vshrl.u32 %v2251, 7
  %v2253 = vsub.s32 0, %v2252
  %v2254 = vrot.slane %v2249, %v2253
  %vm2256 = vcmask 523264
  %v2258 = vsel %vm2256, %v2239, 0
  %v2261 = vsel %vm2256, %v2240, 0
  %v2264 = vsel %vm2256, %v2241, 0
  %v2267 = vsel %vm2256, %v2242, 0
  %v2270 = vsel %vm2256, %v2243, 0
  %v2273 = vsel %vm2256, %v2244, 0
  %2275 = vmatprep.subr.bf16.mxu0 0
  %2276 = vmatpush1.bf16.msra.mxu0 0
  %2277 = vmatprep.subr.bf16.mxu0 0
  %2278 = vmatpush1.bf16.msra.mxu0 0
  %2279 = vmatprep.subr.bf16.mxu0 0
  %2280 = vmatpush1.bf16.msra.mxu0 0
  %2281 = vmatprep.subr.bf16.mxu0 0
  %2282 = vmatpush1.bf16.msra.mxu0 0
  %2283 = vmatprep.subr.bf16.mxu0 0
  %2284 = vmatpush1.bf16.msra.mxu0 %v2248
  %2285 = vmatprep.subr.bf16.mxu0 0
  %2286 = vmatpush1.bf16.msra.mxu0 %v2247
  %2287 = vmatprep.subr.bf16.mxu0 0
  %2288 = vmatpush1.bf16.msra.mxu0 %v2246
  %2289 = vmatprep.subr.bf16.mxu0 0
  %2290 = vmatpush1.bf16.msra.mxu0 %v2245
  %2291 = vmatprep.subr.bf16.mxu0 0
  %2292 = vmatpush2.bf16.msra.mxu0 0
  %2293 = vmatprep.subr.bf16.mxu0 0
  %2294 = vmatpush2.bf16.msra.mxu0 0
  %2295 = vmatprep.subr.bf16.mxu0 0
  %2296 = vmatpush2.bf16.msra.mxu0 0
  %2297 = vmatprep.subr.bf16.mxu0 0
  %2298 = vmatpush2.bf16.msra.mxu0 0
  %2299 = vmatprep.subr.bf16.mxu0 0
  %2300 = vmatpush2.bf16.msra.mxu0 0
  %2301 = vmatprep.subr.bf16.mxu0 0
  %2302 = vmatpush2.bf16.msra.mxu0 0
  %2303 = vmatprep.subr.bf16.mxu0 0
  %2304 = vmatpush2.bf16.msra.mxu0 0
  %2305 = vmatprep.subr.bf16.mxu0 0
  %2306 = vmatpush2.bf16.msra.mxu0 0
  %2307 = vmatprep.mubr.bf16.mxu0 0
  %2308 = vmatmul.mubr.bf16.gmra.mxu0 %v2258
  %v2309 = vpop.f32.mrf.mxu0
  %v2310 = vadd.f32 %v2254, %v2309
  %v2311 = vpop.f32.mrf.mxu0
  %v2312 = vpop.f32.mrf.mxu0
  %v2313 = vadd.f32 %v2254, %v2312
  %v2314 = vpop.f32.mrf.mxu0
  %2315 = vmatprep.mubr.bf16.mxu0 0
  %2316 = vmatmul.mubr.bf16.gmra.mxu0 %v2261
  %v2317 = vpop.f32.mrf.mxu0
  %v2318 = vadd.f32 %v2254, %v2317
  %v2319 = vpop.f32.mrf.mxu0
  %v2320 = vpop.f32.mrf.mxu0
  %v2321 = vadd.f32 %v2254, %v2320
  %v2322 = vpop.f32.mrf.mxu0
  %2323 = vmatprep.mubr.bf16.mxu0 0
  %2324 = vmatmul.mubr.bf16.gmra.mxu0 %v2264
  %v2325 = vpop.f32.mrf.mxu0
  %v2326 = vadd.f32 %v2254, %v2325
  %v2327 = vpop.f32.mrf.mxu0
  %v2328 = vpop.f32.mrf.mxu0
  %v2329 = vadd.f32 %v2254, %v2328
  %v2330 = vpop.f32.mrf.mxu0
  %2331 = vmatprep.mubr.bf16.mxu0 0
  %2332 = vmatmul.mubr.bf16.gmra.mxu0 %v2267
  %v2333 = vpop.f32.mrf.mxu0
  %v2334 = vadd.f32 %v2254, %v2333
  %v2335 = vpop.f32.mrf.mxu0
  %v2336 = vpop.f32.mrf.mxu0
  %v2337 = vadd.f32 %v2254, %v2336
  %v2338 = vpop.f32.mrf.mxu0
  %2339 = vmatprep.mubr.bf16.mxu0 0
  %2340 = vmatmul.mubr.bf16.gmra.mxu0 %v2270
  %v2341 = vpop.f32.mrf.mxu0
  %v2342 = vadd.f32 %v2254, %v2341
  %v2343 = vpop.f32.mrf.mxu0
  %v2344 = vpop.f32.mrf.mxu0
  %v2345 = vadd.f32 %v2254, %v2344
  %v2346 = vpop.f32.mrf.mxu0
  %2347 = vmatprep.mubr.bf16.mxu0 0
  %2348 = vmatmul.mubr.bf16.gmra.mxu0 %v2273
  %v2349 = vpop.f32.mrf.mxu0
  %v2350 = vadd.f32 %v2254, %v2349
  %v2351 = vpop.f32.mrf.mxu0
  %v2352 = vpop.f32.mrf.mxu0
  %v2353 = vadd.f32 %v2254, %v2352
  %v2354 = vpop.f32.mrf.mxu0
  %2355 = vdwg.mxu0
  %v2356 = vadd.f32 %v2084, %v2310
  %v2357 = vadd.f32 %v2085, %v2313
  %v2358 = vadd.f32 %v2086, %v2318
  %v2359 = vadd.f32 %v2087, %v2321
  %v2360 = vadd.f32 %v2088, %v2326
  %v2361 = vadd.f32 %v2089, %v2329
  %v2362 = vadd.f32 %v2090, %v2334
  %v2363 = vadd.f32 %v2091, %v2337
  %v2364 = vadd.f32 %v2092, %v2342
  %v2365 = vadd.f32 %v2093, %v2345
  %v2366 = vadd.f32 %v2094, %v2350
  %v2367 = vadd.f32 %v2095, %v2353
  %v2368 = vld [vmem:[%s18] sm:$0x1]
  %v2369 = vld [vmem:[%s19] sm:$0x1]
  %v2370 = vsel %vm762, %v2356, 0.0
  %2371 = vadd.xlane.f32.xlu0 %v2370
  %v2372 = vpop.xlane.xlu0 %2371
  %v2373 = vsel %vm762, %v2357, 0.0
  %2374 = vadd.xlane.f32.xlu0 %v2373
  %v2375 = vpop.xlane.xlu0 %2374
  %v2376 = vsel %vm762, %v2358, 0.0
  %2377 = vadd.xlane.f32.xlu0 %v2376
  %v2378 = vpop.xlane.xlu0 %2377
  %v2379 = vsel %vm762, %v2359, 0.0
  %2380 = vadd.xlane.f32.xlu0 %v2379
  %v2381 = vpop.xlane.xlu0 %2380
  %v2382 = vsel %vm762, %v2360, 0.0
  %2383 = vadd.xlane.f32.xlu0 %v2382
  %v2384 = vpop.xlane.xlu0 %2383
  %v2385 = vsel %vm762, %v2361, 0.0
  %2386 = vadd.xlane.f32.xlu0 %v2385
  %v2387 = vpop.xlane.xlu0 %2386
  %v2388 = vsel %vm762, %v2362, 0.0
  %2389 = vadd.xlane.f32.xlu0 %v2388
  %v2390 = vpop.xlane.xlu0 %2389
  %v2391 = vsel %vm762, %v2363, 0.0
  %2392 = vadd.xlane.f32.xlu0 %v2391
  %v2393 = vpop.xlane.xlu0 %2392
  %v2394 = vsel %vm762, %v2364, 0.0
  %2395 = vadd.xlane.f32.xlu0 %v2394
  %v2396 = vpop.xlane.xlu0 %2395
  %v2397 = vsel %vm762, %v2365, 0.0
  %2398 = vadd.xlane.f32.xlu0 %v2397
  %v2399 = vpop.xlane.xlu0 %2398
  %v2400 = vsel %vm762, %v2366, 0.0
  %2401 = vadd.xlane.f32.xlu0 %v2400
  %v2402 = vpop.xlane.xlu0 %2401
  %v2403 = vsel %vm762, %v2367, 0.0
  %2404 = vadd.xlane.f32.xlu0 %v2403
  %v2405 = vpop.xlane.xlu0 %2404
  %v2406 = vmul.f32 %v2372, %v1939
  %v2407 = vmul.f32 %v2375, %v1939
  %v2408 = vmul.f32 %v2378, %v1939
  %v2409 = vmul.f32 %v2381, %v1939
  %v2410 = vmul.f32 %v2384, %v1939
  %v2411 = vmul.f32 %v2387, %v1939
  %v2412 = vmul.f32 %v2390, %v1939
  %v2413 = vmul.f32 %v2393, %v1939
  %v2414 = vmul.f32 %v2396, %v1939
  %v2415 = vmul.f32 %v2399, %v1939
  %v2416 = vmul.f32 %v2402, %v1939
  %v2417 = vmul.f32 %v2405, %v1939
  %v2418 = vsub.f32 %v2356, %v2406
  %v2419 = vsub.f32 %v2357, %v2407
  %v2420 = vsub.f32 %v2358, %v2408
  %v2421 = vsub.f32 %v2359, %v2409
  %v2422 = vsub.f32 %v2360, %v2410
  %v2423 = vsub.f32 %v2361, %v2411
  %v2424 = vsub.f32 %v2362, %v2412
  %v2425 = vsub.f32 %v2363, %v2413
  %v2426 = vsub.f32 %v2364, %v2414
  %v2427 = vsub.f32 %v2365, %v2415
  %v2428 = vsub.f32 %v2366, %v2416
  %v2429 = vsub.f32 %v2367, %v2417
  %v2430 = vmul.f32 %v2418, %v2418
  %v2431 = vmul.f32 %v2419, %v2419
  %v2432 = vmul.f32 %v2420, %v2420
  %v2433 = vmul.f32 %v2421, %v2421
  %v2434 = vmul.f32 %v2422, %v2422
  %v2435 = vmul.f32 %v2423, %v2423
  %v2436 = vmul.f32 %v2424, %v2424
  %v2437 = vmul.f32 %v2425, %v2425
  %v2438 = vmul.f32 %v2426, %v2426
  %v2439 = vmul.f32 %v2427, %v2427
  %v2440 = vmul.f32 %v2428, %v2428
  %v2441 = vmul.f32 %v2429, %v2429
  %v2442 = vsel %vm762, %v2430, 0.0
  %2443 = vadd.xlane.f32.xlu0 %v2442
  %v2444 = vpop.xlane.xlu0 %2443
  %v2445 = vsel %vm762, %v2431, 0.0
  %2446 = vadd.xlane.f32.xlu0 %v2445
  %v2447 = vpop.xlane.xlu0 %2446
  %v2448 = vsel %vm762, %v2432, 0.0
  %2449 = vadd.xlane.f32.xlu0 %v2448
  %v2450 = vpop.xlane.xlu0 %2449
  %v2451 = vsel %vm762, %v2433, 0.0
  %2452 = vadd.xlane.f32.xlu0 %v2451
  %v2453 = vpop.xlane.xlu0 %2452
  %v2454 = vsel %vm762, %v2434, 0.0
  %2455 = vadd.xlane.f32.xlu0 %v2454
  %v2456 = vpop.xlane.xlu0 %2455
  %v2457 = vsel %vm762, %v2435, 0.0
  %2458 = vadd.xlane.f32.xlu0 %v2457
  %v2459 = vpop.xlane.xlu0 %2458
  %v2460 = vsel %vm762, %v2436, 0.0
  %2461 = vadd.xlane.f32.xlu0 %v2460
  %v2462 = vpop.xlane.xlu0 %2461
  %v2463 = vsel %vm762, %v2437, 0.0
  %2464 = vadd.xlane.f32.xlu0 %v2463
  %v2465 = vpop.xlane.xlu0 %2464
  %v2466 = vsel %vm762, %v2438, 0.0
  %2467 = vadd.xlane.f32.xlu0 %v2466
  %v2468 = vpop.xlane.xlu0 %2467
  %v2469 = vsel %vm762, %v2439, 0.0
  %2470 = vadd.xlane.f32.xlu0 %v2469
  %v2471 = vpop.xlane.xlu0 %2470
  %v2472 = vsel %vm762, %v2440, 0.0
  %2473 = vadd.xlane.f32.xlu0 %v2472
  %v2474 = vpop.xlane.xlu0 %2473
  %v2475 = vsel %vm762, %v2441, 0.0
  %2476 = vadd.xlane.f32.xlu0 %v2475
  %v2477 = vpop.xlane.xlu0 %2476
  %v2478 = vmul.f32 %v2444, %v1939
  %v2479 = vmul.f32 %v2447, %v1939
  %v2480 = vmul.f32 %v2450, %v1939
  %v2481 = vmul.f32 %v2453, %v1939
  %v2482 = vmul.f32 %v2456, %v1939
  %v2483 = vmul.f32 %v2459, %v1939
  %v2484 = vmul.f32 %v2462, %v1939
  %v2485 = vmul.f32 %v2465, %v1939
  %v2486 = vmul.f32 %v2468, %v1939
  %v2487 = vmul.f32 %v2471, %v1939
  %v2488 = vmul.f32 %v2474, %v1939
  %v2489 = vmul.f32 %v2477, %v1939
  %v2490 = vadd.f32 %v2478, 1e-05
  %v2491 = vadd.f32 %v2479, 1e-05
  %v2492 = vadd.f32 %v2480, 1e-05
  %v2493 = vadd.f32 %v2481, 1e-05
  %v2494 = vadd.f32 %v2482, 1e-05
  %v2495 = vadd.f32 %v2483, 1e-05
  %v2496 = vadd.f32 %v2484, 1e-05
  %v2497 = vadd.f32 %v2485, 1e-05
  %v2498 = vadd.f32 %v2486, 1e-05
  %v2499 = vadd.f32 %v2487, 1e-05
  %v2500 = vadd.f32 %v2488, 1e-05
  %v2501 = vadd.f32 %v2489, 1e-05
  %v2502 = vrsqrt.pop %v2490
  %v2503 = vrsqrt.pop %v2491
  %v2504 = vrsqrt.pop %v2492
  %v2505 = vrsqrt.pop %v2493
  %v2506 = vrsqrt.pop %v2494
  %v2507 = vrsqrt.pop %v2495
  %v2508 = vrsqrt.pop %v2496
  %v2509 = vrsqrt.pop %v2497
  %v2510 = vrsqrt.pop %v2498
  %v2511 = vrsqrt.pop %v2499
  %v2512 = vrsqrt.pop %v2500
  %v2513 = vrsqrt.pop %v2501
  %v2514 = vmul.f32 %v2418, %v2502
  %v2515 = vmul.f32 %v2419, %v2503
  %v2516 = vmul.f32 %v2420, %v2504
  %v2517 = vmul.f32 %v2421, %v2505
  %v2518 = vmul.f32 %v2422, %v2506
  %v2519 = vmul.f32 %v2423, %v2507
  %v2520 = vmul.f32 %v2424, %v2508
  %v2521 = vmul.f32 %v2425, %v2509
  %v2522 = vmul.f32 %v2426, %v2510
  %v2523 = vmul.f32 %v2427, %v2511
  %v2524 = vmul.f32 %v2428, %v2512
  %v2525 = vmul.f32 %v2429, %v2513
  %v2527 = vlaneseq
  %v2528 = vshrl.u32 %v2527, 7
  %v2529 = vsub.s32 0, %v2528
  %v2530 = vrot.slane %v2368, %v2529
  %v2532 = vmul.f32 %v2514, %v2530
  %v2533 = vmul.f32 %v2515, %v2530
  %v2534 = vmul.f32 %v2516, %v2530
  %v2535 = vmul.f32 %v2517, %v2530
  %v2536 = vmul.f32 %v2518, %v2530
  %v2537 = vmul.f32 %v2519, %v2530
  %v2538 = vmul.f32 %v2520, %v2530
  %v2539 = vmul.f32 %v2521, %v2530
  %v2540 = vmul.f32 %v2522, %v2530
  %v2541 = vmul.f32 %v2523, %v2530
  %v2542 = vmul.f32 %v2524, %v2530
  %v2543 = vmul.f32 %v2525, %v2530
  %v2545 = vlaneseq
  %v2546 = vshrl.u32 %v2545, 7
  %v2547 = vsub.s32 0, %v2546
  %v2548 = vrot.slane %v2369, %v2547
  %v2550 = vadd.f32 %v2532, %v2548
  %v2551 = vadd.f32 %v2533, %v2548
  %v2552 = vadd.f32 %v2534, %v2548
  %v2553 = vadd.f32 %v2535, %v2548
  %v2554 = vadd.f32 %v2536, %v2548
  %v2555 = vadd.f32 %v2537, %v2548
  %v2556 = vadd.f32 %v2538, %v2548
  %v2557 = vadd.f32 %v2539, %v2548
  %v2558 = vadd.f32 %v2540, %v2548
  %v2559 = vadd.f32 %v2541, %v2548
  %v2560 = vadd.f32 %v2542, %v2548
  %v2561 = vadd.f32 %v2543, %v2548
  %s2562 = scalar_lea.vmem %s8, 40
  %v2563 = vld [vmem:[%s2562] sm:$0xff]
  %v2564 = vld [vmem:[%s2562 + $0x8] sm:$0xff]
  %v2565 = vld [vmem:[%s2562 + $0x10] sm:$0xff]
  %v2566 = vld [vmem:[%s2562 + $0x18] sm:$0xff]
  %v2567 = vld [vmem:[%s2562 + $0x20] sm:$0xf]
  %v2568 = vpack.c.bf16 %v2551, %v2550
  %v2569 = vpack.c.bf16 %v2553, %v2552
  %v2570 = vpack.c.bf16 %v2555, %v2554
  %v2571 = vpack.c.bf16 %v2557, %v2556
  %v2572 = vpack.c.bf16 %v2559, %v2558
  %v2573 = vpack.c.bf16 %v2561, %v2560
  %v2574 = vpack.c.bf16 %v2564, %v2563
  %v2575 = vpack.c.bf16 %v2566, %v2565
  %v2576 = vpack.c.bf16 %v2567, %v2567
  %s2577 = scalar_lea.vmem %s9, 1
  %v2578 = vld [vmem:[%s2577] sm:$0x1]
  %v2580 = vlaneseq
  %v2581 = vshrl.u32 %v2580, 7
  %v2582 = vsub.s32 0, %v2581
  %v2583 = vrot.slane %v2578, %v2582
  %v2586 = vsel %vm762, %v2568, 0
  %v2589 = vsel %vm762, %v2569, 0
  %v2592 = vsel %vm762, %v2570, 0
  %v2595 = vsel %vm762, %v2571, 0
  %v2598 = vsel %vm762, %v2572, 0
  %v2601 = vsel %vm762, %v2573, 0
  %v2604 = vsel %vm781, %v2576, 0
  %2606 = vmatprep.subr.bf16.mxu0 0
  %2607 = vmatpush1.bf16.msra.mxu0 0
  %2608 = vmatprep.subr.bf16.mxu0 0
  %2609 = vmatpush1.bf16.msra.mxu0 0
  %2610 = vmatprep.subr.bf16.mxu0 0
  %2611 = vmatpush1.bf16.msra.mxu0 0
  %2612 = vmatprep.subr.bf16.mxu0 0
  %2613 = vmatpush1.bf16.msra.mxu0 0
  %2614 = vmatprep.subr.bf16.mxu0 0
  %2615 = vmatpush1.bf16.msra.mxu0 0
  %2616 = vmatprep.subr.bf16.mxu0 0
  %2617 = vmatpush1.bf16.msra.mxu0 %v2604
  %2618 = vmatprep.subr.bf16.mxu0 0
  %2619 = vmatpush1.bf16.msra.mxu0 %v2575
  %2620 = vmatprep.subr.bf16.mxu0 0
  %2621 = vmatpush1.bf16.msra.mxu0 %v2574
  %2622 = vmatprep.subr.bf16.mxu0 0
  %2623 = vmatpush2.bf16.msra.mxu0 0
  %2624 = vmatprep.subr.bf16.mxu0 0
  %2625 = vmatpush2.bf16.msra.mxu0 0
  %2626 = vmatprep.subr.bf16.mxu0 0
  %2627 = vmatpush2.bf16.msra.mxu0 0
  %2628 = vmatprep.subr.bf16.mxu0 0
  %2629 = vmatpush2.bf16.msra.mxu0 0
  %2630 = vmatprep.subr.bf16.mxu0 0
  %2631 = vmatpush2.bf16.msra.mxu0 0
  %2632 = vmatprep.subr.bf16.mxu0 0
  %2633 = vmatpush2.bf16.msra.mxu0 0
  %2634 = vmatprep.subr.bf16.mxu0 0
  %2635 = vmatpush2.bf16.msra.mxu0 0
  %2636 = vmatprep.subr.bf16.mxu0 0
  %2637 = vmatpush2.bf16.msra.mxu0 0
  %2638 = vmatprep.mubr.bf16.mxu0 0
  %2639 = vmatmul.mubr.bf16.gmra.mxu0 %v2586
  %v2640 = vpop.f32.mrf.mxu0
  %v2641 = vadd.f32 %v2583, %v2640
  %v2642 = vpop.f32.mrf.mxu0
  %v2643 = vpop.f32.mrf.mxu0
  %v2644 = vadd.f32 %v2583, %v2643
  %v2645 = vpop.f32.mrf.mxu0
  %2646 = vmatprep.mubr.bf16.mxu0 0
  %2647 = vmatmul.mubr.bf16.gmra.mxu0 %v2589
  %v2648 = vpop.f32.mrf.mxu0
  %v2649 = vadd.f32 %v2583, %v2648
  %v2650 = vpop.f32.mrf.mxu0
  %v2651 = vpop.f32.mrf.mxu0
  %v2652 = vadd.f32 %v2583, %v2651
  %v2653 = vpop.f32.mrf.mxu0
  %2654 = vmatprep.mubr.bf16.mxu0 0
  %2655 = vmatmul.mubr.bf16.gmra.mxu0 %v2592
  %v2656 = vpop.f32.mrf.mxu0
  %v2657 = vadd.f32 %v2583, %v2656
  %v2658 = vpop.f32.mrf.mxu0
  %v2659 = vpop.f32.mrf.mxu0
  %v2660 = vadd.f32 %v2583, %v2659
  %v2661 = vpop.f32.mrf.mxu0
  %2662 = vmatprep.mubr.bf16.mxu0 0
  %2663 = vmatmul.mubr.bf16.gmra.mxu0 %v2595
  %v2664 = vpop.f32.mrf.mxu0
  %v2665 = vadd.f32 %v2583, %v2664
  %v2666 = vpop.f32.mrf.mxu0
  %v2667 = vpop.f32.mrf.mxu0
  %v2668 = vadd.f32 %v2583, %v2667
  %v2669 = vpop.f32.mrf.mxu0
  %2670 = vmatprep.mubr.bf16.mxu0 0
  %2671 = vmatmul.mubr.bf16.gmra.mxu0 %v2598
  %v2672 = vpop.f32.mrf.mxu0
  %v2673 = vadd.f32 %v2583, %v2672
  %v2674 = vpop.f32.mrf.mxu0
  %v2675 = vpop.f32.mrf.mxu0
  %v2676 = vadd.f32 %v2583, %v2675
  %v2677 = vpop.f32.mrf.mxu0
  %2678 = vmatprep.mubr.bf16.mxu0 0
  %2679 = vmatmul.mubr.bf16.gmra.mxu0 %v2601
  %v2680 = vpop.f32.mrf.mxu0
  %v2681 = vadd.f32 %v2583, %v2680
  %v2682 = vpop.f32.mrf.mxu0
  %v2683 = vpop.f32.mrf.mxu0
  %v2684 = vadd.f32 %v2583, %v2683
  %v2685 = vpop.f32.mrf.mxu0
  %2686 = vdwg.mxu0
  %v2687 = vpack.c.bf16 %v2644, %v2641
  %v2688 = vpack.c.bf16 %v2652, %v2649
  %v2689 = vpack.c.bf16 %v2660, %v2657
  %v2690 = vpack.c.bf16 %v2668, %v2665
  %v2691 = vpack.c.bf16 %v2676, %v2673
  %v2692 = vpack.c.bf16 %v2684, %v2681
  %2699 = vrot.lane.b32.xlu0 %v2687, 92
  %v2700 = vpop.permute.xlu0 %2699
  %2701 = vrot.lane.b32.xlu0 %v2688, 92
  %v2702 = vpop.permute.xlu0 %2701
  %2703 = vrot.lane.b32.xlu0 %v2689, 92
  %v2704 = vpop.permute.xlu0 %2703
  %2705 = vrot.lane.b32.xlu0 %v2690, 92
  %v2706 = vpop.permute.xlu0 %2705
  %2707 = vrot.lane.b32.xlu0 %v2691, 92
  %v2708 = vpop.permute.xlu0 %2707
  %2709 = vrot.lane.b32.xlu0 %v2692, 92
  %v2710 = vpop.permute.xlu0 %2709
  %v2712 = vsel %vm601, %v2687, 0
  %v2715 = vsel %vm601, %v2688, 0
  %v2718 = vsel %vm601, %v2689, 0
  %v2721 = vsel %vm601, %v2690, 0
  %v2724 = vsel %vm601, %v2691, 0
  %v2727 = vsel %vm601, %v2692, 0
  %v2730 = vsel %vm601, %v2700, 0
  %v2733 = vsel %vm601, %v2702, 0
  %v2736 = vsel %vm601, %v2704, 0
  %v2739 = vsel %vm601, %v2706, 0
  %v2742 = vsel %vm601, %v2708, 0
  %v2745 = vsel %vm601, %v2710, 0
  %2747 = vmatprep.subr.bf16.mxu0 0
  %2748 = vmatpush1.bf16.xpose.msra.mxu0 0
  %2749 = vmatprep.subr.bf16.mxu0 0
  %2750 = vmatpush1.bf16.xpose.msra.mxu0 0
  %2751 = vmatprep.subr.bf16.mxu0 0
  %2752 = vmatpush1.bf16.xpose.msra.mxu0 %v2745
  %2753 = vmatprep.subr.bf16.mxu0 0
  %2754 = vmatpush1.bf16.xpose.msra.mxu0 %v2742
  %2755 = vmatprep.subr.bf16.mxu0 0
  %2756 = vmatpush1.bf16.xpose.msra.mxu0 %v2739
  %2757 = vmatprep.subr.bf16.mxu0 0
  %2758 = vmatpush1.bf16.xpose.msra.mxu0 %v2736
  %2759 = vmatprep.subr.bf16.mxu0 0
  %2760 = vmatpush1.bf16.xpose.msra.mxu0 %v2733
  %2761 = vmatprep.subr.bf16.mxu0 0
  %2762 = vmatpush1.bf16.xpose.msra.mxu0 %v2730
  %2763 = vmatprep.subr.bf16.mxu0 0
  %2764 = vmatpush2.bf16.xpose.msra.mxu0 0
  %2765 = vmatprep.subr.bf16.mxu0 0
  %2766 = vmatpush2.bf16.xpose.msra.mxu0 0
  %2767 = vmatprep.subr.bf16.mxu0 0
  %2768 = vmatpush2.bf16.xpose.msra.mxu0 0
  %2769 = vmatprep.subr.bf16.mxu0 0
  %2770 = vmatpush2.bf16.xpose.msra.mxu0 0
  %2771 = vmatprep.subr.bf16.mxu0 0
  %2772 = vmatpush2.bf16.xpose.msra.mxu0 0
  %2773 = vmatprep.subr.bf16.mxu0 0
  %2774 = vmatpush2.bf16.xpose.msra.mxu0 0
  %2775 = vmatprep.subr.bf16.mxu0 0
  %2776 = vmatpush2.bf16.xpose.msra.mxu0 0
  %2777 = vmatprep.subr.bf16.mxu0 0
  %2778 = vmatpush2.bf16.xpose.msra.mxu0 0
  %2779 = vmatprep.mubr.bf16.mxu0 0
  %2780 = vmatmul.mubr.bf16.gmra.mxu0 %v2712
  %v2781 = vpop.f32.mrf.mxu0
  %v2782 = vadd.f32 0.0, %v2781
  %v2783 = vpop.f32.mrf.mxu0
  %v2784 = vpop.f32.mrf.mxu0
  %v2785 = vadd.f32 0.0, %v2784
  %v2786 = vpop.f32.mrf.mxu0
  %2787 = vmatprep.mubr.bf16.mxu0 0
  %2788 = vmatmul.mubr.bf16.gmra.mxu0 %v2715
  %v2789 = vpop.f32.mrf.mxu0
  %v2790 = vadd.f32 0.0, %v2789
  %v2791 = vpop.f32.mrf.mxu0
  %v2792 = vpop.f32.mrf.mxu0
  %v2793 = vadd.f32 0.0, %v2792
  %v2794 = vpop.f32.mrf.mxu0
  %2795 = vmatprep.mubr.bf16.mxu0 0
  %2796 = vmatmul.mubr.bf16.gmra.mxu0 %v2718
  %v2797 = vpop.f32.mrf.mxu0
  %v2798 = vadd.f32 0.0, %v2797
  %v2799 = vpop.f32.mrf.mxu0
  %v2800 = vpop.f32.mrf.mxu0
  %v2801 = vadd.f32 0.0, %v2800
  %v2802 = vpop.f32.mrf.mxu0
  %2803 = vmatprep.mubr.bf16.mxu0 0
  %2804 = vmatmul.mubr.bf16.gmra.mxu0 %v2721
  %v2805 = vpop.f32.mrf.mxu0
  %v2806 = vadd.f32 0.0, %v2805
  %v2807 = vpop.f32.mrf.mxu0
  %v2808 = vpop.f32.mrf.mxu0
  %v2809 = vadd.f32 0.0, %v2808
  %v2810 = vpop.f32.mrf.mxu0
  %2811 = vmatprep.mubr.bf16.mxu0 0
  %2812 = vmatmul.mubr.bf16.gmra.mxu0 %v2724
  %v2813 = vpop.f32.mrf.mxu0
  %v2814 = vadd.f32 0.0, %v2813
  %v2815 = vpop.f32.mrf.mxu0
  %v2816 = vpop.f32.mrf.mxu0
  %v2817 = vadd.f32 0.0, %v2816
  %v2818 = vpop.f32.mrf.mxu0
  %2819 = vmatprep.mubr.bf16.mxu0 0
  %2820 = vmatmul.mubr.bf16.gmra.mxu0 %v2727
  %v2821 = vpop.f32.mrf.mxu0
  %v2822 = vadd.f32 0.0, %v2821
  %v2823 = vpop.f32.mrf.mxu0
  %v2824 = vpop.f32.mrf.mxu0
  %v2825 = vadd.f32 0.0, %v2824
  %v2826 = vpop.f32.mrf.mxu0
  %2827 = vdwg.mxu0
  %v2828 = vmul.f32 %v2782, 0.23570226
  %v2829 = vmul.f32 %v2785, 0.23570226
  %v2830 = vmul.f32 %v2790, 0.23570226
  %v2831 = vmul.f32 %v2793, 0.23570226
  %v2832 = vmul.f32 %v2798, 0.23570226
  %v2833 = vmul.f32 %v2801, 0.23570226
  %v2834 = vmul.f32 %v2806, 0.23570226
  %v2835 = vmul.f32 %v2809, 0.23570226
  %v2836 = vmul.f32 %v2814, 0.23570226
  %v2837 = vmul.f32 %v2817, 0.23570226
  %v2838 = vmul.f32 %v2822, 0.23570226
  %v2839 = vmul.f32 %v2825, 0.23570226
  %v2840 = vadd.f32 %v2828, %v729
  %v2841 = vadd.f32 %v2829, %v730
  %v2842 = vadd.f32 %v2830, %v731
  %v2843 = vadd.f32 %v2831, %v732
  %v2844 = vadd.f32 %v2832, %v733
  %v2845 = vadd.f32 %v2833, %v734
  %v2846 = vadd.f32 %v2834, %v735
  %v2847 = vadd.f32 %v2835, %v736
  %v2848 = vadd.f32 %v2836, %v737
  %v2849 = vadd.f32 %v2837, %v738
  %v2850 = vadd.f32 %v2838, %v739
  %v2851 = vadd.f32 %v2839, %v740
  %v2852 = vsel %vm110, %v2840, -inf
  %2853 = vmax.xlane.f32.xlu0 %v2852
  %v2854 = vpop.xlane.xlu0 %2853
  %v2855 = vsel %vm110, %v2841, -inf
  %2856 = vmax.xlane.f32.xlu0 %v2855
  %v2857 = vpop.xlane.xlu0 %2856
  %v2858 = vsel %vm110, %v2842, -inf
  %2859 = vmax.xlane.f32.xlu0 %v2858
  %v2860 = vpop.xlane.xlu0 %2859
  %v2861 = vsel %vm110, %v2843, -inf
  %2862 = vmax.xlane.f32.xlu0 %v2861
  %v2863 = vpop.xlane.xlu0 %2862
  %v2864 = vsel %vm110, %v2844, -inf
  %2865 = vmax.xlane.f32.xlu0 %v2864
  %v2866 = vpop.xlane.xlu0 %2865
  %v2867 = vsel %vm110, %v2845, -inf
  %2868 = vmax.xlane.f32.xlu0 %v2867
  %v2869 = vpop.xlane.xlu0 %2868
  %v2870 = vsel %vm110, %v2846, -inf
  %2871 = vmax.xlane.f32.xlu0 %v2870
  %v2872 = vpop.xlane.xlu0 %2871
  %v2873 = vsel %vm110, %v2847, -inf
  %2874 = vmax.xlane.f32.xlu0 %v2873
  %v2875 = vpop.xlane.xlu0 %2874
  %v2876 = vsel %vm110, %v2848, -inf
  %2877 = vmax.xlane.f32.xlu0 %v2876
  %v2878 = vpop.xlane.xlu0 %2877
  %v2879 = vsel %vm110, %v2849, -inf
  %2880 = vmax.xlane.f32.xlu0 %v2879
  %v2881 = vpop.xlane.xlu0 %2880
  %v2882 = vsel %vm110, %v2850, -inf
  %2883 = vmax.xlane.f32.xlu0 %v2882
  %v2884 = vpop.xlane.xlu0 %2883
  %v2885 = vsel %vm110, %v2851, -inf
  %2886 = vmax.xlane.f32.xlu0 %v2885
  %v2887 = vpop.xlane.xlu0 %2886
  %v2888 = vsub.f32 %v2840, %v2854
  %v2889 = vsub.f32 %v2841, %v2857
  %v2890 = vsub.f32 %v2842, %v2860
  %v2891 = vsub.f32 %v2843, %v2863
  %v2892 = vsub.f32 %v2844, %v2866
  %v2893 = vsub.f32 %v2845, %v2869
  %v2894 = vsub.f32 %v2846, %v2872
  %v2895 = vsub.f32 %v2847, %v2875
  %v2896 = vsub.f32 %v2848, %v2878
  %v2897 = vsub.f32 %v2849, %v2881
  %v2898 = vsub.f32 %v2850, %v2884
  %v2899 = vsub.f32 %v2851, %v2887
  %v2900 = vmul.f32 %v2888, 1.442695
  %v2901 = vpow.pop %v2900
  %v2902 = vmul.f32 %v2889, 1.442695
  %v2903 = vpow.pop %v2902
  %v2904 = vmul.f32 %v2890, 1.442695
  %v2905 = vpow.pop %v2904
  %v2906 = vmul.f32 %v2891, 1.442695
  %v2907 = vpow.pop %v2906
  %v2908 = vmul.f32 %v2892, 1.442695
  %v2909 = vpow.pop %v2908
  %v2910 = vmul.f32 %v2893, 1.442695
  %v2911 = vpow.pop %v2910
  %v2912 = vmul.f32 %v2894, 1.442695
  %v2913 = vpow.pop %v2912
  %v2914 = vmul.f32 %v2895, 1.442695
  %v2915 = vpow.pop %v2914
  %v2916 = vmul.f32 %v2896, 1.442695
  %v2917 = vpow.pop %v2916
  %v2918 = vmul.f32 %v2897, 1.442695
  %v2919 = vpow.pop %v2918
  %v2920 = vmul.f32 %v2898, 1.442695
  %v2921 = vpow.pop %v2920
  %v2922 = vmul.f32 %v2899, 1.442695
  %v2923 = vpow.pop %v2922
  %v2924 = vsel %vm110, %v2901, 0.0
  %2925 = vadd.xlane.f32.xlu0 %v2924
  %v2926 = vpop.xlane.xlu0 %2925
  %v2927 = vsel %vm110, %v2903, 0.0
  %2928 = vadd.xlane.f32.xlu0 %v2927
  %v2929 = vpop.xlane.xlu0 %2928
  %v2930 = vsel %vm110, %v2905, 0.0
  %2931 = vadd.xlane.f32.xlu0 %v2930
  %v2932 = vpop.xlane.xlu0 %2931
  %v2933 = vsel %vm110, %v2907, 0.0
  %2934 = vadd.xlane.f32.xlu0 %v2933
  %v2935 = vpop.xlane.xlu0 %2934
  %v2936 = vsel %vm110, %v2909, 0.0
  %2937 = vadd.xlane.f32.xlu0 %v2936
  %v2938 = vpop.xlane.xlu0 %2937
  %v2939 = vsel %vm110, %v2911, 0.0
  %2940 = vadd.xlane.f32.xlu0 %v2939
  %v2941 = vpop.xlane.xlu0 %2940
  %v2942 = vsel %vm110, %v2913, 0.0
  %2943 = vadd.xlane.f32.xlu0 %v2942
  %v2944 = vpop.xlane.xlu0 %2943
  %v2945 = vsel %vm110, %v2915, 0.0
  %2946 = vadd.xlane.f32.xlu0 %v2945
  %v2947 = vpop.xlane.xlu0 %2946
  %v2948 = vsel %vm110, %v2917, 0.0
  %2949 = vadd.xlane.f32.xlu0 %v2948
  %v2950 = vpop.xlane.xlu0 %2949
  %v2951 = vsel %vm110, %v2919, 0.0
  %2952 = vadd.xlane.f32.xlu0 %v2951
  %v2953 = vpop.xlane.xlu0 %2952
  %v2954 = vsel %vm110, %v2921, 0.0
  %2955 = vadd.xlane.f32.xlu0 %v2954
  %v2956 = vpop.xlane.xlu0 %2955
  %v2957 = vsel %vm110, %v2923, 0.0
  %2958 = vadd.xlane.f32.xlu0 %v2957
  %v2959 = vpop.xlane.xlu0 %2958
  %v2960 = vrcp.pop %v2926
  %v2961 = vrcp.pop %v2929
  %v2962 = vrcp.pop %v2932
  %v2963 = vrcp.pop %v2935
  %v2964 = vrcp.pop %v2938
  %v2965 = vrcp.pop %v2941
  %v2966 = vrcp.pop %v2944
  %v2967 = vrcp.pop %v2947
  %v2968 = vrcp.pop %v2950
  %v2969 = vrcp.pop %v2953
  %v2970 = vrcp.pop %v2956
  %v2971 = vrcp.pop %v2959
  %v2972 = vmul.f32 %v2901, %v2960
  %v2973 = vmul.f32 %v2903, %v2961
  %v2974 = vmul.f32 %v2905, %v2962
  %v2975 = vmul.f32 %v2907, %v2963
  %v2976 = vmul.f32 %v2909, %v2964
  %v2977 = vmul.f32 %v2911, %v2965
  %v2978 = vmul.f32 %v2913, %v2966
  %v2979 = vmul.f32 %v2915, %v2967
  %v2980 = vmul.f32 %v2917, %v2968
  %v2981 = vmul.f32 %v2919, %v2969
  %v2982 = vmul.f32 %v2921, %v2970
  %v2983 = vmul.f32 %v2923, %v2971
  %v2984 = vpack.c.bf16 %v2973, %v2972
  %v2985 = vpack.c.bf16 %v2975, %v2974
  %v2986 = vpack.c.bf16 %v2977, %v2976
  %v2987 = vpack.c.bf16 %v2979, %v2978
  %v2988 = vpack.c.bf16 %v2981, %v2980
  %v2989 = vpack.c.bf16 %v2983, %v2982
  %2990 = vrot.lane.b32.xlu0 %v2687, 56
  %v2991 = vpop.permute.xlu0 %2990
  %2992 = vrot.lane.b32.xlu0 %v2688, 56
  %v2993 = vpop.permute.xlu0 %2992
  %2994 = vrot.lane.b32.xlu0 %v2689, 56
  %v2995 = vpop.permute.xlu0 %2994
  %2996 = vrot.lane.b32.xlu0 %v2690, 56
  %v2997 = vpop.permute.xlu0 %2996
  %2998 = vrot.lane.b32.xlu0 %v2691, 56
  %v2999 = vpop.permute.xlu0 %2998
  %3000 = vrot.lane.b32.xlu0 %v2692, 56
  %v3001 = vpop.permute.xlu0 %3000
  %v3009 = vsel %vm110, %v2984, 0
  %v3012 = vsel %vm110, %v2985, 0
  %v3015 = vsel %vm110, %v2986, 0
  %v3018 = vsel %vm110, %v2987, 0
  %v3021 = vsel %vm110, %v2988, 0
  %v3024 = vsel %vm110, %v2989, 0
  %3026 = vmatprep.subr.bf16.mxu0 0
  %3027 = vmatpush1.bf16.msra.mxu0 0
  %3028 = vmatprep.subr.bf16.mxu0 0
  %3029 = vmatpush1.bf16.msra.mxu0 0
  %3030 = vmatprep.subr.bf16.mxu0 0
  %3031 = vmatpush1.bf16.msra.mxu0 %v3001
  %3032 = vmatprep.subr.bf16.mxu0 0
  %3033 = vmatpush1.bf16.msra.mxu0 %v2999
  %3034 = vmatprep.subr.bf16.mxu0 0
  %3035 = vmatpush1.bf16.msra.mxu0 %v2997
  %3036 = vmatprep.subr.bf16.mxu0 0
  %3037 = vmatpush1.bf16.msra.mxu0 %v2995
  %3038 = vmatprep.subr.bf16.mxu0 0
  %3039 = vmatpush1.bf16.msra.mxu0 %v2993
  %3040 = vmatprep.subr.bf16.mxu0 0
  %3041 = vmatpush1.bf16.msra.mxu0 %v2991
  %3042 = vmatprep.subr.bf16.mxu0 0
  %3043 = vmatpush2.bf16.msra.mxu0 0
  %3044 = vmatprep.subr.bf16.mxu0 0
  %3045 = vmatpush2.bf16.msra.mxu0 0
  %3046 = vmatprep.subr.bf16.mxu0 0
  %3047 = vmatpush2.bf16.msra.mxu0 0
  %3048 = vmatprep.subr.bf16.mxu0 0
  %3049 = vmatpush2.bf16.msra.mxu0 0
  %3050 = vmatprep.subr.bf16.mxu0 0
  %3051 = vmatpush2.bf16.msra.mxu0 0
  %3052 = vmatprep.subr.bf16.mxu0 0
  %3053 = vmatpush2.bf16.msra.mxu0 0
  %3054 = vmatprep.subr.bf16.mxu0 0
  %3055 = vmatpush2.bf16.msra.mxu0 0
  %3056 = vmatprep.subr.bf16.mxu0 0
  %3057 = vmatpush2.bf16.msra.mxu0 0
  %3058 = vmatprep.mubr.bf16.mxu0 0
  %3059 = vmatmul.mubr.bf16.gmra.mxu0 %v3009
  %v3060 = vpop.f32.mrf.mxu0
  %v3061 = vadd.f32 0.0, %v3060
  %v3062 = vpop.f32.mrf.mxu0
  %v3063 = vpop.f32.mrf.mxu0
  %v3064 = vadd.f32 0.0, %v3063
  %v3065 = vpop.f32.mrf.mxu0
  %3066 = vmatprep.mubr.bf16.mxu0 0
  %3067 = vmatmul.mubr.bf16.gmra.mxu0 %v3012
  %v3068 = vpop.f32.mrf.mxu0
  %v3069 = vadd.f32 0.0, %v3068
  %v3070 = vpop.f32.mrf.mxu0
  %v3071 = vpop.f32.mrf.mxu0
  %v3072 = vadd.f32 0.0, %v3071
  %v3073 = vpop.f32.mrf.mxu0
  %3074 = vmatprep.mubr.bf16.mxu0 0
  %3075 = vmatmul.mubr.bf16.gmra.mxu0 %v3015
  %v3076 = vpop.f32.mrf.mxu0
  %v3077 = vadd.f32 0.0, %v3076
  %v3078 = vpop.f32.mrf.mxu0
  %v3079 = vpop.f32.mrf.mxu0
  %v3080 = vadd.f32 0.0, %v3079
  %v3081 = vpop.f32.mrf.mxu0
  %3082 = vmatprep.mubr.bf16.mxu0 0
  %3083 = vmatmul.mubr.bf16.gmra.mxu0 %v3018
  %v3084 = vpop.f32.mrf.mxu0
  %v3085 = vadd.f32 0.0, %v3084
  %v3086 = vpop.f32.mrf.mxu0
  %v3087 = vpop.f32.mrf.mxu0
  %v3088 = vadd.f32 0.0, %v3087
  %v3089 = vpop.f32.mrf.mxu0
  %3090 = vmatprep.mubr.bf16.mxu0 0
  %3091 = vmatmul.mubr.bf16.gmra.mxu0 %v3021
  %v3092 = vpop.f32.mrf.mxu0
  %v3093 = vadd.f32 0.0, %v3092
  %v3094 = vpop.f32.mrf.mxu0
  %v3095 = vpop.f32.mrf.mxu0
  %v3096 = vadd.f32 0.0, %v3095
  %v3097 = vpop.f32.mrf.mxu0
  %3098 = vmatprep.mubr.bf16.mxu0 0
  %3099 = vmatmul.mubr.bf16.gmra.mxu0 %v3024
  %v3100 = vpop.f32.mrf.mxu0
  %v3101 = vadd.f32 0.0, %v3100
  %v3102 = vpop.f32.mrf.mxu0
  %v3103 = vpop.f32.mrf.mxu0
  %v3104 = vadd.f32 0.0, %v3103
  %v3105 = vpop.f32.mrf.mxu0
  %3106 = vdwg.mxu0
  %3107 = vrot.lane.b32.xlu0 %v2687, 110
  %v3108 = vpop.permute.xlu0 %3107
  %3109 = vrot.lane.b32.xlu0 %v2688, 110
  %v3110 = vpop.permute.xlu0 %3109
  %3111 = vrot.lane.b32.xlu0 %v2689, 110
  %v3112 = vpop.permute.xlu0 %3111
  %3113 = vrot.lane.b32.xlu0 %v2690, 110
  %v3114 = vpop.permute.xlu0 %3113
  %3115 = vrot.lane.b32.xlu0 %v2691, 110
  %v3116 = vpop.permute.xlu0 %3115
  %3117 = vrot.lane.b32.xlu0 %v2692, 110
  %v3118 = vpop.permute.xlu0 %3117
  %3119 = vrot.lane.b32.xlu0 %v2687, 74
  %v3120 = vpop.permute.xlu0 %3119
  %3121 = vrot.lane.b32.xlu0 %v2688, 74
  %v3122 = vpop.permute.xlu0 %3121
  %3123 = vrot.lane.b32.xlu0 %v2689, 74
  %v3124 = vpop.permute.xlu0 %3123
  %3125 = vrot.lane.b32.xlu0 %v2690, 74
  %v3126 = vpop.permute.xlu0 %3125
  %3127 = vrot.lane.b32.xlu0 %v2691, 74
  %v3128 = vpop.permute.xlu0 %3127
  %3129 = vrot.lane.b32.xlu0 %v2692, 74
  %v3130 = vpop.permute.xlu0 %3129
  %v3132 = vsel %vm601, %v3108, 0
  %v3135 = vsel %vm601, %v3110, 0
  %v3138 = vsel %vm601, %v3112, 0
  %v3141 = vsel %vm601, %v3114, 0
  %v3144 = vsel %vm601, %v3116, 0
  %v3147 = vsel %vm601, %v3118, 0
  %v3150 = vsel %vm601, %v3120, 0
  %v3153 = vsel %vm601, %v3122, 0
  %v3156 = vsel %vm601, %v3124, 0
  %v3159 = vsel %vm601, %v3126, 0
  %v3162 = vsel %vm601, %v3128, 0
  %v3165 = vsel %vm601, %v3130, 0
  %3167 = vmatprep.subr.bf16.mxu0 0
  %3168 = vmatpush1.bf16.xpose.msra.mxu0 0
  %3169 = vmatprep.subr.bf16.mxu0 0
  %3170 = vmatpush1.bf16.xpose.msra.mxu0 0
  %3171 = vmatprep.subr.bf16.mxu0 0
  %3172 = vmatpush1.bf16.xpose.msra.mxu0 %v3165
  %3173 = vmatprep.subr.bf16.mxu0 0
  %3174 = vmatpush1.bf16.xpose.msra.mxu0 %v3162
  %3175 = vmatprep.subr.bf16.mxu0 0
  %3176 = vmatpush1.bf16.xpose.msra.mxu0 %v3159
  %3177 = vmatprep.subr.bf16.mxu0 0
  %3178 = vmatpush1.bf16.xpose.msra.mxu0 %v3156
  %3179 = vmatprep.subr.bf16.mxu0 0
  %3180 = vmatpush1.bf16.xpose.msra.mxu0 %v3153
  %3181 = vmatprep.subr.bf16.mxu0 0
  %3182 = vmatpush1.bf16.xpose.msra.mxu0 %v3150
  %3183 = vmatprep.subr.bf16.mxu0 0
  %3184 = vmatpush2.bf16.xpose.msra.mxu0 0
  %3185 = vmatprep.subr.bf16.mxu0 0
  %3186 = vmatpush2.bf16.xpose.msra.mxu0 0
  %3187 = vmatprep.subr.bf16.mxu0 0
  %3188 = vmatpush2.bf16.xpose.msra.mxu0 0
  %3189 = vmatprep.subr.bf16.mxu0 0
  %3190 = vmatpush2.bf16.xpose.msra.mxu0 0
  %3191 = vmatprep.subr.bf16.mxu0 0
  %3192 = vmatpush2.bf16.xpose.msra.mxu0 0
  %3193 = vmatprep.subr.bf16.mxu0 0
  %3194 = vmatpush2.bf16.xpose.msra.mxu0 0
  %3195 = vmatprep.subr.bf16.mxu0 0
  %3196 = vmatpush2.bf16.xpose.msra.mxu0 0
  %3197 = vmatprep.subr.bf16.mxu0 0
  %3198 = vmatpush2.bf16.xpose.msra.mxu0 0
  %3199 = vmatprep.mubr.bf16.mxu0 0
  %3200 = vmatmul.mubr.bf16.gmra.mxu0 %v3132
  %v3201 = vpop.f32.mrf.mxu0
  %v3202 = vadd.f32 0.0, %v3201
  %v3203 = vpop.f32.mrf.mxu0
  %v3204 = vpop.f32.mrf.mxu0
  %v3205 = vadd.f32 0.0, %v3204
  %v3206 = vpop.f32.mrf.mxu0
  %3207 = vmatprep.mubr.bf16.mxu0 0
  %3208 = vmatmul.mubr.bf16.gmra.mxu0 %v3135
  %v3209 = vpop.f32.mrf.mxu0
  %v3210 = vadd.f32 0.0, %v3209
  %v3211 = vpop.f32.mrf.mxu0
  %v3212 = vpop.f32.mrf.mxu0
  %v3213 = vadd.f32 0.0, %v3212
  %v3214 = vpop.f32.mrf.mxu0
  %3215 = vmatprep.mubr.bf16.mxu0 0
  %3216 = vmatmul.mubr.bf16.gmra.mxu0 %v3138
  %v3217 = vpop.f32.mrf.mxu0
  %v3218 = vadd.f32 0.0, %v3217
  %v3219 = vpop.f32.mrf.mxu0
  %v3220 = vpop.f32.mrf.mxu0
  %v3221 = vadd.f32 0.0, %v3220
  %v3222 = vpop.f32.mrf.mxu0
  %3223 = vmatprep.mubr.bf16.mxu0 0
  %3224 = vmatmul.mubr.bf16.gmra.mxu0 %v3141
  %v3225 = vpop.f32.mrf.mxu0
  %v3226 = vadd.f32 0.0, %v3225
  %v3227 = vpop.f32.mrf.mxu0
  %v3228 = vpop.f32.mrf.mxu0
  %v3229 = vadd.f32 0.0, %v3228
  %v3230 = vpop.f32.mrf.mxu0
  %3231 = vmatprep.mubr.bf16.mxu0 0
  %3232 = vmatmul.mubr.bf16.gmra.mxu0 %v3144
  %v3233 = vpop.f32.mrf.mxu0
  %v3234 = vadd.f32 0.0, %v3233
  %v3235 = vpop.f32.mrf.mxu0
  %v3236 = vpop.f32.mrf.mxu0
  %v3237 = vadd.f32 0.0, %v3236
  %v3238 = vpop.f32.mrf.mxu0
  %3239 = vmatprep.mubr.bf16.mxu0 0
  %3240 = vmatmul.mubr.bf16.gmra.mxu0 %v3147
  %v3241 = vpop.f32.mrf.mxu0
  %v3242 = vadd.f32 0.0, %v3241
  %v3243 = vpop.f32.mrf.mxu0
  %v3244 = vpop.f32.mrf.mxu0
  %v3245 = vadd.f32 0.0, %v3244
  %v3246 = vpop.f32.mrf.mxu0
  %3247 = vdwg.mxu0
  %v3248 = vmul.f32 %v3202, 0.23570226
  %v3249 = vmul.f32 %v3205, 0.23570226
  %v3250 = vmul.f32 %v3210, 0.23570226
  %v3251 = vmul.f32 %v3213, 0.23570226
  %v3252 = vmul.f32 %v3218, 0.23570226
  %v3253 = vmul.f32 %v3221, 0.23570226
  %v3254 = vmul.f32 %v3226, 0.23570226
  %v3255 = vmul.f32 %v3229, 0.23570226
  %v3256 = vmul.f32 %v3234, 0.23570226
  %v3257 = vmul.f32 %v3237, 0.23570226
  %v3258 = vmul.f32 %v3242, 0.23570226
  %v3259 = vmul.f32 %v3245, 0.23570226
  %v3260 = vadd.f32 %v3248, %v729
  %v3261 = vadd.f32 %v3249, %v730
  %v3262 = vadd.f32 %v3250, %v731
  %v3263 = vadd.f32 %v3251, %v732
  %v3264 = vadd.f32 %v3252, %v733
  %v3265 = vadd.f32 %v3253, %v734
  %v3266 = vadd.f32 %v3254, %v735
  %v3267 = vadd.f32 %v3255, %v736
  %v3268 = vadd.f32 %v3256, %v737
  %v3269 = vadd.f32 %v3257, %v738
  %v3270 = vadd.f32 %v3258, %v739
  %v3271 = vadd.f32 %v3259, %v740
  %v3272 = vsel %vm110, %v3260, -inf
  %3273 = vmax.xlane.f32.xlu0 %v3272
  %v3274 = vpop.xlane.xlu0 %3273
  %v3275 = vsel %vm110, %v3261, -inf
  %3276 = vmax.xlane.f32.xlu0 %v3275
  %v3277 = vpop.xlane.xlu0 %3276
  %v3278 = vsel %vm110, %v3262, -inf
  %3279 = vmax.xlane.f32.xlu0 %v3278
  %v3280 = vpop.xlane.xlu0 %3279
  %v3281 = vsel %vm110, %v3263, -inf
  %3282 = vmax.xlane.f32.xlu0 %v3281
  %v3283 = vpop.xlane.xlu0 %3282
  %v3284 = vsel %vm110, %v3264, -inf
  %3285 = vmax.xlane.f32.xlu0 %v3284
  %v3286 = vpop.xlane.xlu0 %3285
  %v3287 = vsel %vm110, %v3265, -inf
  %3288 = vmax.xlane.f32.xlu0 %v3287
  %v3289 = vpop.xlane.xlu0 %3288
  %v3290 = vsel %vm110, %v3266, -inf
  %3291 = vmax.xlane.f32.xlu0 %v3290
  %v3292 = vpop.xlane.xlu0 %3291
  %v3293 = vsel %vm110, %v3267, -inf
  %3294 = vmax.xlane.f32.xlu0 %v3293
  %v3295 = vpop.xlane.xlu0 %3294
  %v3296 = vsel %vm110, %v3268, -inf
  %3297 = vmax.xlane.f32.xlu0 %v3296
  %v3298 = vpop.xlane.xlu0 %3297
  %v3299 = vsel %vm110, %v3269, -inf
  %3300 = vmax.xlane.f32.xlu0 %v3299
  %v3301 = vpop.xlane.xlu0 %3300
  %v3302 = vsel %vm110, %v3270, -inf
  %3303 = vmax.xlane.f32.xlu0 %v3302
  %v3304 = vpop.xlane.xlu0 %3303
  %v3305 = vsel %vm110, %v3271, -inf
  %3306 = vmax.xlane.f32.xlu0 %v3305
  %v3307 = vpop.xlane.xlu0 %3306
  %v3308 = vsub.f32 %v3260, %v3274
  %v3309 = vsub.f32 %v3261, %v3277
  %v3310 = vsub.f32 %v3262, %v3280
  %v3311 = vsub.f32 %v3263, %v3283
  %v3312 = vsub.f32 %v3264, %v3286
  %v3313 = vsub.f32 %v3265, %v3289
  %v3314 = vsub.f32 %v3266, %v3292
  %v3315 = vsub.f32 %v3267, %v3295
  %v3316 = vsub.f32 %v3268, %v3298
  %v3317 = vsub.f32 %v3269, %v3301
  %v3318 = vsub.f32 %v3270, %v3304
  %v3319 = vsub.f32 %v3271, %v3307
  %v3320 = vmul.f32 %v3308, 1.442695
  %v3321 = vpow.pop %v3320
  %v3322 = vmul.f32 %v3309, 1.442695
  %v3323 = vpow.pop %v3322
  %v3324 = vmul.f32 %v3310, 1.442695
  %v3325 = vpow.pop %v3324
  %v3326 = vmul.f32 %v3311, 1.442695
  %v3327 = vpow.pop %v3326
  %v3328 = vmul.f32 %v3312, 1.442695
  %v3329 = vpow.pop %v3328
  %v3330 = vmul.f32 %v3313, 1.442695
  %v3331 = vpow.pop %v3330
  %v3332 = vmul.f32 %v3314, 1.442695
  %v3333 = vpow.pop %v3332
  %v3334 = vmul.f32 %v3315, 1.442695
  %v3335 = vpow.pop %v3334
  %v3336 = vmul.f32 %v3316, 1.442695
  %v3337 = vpow.pop %v3336
  %v3338 = vmul.f32 %v3317, 1.442695
  %v3339 = vpow.pop %v3338
  %v3340 = vmul.f32 %v3318, 1.442695
  %v3341 = vpow.pop %v3340
  %v3342 = vmul.f32 %v3319, 1.442695
  %v3343 = vpow.pop %v3342
  %v3344 = vsel %vm110, %v3321, 0.0
  %3345 = vadd.xlane.f32.xlu0 %v3344
  %v3346 = vpop.xlane.xlu0 %3345
  %v3347 = vsel %vm110, %v3323, 0.0
  %3348 = vadd.xlane.f32.xlu0 %v3347
  %v3349 = vpop.xlane.xlu0 %3348
  %v3350 = vsel %vm110, %v3325, 0.0
  %3351 = vadd.xlane.f32.xlu0 %v3350
  %v3352 = vpop.xlane.xlu0 %3351
  %v3353 = vsel %vm110, %v3327, 0.0
  %3354 = vadd.xlane.f32.xlu0 %v3353
  %v3355 = vpop.xlane.xlu0 %3354
  %v3356 = vsel %vm110, %v3329, 0.0
  %3357 = vadd.xlane.f32.xlu0 %v3356
  %v3358 = vpop.xlane.xlu0 %3357
  %v3359 = vsel %vm110, %v3331, 0.0
  %3360 = vadd.xlane.f32.xlu0 %v3359
  %v3361 = vpop.xlane.xlu0 %3360
  %v3362 = vsel %vm110, %v3333, 0.0
  %3363 = vadd.xlane.f32.xlu0 %v3362
  %v3364 = vpop.xlane.xlu0 %3363
  %v3365 = vsel %vm110, %v3335, 0.0
  %3366 = vadd.xlane.f32.xlu0 %v3365
  %v3367 = vpop.xlane.xlu0 %3366
  %v3368 = vsel %vm110, %v3337, 0.0
  %3369 = vadd.xlane.f32.xlu0 %v3368
  %v3370 = vpop.xlane.xlu0 %3369
  %v3371 = vsel %vm110, %v3339, 0.0
  %3372 = vadd.xlane.f32.xlu0 %v3371
  %v3373 = vpop.xlane.xlu0 %3372
  %v3374 = vsel %vm110, %v3341, 0.0
  %3375 = vadd.xlane.f32.xlu0 %v3374
  %v3376 = vpop.xlane.xlu0 %3375
  %v3377 = vsel %vm110, %v3343, 0.0
  %3378 = vadd.xlane.f32.xlu0 %v3377
  %v3379 = vpop.xlane.xlu0 %3378
  %v3380 = vrcp.pop %v3346
  %v3381 = vrcp.pop %v3349
  %v3382 = vrcp.pop %v3352
  %v3383 = vrcp.pop %v3355
  %v3384 = vrcp.pop %v3358
  %v3385 = vrcp.pop %v3361
  %v3386 = vrcp.pop %v3364
  %v3387 = vrcp.pop %v3367
  %v3388 = vrcp.pop %v3370
  %v3389 = vrcp.pop %v3373
  %v3390 = vrcp.pop %v3376
  %v3391 = vrcp.pop %v3379
  %v3392 = vmul.f32 %v3321, %v3380
  %v3393 = vmul.f32 %v3323, %v3381
  %v3394 = vmul.f32 %v3325, %v3382
  %v3395 = vmul.f32 %v3327, %v3383
  %v3396 = vmul.f32 %v3329, %v3384
  %v3397 = vmul.f32 %v3331, %v3385
  %v3398 = vmul.f32 %v3333, %v3386
  %v3399 = vmul.f32 %v3335, %v3387
  %v3400 = vmul.f32 %v3337, %v3388
  %v3401 = vmul.f32 %v3339, %v3389
  %v3402 = vmul.f32 %v3341, %v3390
  %v3403 = vmul.f32 %v3343, %v3391
  %v3404 = vpack.c.bf16 %v3393, %v3392
  %v3405 = vpack.c.bf16 %v3395, %v3394
  %v3406 = vpack.c.bf16 %v3397, %v3396
  %v3407 = vpack.c.bf16 %v3399, %v3398
  %v3408 = vpack.c.bf16 %v3401, %v3400
  %v3409 = vpack.c.bf16 %v3403, %v3402
  %3410 = vrot.lane.b32.xlu0 %v2687, 38
  %v3411 = vpop.permute.xlu0 %3410
  %3412 = vrot.lane.b32.xlu0 %v2688, 38
  %v3413 = vpop.permute.xlu0 %3412
  %3414 = vrot.lane.b32.xlu0 %v2689, 38
  %v3415 = vpop.permute.xlu0 %3414
  %3416 = vrot.lane.b32.xlu0 %v2690, 38
  %v3417 = vpop.permute.xlu0 %3416
  %3418 = vrot.lane.b32.xlu0 %v2691, 38
  %v3419 = vpop.permute.xlu0 %3418
  %3420 = vrot.lane.b32.xlu0 %v2692, 38
  %v3421 = vpop.permute.xlu0 %3420
  %v3429 = vsel %vm110, %v3404, 0
  %v3432 = vsel %vm110, %v3405, 0
  %v3435 = vsel %vm110, %v3406, 0
  %v3438 = vsel %vm110, %v3407, 0
  %v3441 = vsel %vm110, %v3408, 0
  %v3444 = vsel %vm110, %v3409, 0
  %3446 = vmatprep.subr.bf16.mxu0 0
  %3447 = vmatpush1.bf16.msra.mxu0 0
  %3448 = vmatprep.subr.bf16.mxu0 0
  %3449 = vmatpush1.bf16.msra.mxu0 0
  %3450 = vmatprep.subr.bf16.mxu0 0
  %3451 = vmatpush1.bf16.msra.mxu0 %v3421
  %3452 = vmatprep.subr.bf16.mxu0 0
  %3453 = vmatpush1.bf16.msra.mxu0 %v3419
  %3454 = vmatprep.subr.bf16.mxu0 0
  %3455 = vmatpush1.bf16.msra.mxu0 %v3417
  %3456 = vmatprep.subr.bf16.mxu0 0
  %3457 = vmatpush1.bf16.msra.mxu0 %v3415
  %3458 = vmatprep.subr.bf16.mxu0 0
  %3459 = vmatpush1.bf16.msra.mxu0 %v3413
  %3460 = vmatprep.subr.bf16.mxu0 0
  %3461 = vmatpush1.bf16.msra.mxu0 %v3411
  %3462 = vmatprep.subr.bf16.mxu0 0
  %3463 = vmatpush2.bf16.msra.mxu0 0
  %3464 = vmatprep.subr.bf16.mxu0 0
  %3465 = vmatpush2.bf16.msra.mxu0 0
  %3466 = vmatprep.subr.bf16.mxu0 0
  %3467 = vmatpush2.bf16.msra.mxu0 0
  %3468 = vmatprep.subr.bf16.mxu0 0
  %3469 = vmatpush2.bf16.msra.mxu0 0
  %3470 = vmatprep.subr.bf16.mxu0 0
  %3471 = vmatpush2.bf16.msra.mxu0 0
  %3472 = vmatprep.subr.bf16.mxu0 0
  %3473 = vmatpush2.bf16.msra.mxu0 0
  %3474 = vmatprep.subr.bf16.mxu0 0
  %3475 = vmatpush2.bf16.msra.mxu0 0
  %3476 = vmatprep.subr.bf16.mxu0 0
  %3477 = vmatpush2.bf16.msra.mxu0 0
  %3478 = vmatprep.mubr.bf16.mxu0 0
  %3479 = vmatmul.mubr.bf16.gmra.mxu0 %v3429
  %v3480 = vpop.f32.mrf.mxu0
  %v3481 = vadd.f32 0.0, %v3480
  %v3482 = vpop.f32.mrf.mxu0
  %v3483 = vpop.f32.mrf.mxu0
  %v3484 = vadd.f32 0.0, %v3483
  %v3485 = vpop.f32.mrf.mxu0
  %3486 = vmatprep.mubr.bf16.mxu0 0
  %3487 = vmatmul.mubr.bf16.gmra.mxu0 %v3432
  %v3488 = vpop.f32.mrf.mxu0
  %v3489 = vadd.f32 0.0, %v3488
  %v3490 = vpop.f32.mrf.mxu0
  %v3491 = vpop.f32.mrf.mxu0
  %v3492 = vadd.f32 0.0, %v3491
  %v3493 = vpop.f32.mrf.mxu0
  %3494 = vmatprep.mubr.bf16.mxu0 0
  %3495 = vmatmul.mubr.bf16.gmra.mxu0 %v3435
  %v3496 = vpop.f32.mrf.mxu0
  %v3497 = vadd.f32 0.0, %v3496
  %v3498 = vpop.f32.mrf.mxu0
  %v3499 = vpop.f32.mrf.mxu0
  %v3500 = vadd.f32 0.0, %v3499
  %v3501 = vpop.f32.mrf.mxu0
  %3502 = vmatprep.mubr.bf16.mxu0 0
  %3503 = vmatmul.mubr.bf16.gmra.mxu0 %v3438
  %v3504 = vpop.f32.mrf.mxu0
  %v3505 = vadd.f32 0.0, %v3504
  %v3506 = vpop.f32.mrf.mxu0
  %v3507 = vpop.f32.mrf.mxu0
  %v3508 = vadd.f32 0.0, %v3507
  %v3509 = vpop.f32.mrf.mxu0
  %3510 = vmatprep.mubr.bf16.mxu0 0
  %3511 = vmatmul.mubr.bf16.gmra.mxu0 %v3441
  %v3512 = vpop.f32.mrf.mxu0
  %v3513 = vadd.f32 0.0, %v3512
  %v3514 = vpop.f32.mrf.mxu0
  %v3515 = vpop.f32.mrf.mxu0
  %v3516 = vadd.f32 0.0, %v3515
  %v3517 = vpop.f32.mrf.mxu0
  %3518 = vmatprep.mubr.bf16.mxu0 0
  %3519 = vmatmul.mubr.bf16.gmra.mxu0 %v3444
  %v3520 = vpop.f32.mrf.mxu0
  %v3521 = vadd.f32 0.0, %v3520
  %v3522 = vpop.f32.mrf.mxu0
  %v3523 = vpop.f32.mrf.mxu0
  %v3524 = vadd.f32 0.0, %v3523
  %v3525 = vpop.f32.mrf.mxu0
  %3526 = vdwg.mxu0
  %3539 = vrot.lane.b32.xlu0 %v3481, 18
  %v3540 = vpop.permute.xlu0 %3539
  %3541 = vrot.lane.b32.xlu0 %v3484, 18
  %v3542 = vpop.permute.xlu0 %3541
  %3543 = vrot.lane.b32.xlu0 %v3489, 18
  %v3544 = vpop.permute.xlu0 %3543
  %3545 = vrot.lane.b32.xlu0 %v3492, 18
  %v3546 = vpop.permute.xlu0 %3545
  %3547 = vrot.lane.b32.xlu0 %v3497, 18
  %v3548 = vpop.permute.xlu0 %3547
  %3549 = vrot.lane.b32.xlu0 %v3500, 18
  %v3550 = vpop.permute.xlu0 %3549
  %3551 = vrot.lane.b32.xlu0 %v3505, 18
  %v3552 = vpop.permute.xlu0 %3551
  %3553 = vrot.lane.b32.xlu0 %v3508, 18
  %v3554 = vpop.permute.xlu0 %3553
  %3555 = vrot.lane.b32.xlu0 %v3513, 18
  %v3556 = vpop.permute.xlu0 %3555
  %3557 = vrot.lane.b32.xlu0 %v3516, 18
  %v3558 = vpop.permute.xlu0 %3557
  %3559 = vrot.lane.b32.xlu0 %v3521, 18
  %v3560 = vpop.permute.xlu0 %3559
  %3561 = vrot.lane.b32.xlu0 %v3524, 18
  %v3562 = vpop.permute.xlu0 %3561
  %v3575 = vsel %vm601, %v3061, %v3540
  %v3576 = vsel %vm601, %v3064, %v3542
  %v3577 = vsel %vm601, %v3069, %v3544
  %v3578 = vsel %vm601, %v3072, %v3546
  %v3579 = vsel %vm601, %v3077, %v3548
  %v3580 = vsel %vm601, %v3080, %v3550
  %v3581 = vsel %vm601, %v3085, %v3552
  %v3582 = vsel %vm601, %v3088, %v3554
  %v3583 = vsel %vm601, %v3093, %v3556
  %v3584 = vsel %vm601, %v3096, %v3558
  %v3585 = vsel %vm601, %v3101, %v3560
  %v3586 = vsel %vm601, %v3104, %v3562
  %s3587 = scalar_lea.vmem %s10, 40
  %v3588 = vld [vmem:[%s3587] sm:$0xff]
  %v3589 = vld [vmem:[%s3587 + $0x8] sm:$0xff]
  %v3590 = vld [vmem:[%s3587 + $0x10] sm:$0xff]
  %v3591 = vld [vmem:[%s3587 + $0x18] sm:$0xff]
  %v3592 = vld [vmem:[%s3587 + $0x20] sm:$0xf]
  %v3593 = vpack.c.bf16 %v3576, %v3575
  %v3594 = vpack.c.bf16 %v3578, %v3577
  %v3595 = vpack.c.bf16 %v3580, %v3579
  %v3596 = vpack.c.bf16 %v3582, %v3581
  %v3597 = vpack.c.bf16 %v3584, %v3583
  %v3598 = vpack.c.bf16 %v3586, %v3585
  %v3599 = vpack.c.bf16 %v3589, %v3588
  %v3600 = vpack.c.bf16 %v3591, %v3590
  %v3601 = vpack.c.bf16 %v3592, %v3592
  %s3602 = scalar_lea.vmem %s11, 1
  %v3603 = vld [vmem:[%s3602] sm:$0x1]
  %v3605 = vlaneseq
  %v3606 = vshrl.u32 %v3605, 7
  %v3607 = vsub.s32 0, %v3606
  %v3608 = vrot.slane %v3603, %v3607
  %v3611 = vsel %vm762, %v3593, 0
  %v3614 = vsel %vm762, %v3594, 0
  %v3617 = vsel %vm762, %v3595, 0
  %v3620 = vsel %vm762, %v3596, 0
  %v3623 = vsel %vm762, %v3597, 0
  %v3626 = vsel %vm762, %v3598, 0
  %v3629 = vsel %vm781, %v3601, 0
  %3631 = vmatprep.subr.bf16.mxu0 0
  %3632 = vmatpush1.bf16.msra.mxu0 0
  %3633 = vmatprep.subr.bf16.mxu0 0
  %3634 = vmatpush1.bf16.msra.mxu0 0
  %3635 = vmatprep.subr.bf16.mxu0 0
  %3636 = vmatpush1.bf16.msra.mxu0 0
  %3637 = vmatprep.subr.bf16.mxu0 0
  %3638 = vmatpush1.bf16.msra.mxu0 0
  %3639 = vmatprep.subr.bf16.mxu0 0
  %3640 = vmatpush1.bf16.msra.mxu0 0
  %3641 = vmatprep.subr.bf16.mxu0 0
  %3642 = vmatpush1.bf16.msra.mxu0 %v3629
  %3643 = vmatprep.subr.bf16.mxu0 0
  %3644 = vmatpush1.bf16.msra.mxu0 %v3600
  %3645 = vmatprep.subr.bf16.mxu0 0
  %3646 = vmatpush1.bf16.msra.mxu0 %v3599
  %3647 = vmatprep.subr.bf16.mxu0 0
  %3648 = vmatpush2.bf16.msra.mxu0 0
  %3649 = vmatprep.subr.bf16.mxu0 0
  %3650 = vmatpush2.bf16.msra.mxu0 0
  %3651 = vmatprep.subr.bf16.mxu0 0
  %3652 = vmatpush2.bf16.msra.mxu0 0
  %3653 = vmatprep.subr.bf16.mxu0 0
  %3654 = vmatpush2.bf16.msra.mxu0 0
  %3655 = vmatprep.subr.bf16.mxu0 0
  %3656 = vmatpush2.bf16.msra.mxu0 0
  %3657 = vmatprep.subr.bf16.mxu0 0
  %3658 = vmatpush2.bf16.msra.mxu0 0
  %3659 = vmatprep.subr.bf16.mxu0 0
  %3660 = vmatpush2.bf16.msra.mxu0 0
  %3661 = vmatprep.subr.bf16.mxu0 0
  %3662 = vmatpush2.bf16.msra.mxu0 0
  %3663 = vmatprep.mubr.bf16.mxu0 0
  %3664 = vmatmul.mubr.bf16.gmra.mxu0 %v3611
  %v3665 = vpop.f32.mrf.mxu0
  %v3666 = vadd.f32 %v3608, %v3665
  %v3667 = vpop.f32.mrf.mxu0
  %v3668 = vpop.f32.mrf.mxu0
  %v3669 = vadd.f32 %v3608, %v3668
  %v3670 = vpop.f32.mrf.mxu0
  %3671 = vmatprep.mubr.bf16.mxu0 0
  %3672 = vmatmul.mubr.bf16.gmra.mxu0 %v3614
  %v3673 = vpop.f32.mrf.mxu0
  %v3674 = vadd.f32 %v3608, %v3673
  %v3675 = vpop.f32.mrf.mxu0
  %v3676 = vpop.f32.mrf.mxu0
  %v3677 = vadd.f32 %v3608, %v3676
  %v3678 = vpop.f32.mrf.mxu0
  %3679 = vmatprep.mubr.bf16.mxu0 0
  %3680 = vmatmul.mubr.bf16.gmra.mxu0 %v3617
  %v3681 = vpop.f32.mrf.mxu0
  %v3682 = vadd.f32 %v3608, %v3681
  %v3683 = vpop.f32.mrf.mxu0
  %v3684 = vpop.f32.mrf.mxu0
  %v3685 = vadd.f32 %v3608, %v3684
  %v3686 = vpop.f32.mrf.mxu0
  %3687 = vmatprep.mubr.bf16.mxu0 0
  %3688 = vmatmul.mubr.bf16.gmra.mxu0 %v3620
  %v3689 = vpop.f32.mrf.mxu0
  %v3690 = vadd.f32 %v3608, %v3689
  %v3691 = vpop.f32.mrf.mxu0
  %v3692 = vpop.f32.mrf.mxu0
  %v3693 = vadd.f32 %v3608, %v3692
  %v3694 = vpop.f32.mrf.mxu0
  %3695 = vmatprep.mubr.bf16.mxu0 0
  %3696 = vmatmul.mubr.bf16.gmra.mxu0 %v3623
  %v3697 = vpop.f32.mrf.mxu0
  %v3698 = vadd.f32 %v3608, %v3697
  %v3699 = vpop.f32.mrf.mxu0
  %v3700 = vpop.f32.mrf.mxu0
  %v3701 = vadd.f32 %v3608, %v3700
  %v3702 = vpop.f32.mrf.mxu0
  %3703 = vmatprep.mubr.bf16.mxu0 0
  %3704 = vmatmul.mubr.bf16.gmra.mxu0 %v3626
  %v3705 = vpop.f32.mrf.mxu0
  %v3706 = vadd.f32 %v3608, %v3705
  %v3707 = vpop.f32.mrf.mxu0
  %v3708 = vpop.f32.mrf.mxu0
  %v3709 = vadd.f32 %v3608, %v3708
  %v3710 = vpop.f32.mrf.mxu0
  %3711 = vdwg.mxu0
  %v3712 = vadd.f32 %v2550, %v3666
  %v3713 = vadd.f32 %v2551, %v3669
  %v3714 = vadd.f32 %v2552, %v3674
  %v3715 = vadd.f32 %v2553, %v3677
  %v3716 = vadd.f32 %v2554, %v3682
  %v3717 = vadd.f32 %v2555, %v3685
  %v3718 = vadd.f32 %v2556, %v3690
  %v3719 = vadd.f32 %v2557, %v3693
  %v3720 = vadd.f32 %v2558, %v3698
  %v3721 = vadd.f32 %v2559, %v3701
  %v3722 = vadd.f32 %v2560, %v3706
  %v3723 = vadd.f32 %v2561, %v3709
  %s3724 = scalar_lea.vmem %s12, 1
  %v3725 = vld [vmem:[%s3724] sm:$0x1]
  %s3726 = scalar_lea.vmem %s13, 1
  %v3727 = vld [vmem:[%s3726] sm:$0x1]
  %v3728 = vsel %vm762, %v3712, 0.0
  %3729 = vadd.xlane.f32.xlu0 %v3728
  %v3730 = vpop.xlane.xlu0 %3729
  %v3731 = vsel %vm762, %v3713, 0.0
  %3732 = vadd.xlane.f32.xlu0 %v3731
  %v3733 = vpop.xlane.xlu0 %3732
  %v3734 = vsel %vm762, %v3714, 0.0
  %3735 = vadd.xlane.f32.xlu0 %v3734
  %v3736 = vpop.xlane.xlu0 %3735
  %v3737 = vsel %vm762, %v3715, 0.0
  %3738 = vadd.xlane.f32.xlu0 %v3737
  %v3739 = vpop.xlane.xlu0 %3738
  %v3740 = vsel %vm762, %v3716, 0.0
  %3741 = vadd.xlane.f32.xlu0 %v3740
  %v3742 = vpop.xlane.xlu0 %3741
  %v3743 = vsel %vm762, %v3717, 0.0
  %3744 = vadd.xlane.f32.xlu0 %v3743
  %v3745 = vpop.xlane.xlu0 %3744
  %v3746 = vsel %vm762, %v3718, 0.0
  %3747 = vadd.xlane.f32.xlu0 %v3746
  %v3748 = vpop.xlane.xlu0 %3747
  %v3749 = vsel %vm762, %v3719, 0.0
  %3750 = vadd.xlane.f32.xlu0 %v3749
  %v3751 = vpop.xlane.xlu0 %3750
  %v3752 = vsel %vm762, %v3720, 0.0
  %3753 = vadd.xlane.f32.xlu0 %v3752
  %v3754 = vpop.xlane.xlu0 %3753
  %v3755 = vsel %vm762, %v3721, 0.0
  %3756 = vadd.xlane.f32.xlu0 %v3755
  %v3757 = vpop.xlane.xlu0 %3756
  %v3758 = vsel %vm762, %v3722, 0.0
  %3759 = vadd.xlane.f32.xlu0 %v3758
  %v3760 = vpop.xlane.xlu0 %3759
  %v3761 = vsel %vm762, %v3723, 0.0
  %3762 = vadd.xlane.f32.xlu0 %v3761
  %v3763 = vpop.xlane.xlu0 %3762
  %v3764 = vmul.f32 %v3730, %v1939
  %v3765 = vmul.f32 %v3733, %v1939
  %v3766 = vmul.f32 %v3736, %v1939
  %v3767 = vmul.f32 %v3739, %v1939
  %v3768 = vmul.f32 %v3742, %v1939
  %v3769 = vmul.f32 %v3745, %v1939
  %v3770 = vmul.f32 %v3748, %v1939
  %v3771 = vmul.f32 %v3751, %v1939
  %v3772 = vmul.f32 %v3754, %v1939
  %v3773 = vmul.f32 %v3757, %v1939
  %v3774 = vmul.f32 %v3760, %v1939
  %v3775 = vmul.f32 %v3763, %v1939
  %v3776 = vsub.f32 %v3712, %v3764
  %v3777 = vsub.f32 %v3713, %v3765
  %v3778 = vsub.f32 %v3714, %v3766
  %v3779 = vsub.f32 %v3715, %v3767
  %v3780 = vsub.f32 %v3716, %v3768
  %v3781 = vsub.f32 %v3717, %v3769
  %v3782 = vsub.f32 %v3718, %v3770
  %v3783 = vsub.f32 %v3719, %v3771
  %v3784 = vsub.f32 %v3720, %v3772
  %v3785 = vsub.f32 %v3721, %v3773
  %v3786 = vsub.f32 %v3722, %v3774
  %v3787 = vsub.f32 %v3723, %v3775
  %v3788 = vmul.f32 %v3776, %v3776
  %v3789 = vmul.f32 %v3777, %v3777
  %v3790 = vmul.f32 %v3778, %v3778
  %v3791 = vmul.f32 %v3779, %v3779
  %v3792 = vmul.f32 %v3780, %v3780
  %v3793 = vmul.f32 %v3781, %v3781
  %v3794 = vmul.f32 %v3782, %v3782
  %v3795 = vmul.f32 %v3783, %v3783
  %v3796 = vmul.f32 %v3784, %v3784
  %v3797 = vmul.f32 %v3785, %v3785
  %v3798 = vmul.f32 %v3786, %v3786
  %v3799 = vmul.f32 %v3787, %v3787
  %v3800 = vsel %vm762, %v3788, 0.0
  %3801 = vadd.xlane.f32.xlu0 %v3800
  %v3802 = vpop.xlane.xlu0 %3801
  %v3803 = vsel %vm762, %v3789, 0.0
  %3804 = vadd.xlane.f32.xlu0 %v3803
  %v3805 = vpop.xlane.xlu0 %3804
  %v3806 = vsel %vm762, %v3790, 0.0
  %3807 = vadd.xlane.f32.xlu0 %v3806
  %v3808 = vpop.xlane.xlu0 %3807
  %v3809 = vsel %vm762, %v3791, 0.0
  %3810 = vadd.xlane.f32.xlu0 %v3809
  %v3811 = vpop.xlane.xlu0 %3810
  %v3812 = vsel %vm762, %v3792, 0.0
  %3813 = vadd.xlane.f32.xlu0 %v3812
  %v3814 = vpop.xlane.xlu0 %3813
  %v3815 = vsel %vm762, %v3793, 0.0
  %3816 = vadd.xlane.f32.xlu0 %v3815
  %v3817 = vpop.xlane.xlu0 %3816
  %v3818 = vsel %vm762, %v3794, 0.0
  %3819 = vadd.xlane.f32.xlu0 %v3818
  %v3820 = vpop.xlane.xlu0 %3819
  %v3821 = vsel %vm762, %v3795, 0.0
  %3822 = vadd.xlane.f32.xlu0 %v3821
  %v3823 = vpop.xlane.xlu0 %3822
  %v3824 = vsel %vm762, %v3796, 0.0
  %3825 = vadd.xlane.f32.xlu0 %v3824
  %v3826 = vpop.xlane.xlu0 %3825
  %v3827 = vsel %vm762, %v3797, 0.0
  %3828 = vadd.xlane.f32.xlu0 %v3827
  %v3829 = vpop.xlane.xlu0 %3828
  %v3830 = vsel %vm762, %v3798, 0.0
  %3831 = vadd.xlane.f32.xlu0 %v3830
  %v3832 = vpop.xlane.xlu0 %3831
  %v3833 = vsel %vm762, %v3799, 0.0
  %3834 = vadd.xlane.f32.xlu0 %v3833
  %v3835 = vpop.xlane.xlu0 %3834
  %v3836 = vmul.f32 %v3802, %v1939
  %v3837 = vmul.f32 %v3805, %v1939
  %v3838 = vmul.f32 %v3808, %v1939
  %v3839 = vmul.f32 %v3811, %v1939
  %v3840 = vmul.f32 %v3814, %v1939
  %v3841 = vmul.f32 %v3817, %v1939
  %v3842 = vmul.f32 %v3820, %v1939
  %v3843 = vmul.f32 %v3823, %v1939
  %v3844 = vmul.f32 %v3826, %v1939
  %v3845 = vmul.f32 %v3829, %v1939
  %v3846 = vmul.f32 %v3832, %v1939
  %v3847 = vmul.f32 %v3835, %v1939
  %v3848 = vadd.f32 %v3836, 1e-05
  %v3849 = vadd.f32 %v3837, 1e-05
  %v3850 = vadd.f32 %v3838, 1e-05
  %v3851 = vadd.f32 %v3839, 1e-05
  %v3852 = vadd.f32 %v3840, 1e-05
  %v3853 = vadd.f32 %v3841, 1e-05
  %v3854 = vadd.f32 %v3842, 1e-05
  %v3855 = vadd.f32 %v3843, 1e-05
  %v3856 = vadd.f32 %v3844, 1e-05
  %v3857 = vadd.f32 %v3845, 1e-05
  %v3858 = vadd.f32 %v3846, 1e-05
  %v3859 = vadd.f32 %v3847, 1e-05
  %v3860 = vrsqrt.pop %v3848
  %v3861 = vrsqrt.pop %v3849
  %v3862 = vrsqrt.pop %v3850
  %v3863 = vrsqrt.pop %v3851
  %v3864 = vrsqrt.pop %v3852
  %v3865 = vrsqrt.pop %v3853
  %v3866 = vrsqrt.pop %v3854
  %v3867 = vrsqrt.pop %v3855
  %v3868 = vrsqrt.pop %v3856
  %v3869 = vrsqrt.pop %v3857
  %v3870 = vrsqrt.pop %v3858
  %v3871 = vrsqrt.pop %v3859
  %v3872 = vmul.f32 %v3776, %v3860
  %v3873 = vmul.f32 %v3777, %v3861
  %v3874 = vmul.f32 %v3778, %v3862
  %v3875 = vmul.f32 %v3779, %v3863
  %v3876 = vmul.f32 %v3780, %v3864
  %v3877 = vmul.f32 %v3781, %v3865
  %v3878 = vmul.f32 %v3782, %v3866
  %v3879 = vmul.f32 %v3783, %v3867
  %v3880 = vmul.f32 %v3784, %v3868
  %v3881 = vmul.f32 %v3785, %v3869
  %v3882 = vmul.f32 %v3786, %v3870
  %v3883 = vmul.f32 %v3787, %v3871
  %v3885 = vlaneseq
  %v3886 = vshrl.u32 %v3885, 7
  %v3887 = vsub.s32 0, %v3886
  %v3888 = vrot.slane %v3725, %v3887
  %v3890 = vmul.f32 %v3872, %v3888
  %v3891 = vmul.f32 %v3873, %v3888
  %v3892 = vmul.f32 %v3874, %v3888
  %v3893 = vmul.f32 %v3875, %v3888
  %v3894 = vmul.f32 %v3876, %v3888
  %v3895 = vmul.f32 %v3877, %v3888
  %v3896 = vmul.f32 %v3878, %v3888
  %v3897 = vmul.f32 %v3879, %v3888
  %v3898 = vmul.f32 %v3880, %v3888
  %v3899 = vmul.f32 %v3881, %v3888
  %v3900 = vmul.f32 %v3882, %v3888
  %v3901 = vmul.f32 %v3883, %v3888
  %v3903 = vlaneseq
  %v3904 = vshrl.u32 %v3903, 7
  %v3905 = vsub.s32 0, %v3904
  %v3906 = vrot.slane %v3727, %v3905
  %v3908 = vadd.f32 %v3890, %v3906
  %v3909 = vadd.f32 %v3891, %v3906
  %v3910 = vadd.f32 %v3892, %v3906
  %v3911 = vadd.f32 %v3893, %v3906
  %v3912 = vadd.f32 %v3894, %v3906
  %v3913 = vadd.f32 %v3895, %v3906
  %v3914 = vadd.f32 %v3896, %v3906
  %v3915 = vadd.f32 %v3897, %v3906
  %v3916 = vadd.f32 %v3898, %v3906
  %v3917 = vadd.f32 %v3899, %v3906
  %v3918 = vadd.f32 %v3900, %v3906
  %v3919 = vadd.f32 %v3901, %v3906
  %s3920 = scalar_lea.vmem %s14, 40
  %v3921 = vld [vmem:[%s3920] sm:$0xff]
  %v3922 = vld [vmem:[%s3920 + $0x8] sm:$0xff]
  %v3923 = vld [vmem:[%s3920 + $0x10] sm:$0xff]
  %v3924 = vld [vmem:[%s3920 + $0x18] sm:$0xff]
  %v3925 = vld [vmem:[%s3920 + $0x20] sm:$0xf]
  %v3926 = vpack.c.bf16 %v3909, %v3908
  %v3927 = vpack.c.bf16 %v3911, %v3910
  %v3928 = vpack.c.bf16 %v3913, %v3912
  %v3929 = vpack.c.bf16 %v3915, %v3914
  %v3930 = vpack.c.bf16 %v3917, %v3916
  %v3931 = vpack.c.bf16 %v3919, %v3918
  %v3932 = vpack.c.bf16 %v3922, %v3921
  %v3933 = vpack.c.bf16 %v3924, %v3923
  %v3934 = vpack.c.bf16 %v3925, %v3925
  %s3935 = scalar_lea.vmem %s15, 1
  %v3936 = vld [vmem:[%s3935] sm:$0x1]
  %v3938 = vlaneseq
  %v3939 = vshrl.u32 %v3938, 7
  %v3940 = vsub.s32 0, %v3939
  %v3941 = vrot.slane %v3936, %v3940
  %v3944 = vsel %vm762, %v3926, 0
  %v3947 = vsel %vm762, %v3927, 0
  %v3950 = vsel %vm762, %v3928, 0
  %v3953 = vsel %vm762, %v3929, 0
  %v3956 = vsel %vm762, %v3930, 0
  %v3959 = vsel %vm762, %v3931, 0
  %v3962 = vsel %vm781, %v3934, 0
  %3964 = vmatprep.subr.bf16.mxu0 0
  %3965 = vmatpush1.bf16.msra.mxu0 0
  %3966 = vmatprep.subr.bf16.mxu0 0
  %3967 = vmatpush1.bf16.msra.mxu0 0
  %3968 = vmatprep.subr.bf16.mxu0 0
  %3969 = vmatpush1.bf16.msra.mxu0 0
  %3970 = vmatprep.subr.bf16.mxu0 0
  %3971 = vmatpush1.bf16.msra.mxu0 0
  %3972 = vmatprep.subr.bf16.mxu0 0
  %3973 = vmatpush1.bf16.msra.mxu0 0
  %3974 = vmatprep.subr.bf16.mxu0 0
  %3975 = vmatpush1.bf16.msra.mxu0 %v3962
  %3976 = vmatprep.subr.bf16.mxu0 0
  %3977 = vmatpush1.bf16.msra.mxu0 %v3933
  %3978 = vmatprep.subr.bf16.mxu0 0
  %3979 = vmatpush1.bf16.msra.mxu0 %v3932
  %3980 = vmatprep.subr.bf16.mxu0 0
  %3981 = vmatpush2.bf16.msra.mxu0 0
  %3982 = vmatprep.subr.bf16.mxu0 0
  %3983 = vmatpush2.bf16.msra.mxu0 0
  %3984 = vmatprep.subr.bf16.mxu0 0
  %3985 = vmatpush2.bf16.msra.mxu0 0
  %3986 = vmatprep.subr.bf16.mxu0 0
  %3987 = vmatpush2.bf16.msra.mxu0 0
  %3988 = vmatprep.subr.bf16.mxu0 0
  %3989 = vmatpush2.bf16.msra.mxu0 0
  %3990 = vmatprep.subr.bf16.mxu0 0
  %3991 = vmatpush2.bf16.msra.mxu0 0
  %3992 = vmatprep.subr.bf16.mxu0 0
  %3993 = vmatpush2.bf16.msra.mxu0 0
  %3994 = vmatprep.subr.bf16.mxu0 0
  %3995 = vmatpush2.bf16.msra.mxu0 0
  %3996 = vmatprep.mubr.bf16.mxu0 0
  %3997 = vmatmul.mubr.bf16.gmra.mxu0 %v3944
  %v3998 = vpop.f32.mrf.mxu0
  %v3999 = vadd.f32 %v3941, %v3998
  %v4000 = vpop.f32.mrf.mxu0
  %v4001 = vpop.f32.mrf.mxu0
  %v4002 = vadd.f32 %v3941, %v4001
  %v4003 = vpop.f32.mrf.mxu0
  %4004 = vmatprep.mubr.bf16.mxu0 0
  %4005 = vmatmul.mubr.bf16.gmra.mxu0 %v3947
  %v4006 = vpop.f32.mrf.mxu0
  %v4007 = vadd.f32 %v3941, %v4006
  %v4008 = vpop.f32.mrf.mxu0
  %v4009 = vpop.f32.mrf.mxu0
  %v4010 = vadd.f32 %v3941, %v4009
  %v4011 = vpop.f32.mrf.mxu0
  %4012 = vmatprep.mubr.bf16.mxu0 0
  %4013 = vmatmul.mubr.bf16.gmra.mxu0 %v3950
  %v4014 = vpop.f32.mrf.mxu0
  %v4015 = vadd.f32 %v3941, %v4014
  %v4016 = vpop.f32.mrf.mxu0
  %v4017 = vpop.f32.mrf.mxu0
  %v4018 = vadd.f32 %v3941, %v4017
  %v4019 = vpop.f32.mrf.mxu0
  %4020 = vmatprep.mubr.bf16.mxu0 0
  %4021 = vmatmul.mubr.bf16.gmra.mxu0 %v3953
  %v4022 = vpop.f32.mrf.mxu0
  %v4023 = vadd.f32 %v3941, %v4022
  %v4024 = vpop.f32.mrf.mxu0
  %v4025 = vpop.f32.mrf.mxu0
  %v4026 = vadd.f32 %v3941, %v4025
  %v4027 = vpop.f32.mrf.mxu0
  %4028 = vmatprep.mubr.bf16.mxu0 0
  %4029 = vmatmul.mubr.bf16.gmra.mxu0 %v3956
  %v4030 = vpop.f32.mrf.mxu0
  %v4031 = vadd.f32 %v3941, %v4030
  %v4032 = vpop.f32.mrf.mxu0
  %v4033 = vpop.f32.mrf.mxu0
  %v4034 = vadd.f32 %v3941, %v4033
  %v4035 = vpop.f32.mrf.mxu0
  %4036 = vmatprep.mubr.bf16.mxu0 0
  %4037 = vmatmul.mubr.bf16.gmra.mxu0 %v3959
  %v4038 = vpop.f32.mrf.mxu0
  %v4039 = vadd.f32 %v3941, %v4038
  %v4040 = vpop.f32.mrf.mxu0
  %v4041 = vpop.f32.mrf.mxu0
  %v4042 = vadd.f32 %v3941, %v4041
  %v4043 = vpop.f32.mrf.mxu0
  %4044 = vdwg.mxu0
  %v4045 = vmax.f32 %v3999, 0.0
  %v4046 = vmax.f32 %v4002, 0.0
  %v4047 = vmax.f32 %v4007, 0.0
  %v4048 = vmax.f32 %v4010, 0.0
  %v4049 = vmax.f32 %v4015, 0.0
  %v4050 = vmax.f32 %v4018, 0.0
  %v4051 = vmax.f32 %v4023, 0.0
  %v4052 = vmax.f32 %v4026, 0.0
  %v4053 = vmax.f32 %v4031, 0.0
  %v4054 = vmax.f32 %v4034, 0.0
  %v4055 = vmax.f32 %v4039, 0.0
  %v4056 = vmax.f32 %v4042, 0.0
  %s4057 = scalar_lea.vmem %s16, 64
  %v4058 = vld [vmem:[%s4057] sm:$0xff]
  %v4059 = vld [vmem:[%s4057 + $0x8] sm:$0xff]
  %v4060 = vld [vmem:[%s4057 + $0x10] sm:$0xff]
  %v4061 = vld [vmem:[%s4057 + $0x18] sm:$0xff]
  %v4062 = vld [vmem:[%s4057 + $0x20] sm:$0xff]
  %v4063 = vld [vmem:[%s4057 + $0x28] sm:$0xff]
  %v4064 = vld [vmem:[%s4057 + $0x30] sm:$0xff]
  %v4065 = vld [vmem:[%s4057 + $0x38] sm:$0xff]
  %v4066 = vpack.c.bf16 %v4046, %v4045
  %v4067 = vpack.c.bf16 %v4048, %v4047
  %v4068 = vpack.c.bf16 %v4050, %v4049
  %v4069 = vpack.c.bf16 %v4052, %v4051
  %v4070 = vpack.c.bf16 %v4054, %v4053
  %v4071 = vpack.c.bf16 %v4056, %v4055
  %v4072 = vpack.c.bf16 %v4059, %v4058
  %v4073 = vpack.c.bf16 %v4061, %v4060
  %v4074 = vpack.c.bf16 %v4063, %v4062
  %v4075 = vpack.c.bf16 %v4065, %v4064
  %s4076 = scalar_lea.vmem %s17, 1
  %v4077 = vld [vmem:[%s4076] sm:$0x1]
  %v4079 = vlaneseq
  %v4080 = vshrl.u32 %v4079, 7
  %v4081 = vsub.s32 0, %v4080
  %v4082 = vrot.slane %v4077, %v4081
  %v4085 = vsel %vm2256, %v4066, 0
  %v4088 = vsel %vm2256, %v4067, 0
  %v4091 = vsel %vm2256, %v4068, 0
  %v4094 = vsel %vm2256, %v4069, 0
  %v4097 = vsel %vm2256, %v4070, 0
  %v4100 = vsel %vm2256, %v4071, 0
  %4102 = vmatprep.subr.bf16.mxu0 0
  %4103 = vmatpush1.bf16.msra.mxu0 0
  %4104 = vmatprep.subr.bf16.mxu0 0
  %4105 = vmatpush1.bf16.msra.mxu0 0
  %4106 = vmatprep.subr.bf16.mxu0 0
  %4107 = vmatpush1.bf16.msra.mxu0 0
  %4108 = vmatprep.subr.bf16.mxu0 0
  %4109 = vmatpush1.bf16.msra.mxu0 0
  %4110 = vmatprep.subr.bf16.mxu0 0
  %4111 = vmatpush1.bf16.msra.mxu0 %v4075
  %4112 = vmatprep.subr.bf16.mxu0 0
  %4113 = vmatpush1.bf16.msra.mxu0 %v4074
  %4114 = vmatprep.subr.bf16.mxu0 0
  %4115 = vmatpush1.bf16.msra.mxu0 %v4073
  %4116 = vmatprep.subr.bf16.mxu0 0
  %4117 = vmatpush1.bf16.msra.mxu0 %v4072
  %4118 = vmatprep.subr.bf16.mxu0 0
  %4119 = vmatpush2.bf16.msra.mxu0 0
  %4120 = vmatprep.subr.bf16.mxu0 0
  %4121 = vmatpush2.bf16.msra.mxu0 0
  %4122 = vmatprep.subr.bf16.mxu0 0
  %4123 = vmatpush2.bf16.msra.mxu0 0
  %4124 = vmatprep.subr.bf16.mxu0 0
  %4125 = vmatpush2.bf16.msra.mxu0 0
  %4126 = vmatprep.subr.bf16.mxu0 0
  %4127 = vmatpush2.bf16.msra.mxu0 0
  %4128 = vmatprep.subr.bf16.mxu0 0
  %4129 = vmatpush2.bf16.msra.mxu0 0
  %4130 = vmatprep.subr.bf16.mxu0 0
  %4131 = vmatpush2.bf16.msra.mxu0 0
  %4132 = vmatprep.subr.bf16.mxu0 0
  %4133 = vmatpush2.bf16.msra.mxu0 0
  %4134 = vmatprep.mubr.bf16.mxu0 0
  %4135 = vmatmul.mubr.bf16.gmra.mxu0 %v4085
  %v4136 = vpop.f32.mrf.mxu0
  %v4137 = vadd.f32 %v4082, %v4136
  %v4138 = vpop.f32.mrf.mxu0
  %v4139 = vpop.f32.mrf.mxu0
  %v4140 = vadd.f32 %v4082, %v4139
  %v4141 = vpop.f32.mrf.mxu0
  %4142 = vmatprep.mubr.bf16.mxu0 0
  %4143 = vmatmul.mubr.bf16.gmra.mxu0 %v4088
  %v4144 = vpop.f32.mrf.mxu0
  %v4145 = vadd.f32 %v4082, %v4144
  %v4146 = vpop.f32.mrf.mxu0
  %v4147 = vpop.f32.mrf.mxu0
  %v4148 = vadd.f32 %v4082, %v4147
  %v4149 = vpop.f32.mrf.mxu0
  %4150 = vmatprep.mubr.bf16.mxu0 0
  %4151 = vmatmul.mubr.bf16.gmra.mxu0 %v4091
  %v4152 = vpop.f32.mrf.mxu0
  %v4153 = vadd.f32 %v4082, %v4152
  %v4154 = vpop.f32.mrf.mxu0
  %v4155 = vpop.f32.mrf.mxu0
  %v4156 = vadd.f32 %v4082, %v4155
  %v4157 = vpop.f32.mrf.mxu0
  %4158 = vmatprep.mubr.bf16.mxu0 0
  %4159 = vmatmul.mubr.bf16.gmra.mxu0 %v4094
  %v4160 = vpop.f32.mrf.mxu0
  %v4161 = vadd.f32 %v4082, %v4160
  %v4162 = vpop.f32.mrf.mxu0
  %v4163 = vpop.f32.mrf.mxu0
  %v4164 = vadd.f32 %v4082, %v4163
  %v4165 = vpop.f32.mrf.mxu0
  %4166 = vmatprep.mubr.bf16.mxu0 0
  %4167 = vmatmul.mubr.bf16.gmra.mxu0 %v4097
  %v4168 = vpop.f32.mrf.mxu0
  %v4169 = vadd.f32 %v4082, %v4168
  %v4170 = vpop.f32.mrf.mxu0
  %v4171 = vpop.f32.mrf.mxu0
  %v4172 = vadd.f32 %v4082, %v4171
  %v4173 = vpop.f32.mrf.mxu0
  %4174 = vmatprep.mubr.bf16.mxu0 0
  %4175 = vmatmul.mubr.bf16.gmra.mxu0 %v4100
  %v4176 = vpop.f32.mrf.mxu0
  %v4177 = vadd.f32 %v4082, %v4176
  %v4178 = vpop.f32.mrf.mxu0
  %v4179 = vpop.f32.mrf.mxu0
  %v4180 = vadd.f32 %v4082, %v4179
  %v4181 = vpop.f32.mrf.mxu0
  %4182 = vdwg.mxu0
  %v4183 = vadd.f32 %v3908, %v4137
  %v4184 = vadd.f32 %v3909, %v4140
  %v4185 = vadd.f32 %v3910, %v4145
  %v4186 = vadd.f32 %v3911, %v4148
  %v4187 = vadd.f32 %v3912, %v4153
  %v4188 = vadd.f32 %v3913, %v4156
  %v4189 = vadd.f32 %v3914, %v4161
  %v4190 = vadd.f32 %v3915, %v4164
  %v4191 = vadd.f32 %v3916, %v4169
  %v4192 = vadd.f32 %v3917, %v4172
  %v4193 = vadd.f32 %v3918, %v4177
  %v4194 = vadd.f32 %v3919, %v4180
  %s4195 = scalar_lea.vmem %s18, 1
  %v4196 = vld [vmem:[%s4195] sm:$0x1]
  %s4197 = scalar_lea.vmem %s19, 1
  %v4198 = vld [vmem:[%s4197] sm:$0x1]
  %v4199 = vsel %vm762, %v4183, 0.0
  %4200 = vadd.xlane.f32.xlu0 %v4199
  %v4201 = vpop.xlane.xlu0 %4200
  %v4202 = vsel %vm762, %v4184, 0.0
  %4203 = vadd.xlane.f32.xlu0 %v4202
  %v4204 = vpop.xlane.xlu0 %4203
  %v4205 = vsel %vm762, %v4185, 0.0
  %4206 = vadd.xlane.f32.xlu0 %v4205
  %v4207 = vpop.xlane.xlu0 %4206
  %v4208 = vsel %vm762, %v4186, 0.0
  %4209 = vadd.xlane.f32.xlu0 %v4208
  %v4210 = vpop.xlane.xlu0 %4209
  %v4211 = vsel %vm762, %v4187, 0.0
  %4212 = vadd.xlane.f32.xlu0 %v4211
  %v4213 = vpop.xlane.xlu0 %4212
  %v4214 = vsel %vm762, %v4188, 0.0
  %4215 = vadd.xlane.f32.xlu0 %v4214
  %v4216 = vpop.xlane.xlu0 %4215
  %v4217 = vsel %vm762, %v4189, 0.0
  %4218 = vadd.xlane.f32.xlu0 %v4217
  %v4219 = vpop.xlane.xlu0 %4218
  %v4220 = vsel %vm762, %v4190, 0.0
  %4221 = vadd.xlane.f32.xlu0 %v4220
  %v4222 = vpop.xlane.xlu0 %4221
  %v4223 = vsel %vm762, %v4191, 0.0
  %4224 = vadd.xlane.f32.xlu0 %v4223
  %v4225 = vpop.xlane.xlu0 %4224
  %v4226 = vsel %vm762, %v4192, 0.0
  %4227 = vadd.xlane.f32.xlu0 %v4226
  %v4228 = vpop.xlane.xlu0 %4227
  %v4229 = vsel %vm762, %v4193, 0.0
  %4230 = vadd.xlane.f32.xlu0 %v4229
  %v4231 = vpop.xlane.xlu0 %4230
  %v4232 = vsel %vm762, %v4194, 0.0
  %4233 = vadd.xlane.f32.xlu0 %v4232
  %v4234 = vpop.xlane.xlu0 %4233
  %v4235 = vmul.f32 %v4201, %v1939
  %v4236 = vmul.f32 %v4204, %v1939
  %v4237 = vmul.f32 %v4207, %v1939
  %v4238 = vmul.f32 %v4210, %v1939
  %v4239 = vmul.f32 %v4213, %v1939
  %v4240 = vmul.f32 %v4216, %v1939
  %v4241 = vmul.f32 %v4219, %v1939
  %v4242 = vmul.f32 %v4222, %v1939
  %v4243 = vmul.f32 %v4225, %v1939
  %v4244 = vmul.f32 %v4228, %v1939
  %v4245 = vmul.f32 %v4231, %v1939
  %v4246 = vmul.f32 %v4234, %v1939
  %v4247 = vsub.f32 %v4183, %v4235
  %v4248 = vsub.f32 %v4184, %v4236
  %v4249 = vsub.f32 %v4185, %v4237
  %v4250 = vsub.f32 %v4186, %v4238
  %v4251 = vsub.f32 %v4187, %v4239
  %v4252 = vsub.f32 %v4188, %v4240
  %v4253 = vsub.f32 %v4189, %v4241
  %v4254 = vsub.f32 %v4190, %v4242
  %v4255 = vsub.f32 %v4191, %v4243
  %v4256 = vsub.f32 %v4192, %v4244
  %v4257 = vsub.f32 %v4193, %v4245
  %v4258 = vsub.f32 %v4194, %v4246
  %v4259 = vmul.f32 %v4247, %v4247
  %v4260 = vmul.f32 %v4248, %v4248
  %v4261 = vmul.f32 %v4249, %v4249
  %v4262 = vmul.f32 %v4250, %v4250
  %v4263 = vmul.f32 %v4251, %v4251
  %v4264 = vmul.f32 %v4252, %v4252
  %v4265 = vmul.f32 %v4253, %v4253
  %v4266 = vmul.f32 %v4254, %v4254
  %v4267 = vmul.f32 %v4255, %v4255
  %v4268 = vmul.f32 %v4256, %v4256
  %v4269 = vmul.f32 %v4257, %v4257
  %v4270 = vmul.f32 %v4258, %v4258
  %v4271 = vsel %vm762, %v4259, 0.0
  %4272 = vadd.xlane.f32.xlu0 %v4271
  %v4273 = vpop.xlane.xlu0 %4272
  %v4274 = vsel %vm762, %v4260, 0.0
  %4275 = vadd.xlane.f32.xlu0 %v4274
  %v4276 = vpop.xlane.xlu0 %4275
  %v4277 = vsel %vm762, %v4261, 0.0
  %4278 = vadd.xlane.f32.xlu0 %v4277
  %v4279 = vpop.xlane.xlu0 %4278
  %v4280 = vsel %vm762, %v4262, 0.0
  %4281 = vadd.xlane.f32.xlu0 %v4280
  %v4282 = vpop.xlane.xlu0 %4281
  %v4283 = vsel %vm762, %v4263, 0.0
  %4284 = vadd.xlane.f32.xlu0 %v4283
  %v4285 = vpop.xlane.xlu0 %4284
  %v4286 = vsel %vm762, %v4264, 0.0
  %4287 = vadd.xlane.f32.xlu0 %v4286
  %v4288 = vpop.xlane.xlu0 %4287
  %v4289 = vsel %vm762, %v4265, 0.0
  %4290 = vadd.xlane.f32.xlu0 %v4289
  %v4291 = vpop.xlane.xlu0 %4290
  %v4292 = vsel %vm762, %v4266, 0.0
  %4293 = vadd.xlane.f32.xlu0 %v4292
  %v4294 = vpop.xlane.xlu0 %4293
  %v4295 = vsel %vm762, %v4267, 0.0
  %4296 = vadd.xlane.f32.xlu0 %v4295
  %v4297 = vpop.xlane.xlu0 %4296
  %v4298 = vsel %vm762, %v4268, 0.0
  %4299 = vadd.xlane.f32.xlu0 %v4298
  %v4300 = vpop.xlane.xlu0 %4299
  %v4301 = vsel %vm762, %v4269, 0.0
  %4302 = vadd.xlane.f32.xlu0 %v4301
  %v4303 = vpop.xlane.xlu0 %4302
  %v4304 = vsel %vm762, %v4270, 0.0
  %4305 = vadd.xlane.f32.xlu0 %v4304
  %v4306 = vpop.xlane.xlu0 %4305
  %v4307 = vmul.f32 %v4273, %v1939
  %v4308 = vmul.f32 %v4276, %v1939
  %v4309 = vmul.f32 %v4279, %v1939
  %v4310 = vmul.f32 %v4282, %v1939
  %v4311 = vmul.f32 %v4285, %v1939
  %v4312 = vmul.f32 %v4288, %v1939
  %v4313 = vmul.f32 %v4291, %v1939
  %v4314 = vmul.f32 %v4294, %v1939
  %v4315 = vmul.f32 %v4297, %v1939
  %v4316 = vmul.f32 %v4300, %v1939
  %v4317 = vmul.f32 %v4303, %v1939
  %v4318 = vmul.f32 %v4306, %v1939
  %v4319 = vadd.f32 %v4307, 1e-05
  %v4320 = vadd.f32 %v4308, 1e-05
  %v4321 = vadd.f32 %v4309, 1e-05
  %v4322 = vadd.f32 %v4310, 1e-05
  %v4323 = vadd.f32 %v4311, 1e-05
  %v4324 = vadd.f32 %v4312, 1e-05
  %v4325 = vadd.f32 %v4313, 1e-05
  %v4326 = vadd.f32 %v4314, 1e-05
  %v4327 = vadd.f32 %v4315, 1e-05
  %v4328 = vadd.f32 %v4316, 1e-05
  %v4329 = vadd.f32 %v4317, 1e-05
  %v4330 = vadd.f32 %v4318, 1e-05
  %v4331 = vrsqrt.pop %v4319
  %v4332 = vrsqrt.pop %v4320
  %v4333 = vrsqrt.pop %v4321
  %v4334 = vrsqrt.pop %v4322
  %v4335 = vrsqrt.pop %v4323
  %v4336 = vrsqrt.pop %v4324
  %v4337 = vrsqrt.pop %v4325
  %v4338 = vrsqrt.pop %v4326
  %v4339 = vrsqrt.pop %v4327
  %v4340 = vrsqrt.pop %v4328
  %v4341 = vrsqrt.pop %v4329
  %v4342 = vrsqrt.pop %v4330
  %v4343 = vmul.f32 %v4247, %v4331
  %v4344 = vmul.f32 %v4248, %v4332
  %v4345 = vmul.f32 %v4249, %v4333
  %v4346 = vmul.f32 %v4250, %v4334
  %v4347 = vmul.f32 %v4251, %v4335
  %v4348 = vmul.f32 %v4252, %v4336
  %v4349 = vmul.f32 %v4253, %v4337
  %v4350 = vmul.f32 %v4254, %v4338
  %v4351 = vmul.f32 %v4255, %v4339
  %v4352 = vmul.f32 %v4256, %v4340
  %v4353 = vmul.f32 %v4257, %v4341
  %v4354 = vmul.f32 %v4258, %v4342
  %v4356 = vlaneseq
  %v4357 = vshrl.u32 %v4356, 7
  %v4358 = vsub.s32 0, %v4357
  %v4359 = vrot.slane %v4196, %v4358
  %v4361 = vmul.f32 %v4343, %v4359
  %v4362 = vmul.f32 %v4344, %v4359
  %v4363 = vmul.f32 %v4345, %v4359
  %v4364 = vmul.f32 %v4346, %v4359
  %v4365 = vmul.f32 %v4347, %v4359
  %v4366 = vmul.f32 %v4348, %v4359
  %v4367 = vmul.f32 %v4349, %v4359
  %v4368 = vmul.f32 %v4350, %v4359
  %v4369 = vmul.f32 %v4351, %v4359
  %v4370 = vmul.f32 %v4352, %v4359
  %v4371 = vmul.f32 %v4353, %v4359
  %v4372 = vmul.f32 %v4354, %v4359
  %v4374 = vlaneseq
  %v4375 = vshrl.u32 %v4374, 7
  %v4376 = vsub.s32 0, %v4375
  %v4377 = vrot.slane %v4198, %v4376
  %v4379 = vadd.f32 %v4361, %v4377
  %v4380 = vadd.f32 %v4362, %v4377
  %v4381 = vadd.f32 %v4363, %v4377
  %v4382 = vadd.f32 %v4364, %v4377
  %v4383 = vadd.f32 %v4365, %v4377
  %v4384 = vadd.f32 %v4366, %v4377
  %v4385 = vadd.f32 %v4367, %v4377
  %v4386 = vadd.f32 %v4368, %v4377
  %v4387 = vadd.f32 %v4369, %v4377
  %v4388 = vadd.f32 %v4370, %v4377
  %v4389 = vadd.f32 %v4371, %v4377
  %v4390 = vadd.f32 %v4372, %v4377
  %v4391 = vld [vmem:[%s20] sm:$0xff]
  %v4392 = vld [vmem:[%s20 + $0x8] sm:$0xff]
  %v4393 = vld [vmem:[%s20 + $0x10] sm:$0xff]
  %v4394 = vld [vmem:[%s20 + $0x18] sm:$0xff]
  %v4395 = vld [vmem:[%s20 + $0x20] sm:$0xf]
  %v4396 = vpack.c.bf16 %v4380, %v4379
  %v4397 = vpack.c.bf16 %v4382, %v4381
  %v4398 = vpack.c.bf16 %v4384, %v4383
  %v4399 = vpack.c.bf16 %v4386, %v4385
  %v4400 = vpack.c.bf16 %v4388, %v4387
  %v4401 = vpack.c.bf16 %v4390, %v4389
  %v4402 = vpack.c.bf16 %v4392, %v4391
  %v4403 = vpack.c.bf16 %v4394, %v4393
  %v4404 = vpack.c.bf16 %v4395, %v4395
  %v4405 = vld [vmem:[#allocation2] sm:$0x1]
  %v4407 = vlaneseq
  %v4408 = vshrl.u32 %v4407, 7
  %v4409 = vsub.s32 0, %v4408
  %v4410 = vrot.slane %v4405, %v4409
  %v4413 = vsel %vm762, %v4396, 0
  %v4416 = vsel %vm762, %v4397, 0
  %v4419 = vsel %vm762, %v4398, 0
  %v4422 = vsel %vm762, %v4399, 0
  %v4425 = vsel %vm762, %v4400, 0
  %v4428 = vsel %vm762, %v4401, 0
  %v4431 = vsel %vm781, %v4404, 0
  %4433 = vmatprep.subr.bf16.mxu0 0
  %4434 = vmatpush1.bf16.msra.mxu0 0
  %4435 = vmatprep.subr.bf16.mxu0 0
  %4436 = vmatpush1.bf16.msra.mxu0 0
  %4437 = vmatprep.subr.bf16.mxu0 0
  %4438 = vmatpush1.bf16.msra.mxu0 0
  %4439 = vmatprep.subr.bf16.mxu0 0
  %4440 = vmatpush1.bf16.msra.mxu0 0
  %4441 = vmatprep.subr.bf16.mxu0 0
  %4442 = vmatpush1.bf16.msra.mxu0 0
  %4443 = vmatprep.subr.bf16.mxu0 0
  %4444 = vmatpush1.bf16.msra.mxu0 %v4431
  %4445 = vmatprep.subr.bf16.mxu0 0
  %4446 = vmatpush1.bf16.msra.mxu0 %v4403
  %4447 = vmatprep.subr.bf16.mxu0 0
  %4448 = vmatpush1.bf16.msra.mxu0 %v4402
  %4449 = vmatprep.subr.bf16.mxu0 0
  %4450 = vmatpush2.bf16.msra.mxu0 0
  %4451 = vmatprep.subr.bf16.mxu0 0
  %4452 = vmatpush2.bf16.msra.mxu0 0
  %4453 = vmatprep.subr.bf16.mxu0 0
  %4454 = vmatpush2.bf16.msra.mxu0 0
  %4455 = vmatprep.subr.bf16.mxu0 0
  %4456 = vmatpush2.bf16.msra.mxu0 0
  %4457 = vmatprep.subr.bf16.mxu0 0
  %4458 = vmatpush2.bf16.msra.mxu0 0
  %4459 = vmatprep.subr.bf16.mxu0 0
  %4460 = vmatpush2.bf16.msra.mxu0 0
  %4461 = vmatprep.subr.bf16.mxu0 0
  %4462 = vmatpush2.bf16.msra.mxu0 0
  %4463 = vmatprep.subr.bf16.mxu0 0
  %4464 = vmatpush2.bf16.msra.mxu0 0
  %4465 = vmatprep.mubr.bf16.mxu0 0
  %4466 = vmatmul.mubr.bf16.gmra.mxu0 %v4413
  %v4467 = vpop.f32.mrf.mxu0
  %v4468 = vadd.f32 %v4410, %v4467
  %v4469 = vpop.f32.mrf.mxu0
  %v4470 = vpop.f32.mrf.mxu0
  %v4471 = vadd.f32 %v4410, %v4470
  %v4472 = vpop.f32.mrf.mxu0
  %4473 = vmatprep.mubr.bf16.mxu0 0
  %4474 = vmatmul.mubr.bf16.gmra.mxu0 %v4416
  %v4475 = vpop.f32.mrf.mxu0
  %v4476 = vadd.f32 %v4410, %v4475
  %v4477 = vpop.f32.mrf.mxu0
  %v4478 = vpop.f32.mrf.mxu0
  %v4479 = vadd.f32 %v4410, %v4478
  %v4480 = vpop.f32.mrf.mxu0
  %4481 = vmatprep.mubr.bf16.mxu0 0
  %4482 = vmatmul.mubr.bf16.gmra.mxu0 %v4419
  %v4483 = vpop.f32.mrf.mxu0
  %v4484 = vadd.f32 %v4410, %v4483
  %v4485 = vpop.f32.mrf.mxu0
  %v4486 = vpop.f32.mrf.mxu0
  %v4487 = vadd.f32 %v4410, %v4486
  %v4488 = vpop.f32.mrf.mxu0
  %4489 = vmatprep.mubr.bf16.mxu0 0
  %4490 = vmatmul.mubr.bf16.gmra.mxu0 %v4422
  %v4491 = vpop.f32.mrf.mxu0
  %v4492 = vadd.f32 %v4410, %v4491
  %v4493 = vpop.f32.mrf.mxu0
  %v4494 = vpop.f32.mrf.mxu0
  %v4495 = vadd.f32 %v4410, %v4494
  %v4496 = vpop.f32.mrf.mxu0
  %4497 = vmatprep.mubr.bf16.mxu0 0
  %4498 = vmatmul.mubr.bf16.gmra.mxu0 %v4425
  %v4499 = vpop.f32.mrf.mxu0
  %v4500 = vadd.f32 %v4410, %v4499
  %v4501 = vpop.f32.mrf.mxu0
  %v4502 = vpop.f32.mrf.mxu0
  %v4503 = vadd.f32 %v4410, %v4502
  %v4504 = vpop.f32.mrf.mxu0
  %4505 = vmatprep.mubr.bf16.mxu0 0
  %4506 = vmatmul.mubr.bf16.gmra.mxu0 %v4428
  %v4507 = vpop.f32.mrf.mxu0
  %v4508 = vadd.f32 %v4410, %v4507
  %v4509 = vpop.f32.mrf.mxu0
  %v4510 = vpop.f32.mrf.mxu0
  %v4511 = vadd.f32 %v4410, %v4510
  %v4512 = vpop.f32.mrf.mxu0
  %4513 = vdwg.mxu0
  %4514 = vst.msk [vmem:[%s22] sm:$0xff] %vm558, %v4468
  %4515 = vst.msk [vmem:[%s22 + $0x8] sm:$0xff] %vm558, %v4471
  %4516 = vst.msk [vmem:[%s22 + $0x10] sm:$0xff] %vm558, %v4476
  %4517 = vst.msk [vmem:[%s22 + $0x18] sm:$0xff] %vm558, %v4479
  %4518 = vst.msk [vmem:[%s22 + $0x20] sm:$0xff] %vm558, %v4484
  %4519 = vst.msk [vmem:[%s22 + $0x28] sm:$0xff] %vm558, %v4487
  %4520 = vst.msk [vmem:[%s22 + $0x30] sm:$0xff] %vm558, %v4492
  %4521 = vst.msk [vmem:[%s22 + $0x38] sm:$0xff] %vm558, %v4495
  %4522 = vst.msk [vmem:[%s22 + $0x40] sm:$0xff] %vm558, %v4500
  %4523 = vst.msk [vmem:[%s22 + $0x48] sm:$0xff] %vm558, %v4503
  %4524 = vst.msk [vmem:[%s22 + $0x50] sm:$0xff] %vm558, %v4508
  %4525 = vst.msk [vmem:[%s22 + $0x58] sm:$0xff] %vm558, %v4511
  // Predicated region
  $region90: #{gc_transformer_forward.1} parent=0 // pred_check
    _
  $region91: #{gc_transformer_forward.1} parent=0 // pred_check_branch
    %4527 = sbr.rel (0) target = $region93
  $region92: #{gc_transformer_forward.1} parent=0 // pred_region
    _
  $region93: #{gc_transformer_forward.1} parent=0 // pred_fallthru
    _
  // Predicated region
  $region94: #{gc_transformer_forward.1} parent=0 // pred_check
    _
  $region95: #{gc_transformer_forward.1} parent=0 // pred_check_branch
    %4529 = sbr.rel (0) target = $region97
  $region96: #{gc_transformer_forward.1} parent=0 // pred_region
    _
  $region97: #{gc_transformer_forward.1} parent=0 // pred_fallthru
    _

</llo_original>
